<compile_context>
chip_gen: v5e
topology: v5e:2x2
jax: 0.10.0
libtpu: 0.0.40
codegen_flags: <defaults>
</compile_context>

<pallas_src>
import functools

import jax
import jax.numpy as jnp
from jax.experimental import pallas as pl
from jax.experimental.pallas import tpu as pltpu


# ----------------------------------------------------------------------------
# Fused forward kernel: one batch element per grid step, everything in VMEM.
# ----------------------------------------------------------------------------
def _ebm_fused_kernel(x_ref, w_ref, b_ref, fcw_ref, fcb_ref, o_ref, *, width):
    """x_ref  : (1, Cin, H*W)  input image, channel-major flat spatial
       w_ref  : (L, C, 9*C)    conv weights, column = (dh*3+dw)*C + cin
       b_ref  : (L, C, 1)      conv biases
       fcw_ref: (C, H*W)       fc weight in (c, h, w) flatten order
       fcb_ref: (1, 1)         fc bias
       o_ref  : (1, 1, 1)      energy for this batch element
    """
    f32 = jnp.float32
    L, C, _ = w_ref.shape
    cin = x_ref.shape[1]
    hw = x_ref.shape[2]
    w_sp = width                      # spatial width W (static)
    zpad = 128                        # flat zero pad, >= W + 1, lane-tile sized

    # Horizontal wrap masks: the flat-index shift trick wraps across image rows
    # for dw = -1 / +1, so the first / last column of each row must be zeroed.
    col = jax.lax.broadcasted_iota(jnp.int32, (1, hw), 1) % w_sp
    mask_l = (col != 0).astype(f32)          # taps with dw == 0  (offset -1)
    mask_r = (col != w_sp - 1).astype(f32)   # taps with dw == 2  (offset +1)

    # Layer-0 activation; pad channels up to C (matching weight cols are 0).
    a = x_ref[0].astype(f32)                                    # (cin, hw)
    if cin < C:
        a = jnp.concatenate([a, jnp.zeros((C - cin, hw), f32)], axis=0)

    zeros_pad = jnp.zeros((C, zpad), f32)
    for l in range(L):
        # Zero-padded flat activation: vertically out-of-range taps read zeros.
        apad = jnp.concatenate([zeros_pad, a, zeros_pad], axis=1)   # (C, hw+2*zpad)
        taps = []
        for dh in range(3):
            for dw in range(3):
                shift = (dh - 1) * w_sp + (dw - 1)
                win = apad[:, zpad + shift: zpad + shift + hw]      # (C, hw)
                if dw == 0:
                    win = win * mask_l
                elif dw == 2:
                    win = win * mask_r
                taps.append(win)
        patches = jnp.concatenate(taps, axis=0)                     # (9C, hw)
        a = jnp.dot(w_ref[l], patches, preferred_element_type=f32)  # (C, hw)
        a = jnp.maximum(a + b_ref[l], 0.0)

    # FC head: energy = sum(a * fc_w) + fc_b   (VPU multiply + XLU reduce).
    prod = a * fcw_ref[...]
    e = jnp.sum(prod, axis=1, keepdims=True)   # (C, 1)
    e = jnp.sum(e, axis=0, keepdims=True)      # (1, 1)
    o_ref[0] = e + fcb_ref[...]


def _forward_pallas(x_flat, w_all, b_all, fc_w, fc_b, *, width):
    B, cin, hw = x_flat.shape
    L, C, _ = w_all.shape
    kernel = functools.partial(_ebm_fused_kernel, width=width)
    out = pl.pallas_call(
        kernel,
        out_shape=jax.ShapeDtypeStruct((B, 1, 1), jnp.float32),
        grid=(B,),
        in_specs=[
            pl.BlockSpec((1, cin, hw), lambda i: (i, 0, 0)),
            pl.BlockSpec((L, C, 9 * C), lambda i: (0, 0, 0)),
            pl.BlockSpec((L, C, 1), lambda i: (0, 0, 0)),
            pl.BlockSpec((C, hw), lambda i: (0, 0)),
            pl.BlockSpec((1, 1), lambda i: (0, 0)),
        ],
        out_specs=pl.BlockSpec((1, 1, 1), lambda i: (i, 0, 0)),
        compiler_params=pltpu.CompilerParams(
            dimension_semantics=("parallel",)),
    )(x_flat, w_all, b_all, fc_w, fc_b)
    return out.reshape(B, 1)


@jax.jit
def energy_based_model(x_nchw, kernel_params):
    """Forward pass. x_nchw: (B, Cin, 32, 32) f32 -> (B, 1) energies."""
    w_all, b_all, fc_w, fc_b = kernel_params
    B, cin, H, W = x_nchw.shape
    x_flat = x_nchw.reshape(B, cin, H * W)   # contiguous -> free reshape
    return _forward_pallas(x_flat, w_all, b_all, fc_w, fc_b, width=W)


# ----------------------------------------------------------------------------
# Parameters: PyTorch-layout init + one-time re-layout into kernel layouts.
# ----------------------------------------------------------------------------
def init_params(key, in_channels=3, num_filters=8, num_layers=4, spatial=32):
    convs = []
    cin = in_channels
    for _ in range(num_layers):
        key, kw, kb = jax.random.split(key, 3)
        bound = 1.0 / jnp.sqrt(cin * 9)
        # PyTorch Conv2d weight layout: (Cout, Cin, 3, 3)
        w = jax.random.uniform(kw, (num_filters, cin, 3, 3), jnp.float32,
                               -bound, bound)
        b = jax.random.uniform(kb, (num_filters,), jnp.float32, -bound, bound)
        convs.append((w, b))
        cin = num_filters
    key, kw, kb = jax.random.split(key, 3)
    d = num_filters * spatial * spatial
    bound = 1.0 / jnp.sqrt(d)
    # PyTorch Linear weight (1, D); stored transposed (D, 1).
    fc_w = jax.random.uniform(kw, (d, 1), jnp.float32, -bound, bound)
    fc_b = jax.random.uniform(kb, (1,), jnp.float32, -bound, bound)
    return {"convs": convs, "fc_w": fc_w, "fc_b": fc_b}


def prepare_kernel_params(params, num_filters, spatial):
    """One-time packing into the fused kernel's layouts (hoisted out of fwd)."""
    C = num_filters
    ws, bs = [], []
    for w_oihw, b in params["convs"]:
        cin = w_oihw.shape[1]
        if cin < C:  # pad layer-0 input channels with zero weights
            w_oihw = jnp.pad(w_oihw, ((0, 0), (0, C - cin), (0, 0), (0, 0)))
        # (O, I, kh, kw) -> (O, kh, kw, I) -> (O, 9*C); col = (kh*3+kw)*C + i
        ws.append(jnp.transpose(w_oihw, (0, 2, 3, 1)).reshape(C, 9 * C))
        bs.append(b.reshape(C, 1))
    w_all = jnp.stack(ws)          # (L, C, 9C)
    b_all = jnp.stack(bs)          # (L, C, 1)
    # torch fc weight is (c, h, w)-flat: reshape to (C, H*W) so it multiplies
    # the kernel's channel-major flat activation directly.
    fc_w = params["fc_w"].reshape(C, spatial * spatial)
    fc_b = params["fc_b"].reshape(1, 1)
    return w_all, b_all, fc_w, fc_b


# ----------------------------------------------------------------------------
# Pure-JAX reference (matches the PyTorch module) for a numerical check.
# ----------------------------------------------------------------------------
def reference_forward(x_nchw, params):
    x = x_nchw
    for w, b in params["convs"]:
        x = jax.lax.conv_general_dilated(
            x, w, window_strides=(1, 1), padding=((1, 1), (1, 1)),
            dimension_numbers=("NCHW", "OIHW", "NCHW"),
            precision=jax.lax.Precision.HIGHEST)
        x = jnp.maximum(x + b.reshape(1, -1, 1, 1), 0.0)
    xf = x.reshape(x.shape[0], -1)
    return xf @ params["fc_w"] + params["fc_b"]


if __name__ == "__main__":
    key = jax.random.PRNGKey(0)
    k_param, k_input = jax.random.split(key)

    # Spatial must be 32 (the module's fc is hard-coded to C*32*32); keep the
    # batch and filter counts small.
    B, CIN, H, W = 2, 3, 32, 32
    NUM_FILTERS, NUM_LAYERS = 8, 4

    params = init_params(k_param, in_channels=CIN, num_filters=NUM_FILTERS,
                         num_layers=NUM_LAYERS, spatial=H)
    kparams = prepare_kernel_params(params, NUM_FILTERS, H)
    x = jax.random.normal(k_input, (B, CIN, H, W), dtype=jnp.float32)

    energy = energy_based_model(x, kparams)
    jax.block_until_ready(energy)
    assert energy.shape == (B, 1), energy.shape

    ref = reference_forward(x, params)
    assert jnp.allclose(energy, ref, atol=2e-3, rtol=2e-3), (energy, ref)

    print("KERNEL_OK")
</pallas_src>

<mosaic_0001>
module attributes {stable_mosaic.version = 11 : i64} {
  func.func @_ebm_fused_kernel(%arg0: i32, %arg1: memref<1x3x1024xf32, #tpu.memory_space<vmem>>, %arg2: memref<4x8x72xf32, #tpu.memory_space<vmem>>, %arg3: memref<4x8x1xf32, #tpu.memory_space<vmem>>, %arg4: memref<8x1024xf32, #tpu.memory_space<vmem>>, %arg5: memref<1x1xf32, #tpu.memory_space<vmem>>, %arg6: memref<1x1x1xf32, #tpu.memory_space<vmem>>) attributes {dimension_semantics = [#tpu.dimension_semantics<parallel>], iteration_bounds = array<i64: 2>, scalar_prefetch = 0 : i64, scratch_operands = 0 : i64, tpu.core_type = #tpu.core_type<tc>, window_params = [{transform_indices = @transform_0, window_bounds = array<i64: 1, 3, 1024>}, {pipeline_mode = #tpu.pipeline_mode<synchronous>, transform_indices = @transform_1, window_bounds = array<i64: 4, 8, 72>}, {pipeline_mode = #tpu.pipeline_mode<synchronous>, transform_indices = @transform_2, window_bounds = array<i64: 4, 8, 1>}, {pipeline_mode = #tpu.pipeline_mode<synchronous>, transform_indices = @transform_3, window_bounds = array<i64: 8, 1024>}, {pipeline_mode = #tpu.pipeline_mode<synchronous>, transform_indices = @transform_4, window_bounds = array<i64: 1, 1>}, {transform_indices = @transform_5, window_bounds = array<i64: 1, 1, 1>}]} {
    %0 = tpu.iota {dimensions = array<i32: 1>} : vector<1x1024xi32>
    %c32_i32 = arith.constant 32 : i32
    %c0_i32 = arith.constant 0 : i32
    %1 = arith.cmpi eq, %c32_i32, %c0_i32 : i32
    %c1_i32 = arith.constant 1 : i32
    %2 = arith.select %1, %c1_i32, %c32_i32 : i32
    %3 = vector.broadcast %2 : i32 to vector<1x1024xi32>
    %4 = arith.remsi %0, %3 : vector<1x1024xi32>
    %c0_i32_0 = arith.constant 0 : i32
    %5 = vector.broadcast %c0_i32_0 : i32 to vector<1x1024xi32>
    %6 = arith.cmpi ne, %4, %5 : vector<1x1024xi32>
    %c0_i32_1 = arith.constant 0 : i32
    %7 = vector.broadcast %c0_i32_1 : i32 to vector<1x1024xi32>
    %8 = arith.cmpi slt, %4, %7 : vector<1x1024xi32>
    %c0_i32_2 = arith.constant 0 : i32
    %9 = arith.cmpi slt, %2, %c0_i32_2 : i32
    %10 = vector.broadcast %9 : i1 to vector<1x1024xi1>
    %11 = vector.broadcast %10 : vector<1x1024xi1> to vector<1x1024xi1>
    %12 = arith.xori %8, %11 : vector<1x1024xi1>
    %13 = arith.andi %12, %6 : vector<1x1024xi1>
    %14 = vector.broadcast %2 : i32 to vector<1x1024xi32>
    %15 = arith.addi %4, %14 : vector<1x1024xi32>
    %16 = arith.select %13, %15, %4 : vector<1x1024xi1>, vector<1x1024xi32>
    %c0_i32_3 = arith.constant 0 : i32
    %17 = vector.broadcast %c0_i32_3 : i32 to vector<1x1024xi32>
    %18 = arith.cmpi ne, %16, %17 : vector<1x1024xi32>
    %19 = arith.extui %18 : vector<1x1024xi1> to vector<1x1024xi32>
    %20 = arith.sitofp %19 : vector<1x1024xi32> to vector<1x1024xf32>
    %c31_i32 = arith.constant 31 : i32
    %21 = vector.broadcast %c31_i32 : i32 to vector<1x1024xi32>
    %22 = arith.cmpi ne, %16, %21 : vector<1x1024xi32>
    %23 = arith.extui %22 : vector<1x1024xi1> to vector<1x1024xi32>
    %24 = arith.sitofp %23 : vector<1x1024xi32> to vector<1x1024xf32>
    %c0 = arith.constant 0 : index
    %c0_4 = arith.constant 0 : index
    %c0_5 = arith.constant 0 : index
    %25 = vector.load %arg1[%c0, %c0_4, %c0_5] : memref<1x3x1024xf32, #tpu.memory_space<vmem>>, vector<1x3x1024xf32>
    %26 = vector.shape_cast %25 : vector<1x3x1024xf32> to vector<3x1024xf32>
    %cst = arith.constant 0.000000e+00 : f32
    %27 = vector.broadcast %cst : f32 to vector<5x1024xf32>
    %28 = tpu.concatenate %26, %27 in 0 : vector<3x1024xf32>, vector<5x1024xf32> -> vector<8x1024xf32>
    %cst_6 = arith.constant 0.000000e+00 : f32
    %29 = vector.broadcast %cst_6 : f32 to vector<8x128xf32>
    %30 = tpu.concatenate %29, %28, %29 in 1 : vector<8x128xf32>, vector<8x1024xf32>, vector<8x128xf32> -> vector<8x1280xf32>
    %31 = vector.extract_strided_slice %30 {offsets = [0, 95], sizes = [8, 1024], strides = [1, 1]} : vector<8x1280xf32> to vector<8x1024xf32>
    %32 = vector.broadcast %20 : vector<1x1024xf32> to vector<8x1024xf32>
    %33 = arith.mulf %31, %32 : vector<8x1024xf32>
    %34 = vector.extract_strided_slice %30 {offsets = [0, 96], sizes = [8, 1024], strides = [1, 1]} : vector<8x1280xf32> to vector<8x1024xf32>
    %35 = vector.extract_strided_slice %30 {offsets = [0, 97], sizes = [8, 1024], strides = [1, 1]} : vector<8x1280xf32> to vector<8x1024xf32>
    %36 = vector.broadcast %24 : vector<1x1024xf32> to vector<8x1024xf32>
    %37 = arith.mulf %35, %36 : vector<8x1024xf32>
    %38 = vector.extract_strided_slice %30 {offsets = [0, 127], sizes = [8, 1024], strides = [1, 1]} : vector<8x1280xf32> to vector<8x1024xf32>
    %39 = vector.broadcast %20 : vector<1x1024xf32> to vector<8x1024xf32>
    %40 = arith.mulf %38, %39 : vector<8x1024xf32>
    %41 = vector.extract_strided_slice %30 {offsets = [0, 128], sizes = [8, 1024], strides = [1, 1]} : vector<8x1280xf32> to vector<8x1024xf32>
    %42 = vector.extract_strided_slice %30 {offsets = [0, 129], sizes = [8, 1024], strides = [1, 1]} : vector<8x1280xf32> to vector<8x1024xf32>
    %43 = vector.broadcast %24 : vector<1x1024xf32> to vector<8x1024xf32>
    %44 = arith.mulf %42, %43 : vector<8x1024xf32>
    %45 = vector.extract_strided_slice %30 {offsets = [0, 159], sizes = [8, 1024], strides = [1, 1]} : vector<8x1280xf32> to vector<8x1024xf32>
    %46 = vector.broadcast %20 : vector<1x1024xf32> to vector<8x1024xf32>
    %47 = arith.mulf %45, %46 : vector<8x1024xf32>
    %48 = vector.extract_strided_slice %30 {offsets = [0, 160], sizes = [8, 1024], strides = [1, 1]} : vector<8x1280xf32> to vector<8x1024xf32>
    %49 = vector.extract_strided_slice %30 {offsets = [0, 161], sizes = [8, 1024], strides = [1, 1]} : vector<8x1280xf32> to vector<8x1024xf32>
    %50 = vector.broadcast %24 : vector<1x1024xf32> to vector<8x1024xf32>
    %51 = arith.mulf %49, %50 : vector<8x1024xf32>
    %52 = tpu.concatenate %33, %34, %37, %40, %41, %44, %47, %48, %51 in 0 : vector<8x1024xf32>, vector<8x1024xf32>, vector<8x1024xf32>, vector<8x1024xf32>, vector<8x1024xf32>, vector<8x1024xf32>, vector<8x1024xf32>, vector<8x1024xf32>, vector<8x1024xf32> -> vector<72x1024xf32>
    %c0_7 = arith.constant 0 : index
    %c0_8 = arith.constant 0 : index
    %c0_9 = arith.constant 0 : index
    %53 = vector.load %arg2[%c0_7, %c0_8, %c0_9] : memref<4x8x72xf32, #tpu.memory_space<vmem>>, vector<1x8x72xf32>
    %54 = vector.shape_cast %53 : vector<1x8x72xf32> to vector<8x72xf32>
    %cst_10 = arith.constant dense<0.000000e+00> : vector<8x1024xf32>
    %55 = tpu.matmul %54, %52, %cst_10 {dimension_numbers = #tpu.dot_dimension_numbers<[1], [0], [0], [1], [0, 0, 1, 1], [], []>} : vector<8x72xf32>, vector<72x1024xf32>, vector<8x1024xf32> -> vector<8x1024xf32>
    %c0_11 = arith.constant 0 : index
    %c0_12 = arith.constant 0 : index
    %c0_13 = arith.constant 0 : index
    %56 = vector.load %arg3[%c0_11, %c0_12, %c0_13] : memref<4x8x1xf32, #tpu.memory_space<vmem>>, vector<1x8x1xf32>
    %57 = vector.shape_cast %56 : vector<1x8x1xf32> to vector<8x1xf32>
    %58 = vector.broadcast %57 : vector<8x1xf32> to vector<8x1024xf32>
    %59 = arith.addf %55, %58 : vector<8x1024xf32>
    %cst_14 = arith.constant 0.000000e+00 : f32
    %60 = vector.broadcast %cst_14 : f32 to vector<8x1024xf32>
    %61 = arith.maximumf %59, %60 : vector<8x1024xf32>
    %62 = tpu.concatenate %29, %61, %29 in 1 : vector<8x128xf32>, vector<8x1024xf32>, vector<8x128xf32> -> vector<8x1280xf32>
    %63 = vector.extract_strided_slice %62 {offsets = [0, 95], sizes = [8, 1024], strides = [1, 1]} : vector<8x1280xf32> to vector<8x1024xf32>
    %64 = vector.broadcast %20 : vector<1x1024xf32> to vector<8x1024xf32>
    %65 = arith.mulf %63, %64 : vector<8x1024xf32>
    %66 = vector.extract_strided_slice %62 {offsets = [0, 96], sizes = [8, 1024], strides = [1, 1]} : vector<8x1280xf32> to vector<8x1024xf32>
    %67 = vector.extract_strided_slice %62 {offsets = [0, 97], sizes = [8, 1024], strides = [1, 1]} : vector<8x1280xf32> to vector<8x1024xf32>
    %68 = vector.broadcast %24 : vector<1x1024xf32> to vector<8x1024xf32>
    %69 = arith.mulf %67, %68 : vector<8x1024xf32>
    %70 = vector.extract_strided_slice %62 {offsets = [0, 127], sizes = [8, 1024], strides = [1, 1]} : vector<8x1280xf32> to vector<8x1024xf32>
    %71 = vector.broadcast %20 : vector<1x1024xf32> to vector<8x1024xf32>
    %72 = arith.mulf %70, %71 : vector<8x1024xf32>
    %73 = vector.extract_strided_slice %62 {offsets = [0, 128], sizes = [8, 1024], strides = [1, 1]} : vector<8x1280xf32> to vector<8x1024xf32>
    %74 = vector.extract_strided_slice %62 {offsets = [0, 129], sizes = [8, 1024], strides = [1, 1]} : vector<8x1280xf32> to vector<8x1024xf32>
    %75 = vector.broadcast %24 : vector<1x1024xf32> to vector<8x1024xf32>
    %76 = arith.mulf %74, %75 : vector<8x1024xf32>
    %77 = vector.extract_strided_slice %62 {offsets = [0, 159], sizes = [8, 1024], strides = [1, 1]} : vector<8x1280xf32> to vector<8x1024xf32>
    %78 = vector.broadcast %20 : vector<1x1024xf32> to vector<8x1024xf32>
    %79 = arith.mulf %77, %78 : vector<8x1024xf32>
    %80 = vector.extract_strided_slice %62 {offsets = [0, 160], sizes = [8, 1024], strides = [1, 1]} : vector<8x1280xf32> to vector<8x1024xf32>
    %81 = vector.extract_strided_slice %62 {offsets = [0, 161], sizes = [8, 1024], strides = [1, 1]} : vector<8x1280xf32> to vector<8x1024xf32>
    %82 = vector.broadcast %24 : vector<1x1024xf32> to vector<8x1024xf32>
    %83 = arith.mulf %81, %82 : vector<8x1024xf32>
    %84 = tpu.concatenate %65, %66, %69, %72, %73, %76, %79, %80, %83 in 0 : vector<8x1024xf32>, vector<8x1024xf32>, vector<8x1024xf32>, vector<8x1024xf32>, vector<8x1024xf32>, vector<8x1024xf32>, vector<8x1024xf32>, vector<8x1024xf32>, vector<8x1024xf32> -> vector<72x1024xf32>
    %c1 = arith.constant 1 : index
    %c0_15 = arith.constant 0 : index
    %c0_16 = arith.constant 0 : index
    %85 = vector.load %arg2[%c1, %c0_15, %c0_16] : memref<4x8x72xf32, #tpu.memory_space<vmem>>, vector<1x8x72xf32>
    %86 = vector.shape_cast %85 : vector<1x8x72xf32> to vector<8x72xf32>
    %cst_17 = arith.constant dense<0.000000e+00> : vector<8x1024xf32>
    %87 = tpu.matmul %86, %84, %cst_17 {dimension_numbers = #tpu.dot_dimension_numbers<[1], [0], [0], [1], [0, 0, 1, 1], [], []>} : vector<8x72xf32>, vector<72x1024xf32>, vector<8x1024xf32> -> vector<8x1024xf32>
    %c1_18 = arith.constant 1 : index
    %c0_19 = arith.constant 0 : index
    %c0_20 = arith.constant 0 : index
    %88 = vector.load %arg3[%c1_18, %c0_19, %c0_20] : memref<4x8x1xf32, #tpu.memory_space<vmem>>, vector<1x8x1xf32>
    %89 = vector.shape_cast %88 : vector<1x8x1xf32> to vector<8x1xf32>
    %90 = vector.broadcast %89 : vector<8x1xf32> to vector<8x1024xf32>
    %91 = arith.addf %87, %90 : vector<8x1024xf32>
    %cst_21 = arith.constant 0.000000e+00 : f32
    %92 = vector.broadcast %cst_21 : f32 to vector<8x1024xf32>
    %93 = arith.maximumf %91, %92 : vector<8x1024xf32>
    %94 = tpu.concatenate %29, %93, %29 in 1 : vector<8x128xf32>, vector<8x1024xf32>, vector<8x128xf32> -> vector<8x1280xf32>
    %95 = vector.extract_strided_slice %94 {offsets = [0, 95], sizes = [8, 1024], strides = [1, 1]} : vector<8x1280xf32> to vector<8x1024xf32>
    %96 = vector.broadcast %20 : vector<1x1024xf32> to vector<8x1024xf32>
    %97 = arith.mulf %95, %96 : vector<8x1024xf32>
    %98 = vector.extract_strided_slice %94 {offsets = [0, 96], sizes = [8, 1024], strides = [1, 1]} : vector<8x1280xf32> to vector<8x1024xf32>
    %99 = vector.extract_strided_slice %94 {offsets = [0, 97], sizes = [8, 1024], strides = [1, 1]} : vector<8x1280xf32> to vector<8x1024xf32>
    %100 = vector.broadcast %24 : vector<1x1024xf32> to vector<8x1024xf32>
    %101 = arith.mulf %99, %100 : vector<8x1024xf32>
    %102 = vector.extract_strided_slice %94 {offsets = [0, 127], sizes = [8, 1024], strides = [1, 1]} : vector<8x1280xf32> to vector<8x1024xf32>
    %103 = vector.broadcast %20 : vector<1x1024xf32> to vector<8x1024xf32>
    %104 = arith.mulf %102, %103 : vector<8x1024xf32>
    %105 = vector.extract_strided_slice %94 {offsets = [0, 128], sizes = [8, 1024], strides = [1, 1]} : vector<8x1280xf32> to vector<8x1024xf32>
    %106 = vector.extract_strided_slice %94 {offsets = [0, 129], sizes = [8, 1024], strides = [1, 1]} : vector<8x1280xf32> to vector<8x1024xf32>
    %107 = vector.broadcast %24 : vector<1x1024xf32> to vector<8x1024xf32>
    %108 = arith.mulf %106, %107 : vector<8x1024xf32>
    %109 = vector.extract_strided_slice %94 {offsets = [0, 159], sizes = [8, 1024], strides = [1, 1]} : vector<8x1280xf32> to vector<8x1024xf32>
    %110 = vector.broadcast %20 : vector<1x1024xf32> to vector<8x1024xf32>
    %111 = arith.mulf %109, %110 : vector<8x1024xf32>
    %112 = vector.extract_strided_slice %94 {offsets = [0, 160], sizes = [8, 1024], strides = [1, 1]} : vector<8x1280xf32> to vector<8x1024xf32>
    %113 = vector.extract_strided_slice %94 {offsets = [0, 161], sizes = [8, 1024], strides = [1, 1]} : vector<8x1280xf32> to vector<8x1024xf32>
    %114 = vector.broadcast %24 : vector<1x1024xf32> to vector<8x1024xf32>
    %115 = arith.mulf %113, %114 : vector<8x1024xf32>
    %116 = tpu.concatenate %97, %98, %101, %104, %105, %108, %111, %112, %115 in 0 : vector<8x1024xf32>, vector<8x1024xf32>, vector<8x1024xf32>, vector<8x1024xf32>, vector<8x1024xf32>, vector<8x1024xf32>, vector<8x1024xf32>, vector<8x1024xf32>, vector<8x1024xf32> -> vector<72x1024xf32>
    %c2 = arith.constant 2 : index
    %c0_22 = arith.constant 0 : index
    %c0_23 = arith.constant 0 : index
    %117 = vector.load %arg2[%c2, %c0_22, %c0_23] : memref<4x8x72xf32, #tpu.memory_space<vmem>>, vector<1x8x72xf32>
    %118 = vector.shape_cast %117 : vector<1x8x72xf32> to vector<8x72xf32>
    %cst_24 = arith.constant dense<0.000000e+00> : vector<8x1024xf32>
    %119 = tpu.matmul %118, %116, %cst_24 {dimension_numbers = #tpu.dot_dimension_numbers<[1], [0], [0], [1], [0, 0, 1, 1], [], []>} : vector<8x72xf32>, vector<72x1024xf32>, vector<8x1024xf32> -> vector<8x1024xf32>
    %c2_25 = arith.constant 2 : index
    %c0_26 = arith.constant 0 : index
    %c0_27 = arith.constant 0 : index
    %120 = vector.load %arg3[%c2_25, %c0_26, %c0_27] : memref<4x8x1xf32, #tpu.memory_space<vmem>>, vector<1x8x1xf32>
    %121 = vector.shape_cast %120 : vector<1x8x1xf32> to vector<8x1xf32>
    %122 = vector.broadcast %121 : vector<8x1xf32> to vector<8x1024xf32>
    %123 = arith.addf %119, %122 : vector<8x1024xf32>
    %cst_28 = arith.constant 0.000000e+00 : f32
    %124 = vector.broadcast %cst_28 : f32 to vector<8x1024xf32>
    %125 = arith.maximumf %123, %124 : vector<8x1024xf32>
    %126 = tpu.concatenate %29, %125, %29 in 1 : vector<8x128xf32>, vector<8x1024xf32>, vector<8x128xf32> -> vector<8x1280xf32>
    %127 = vector.extract_strided_slice %126 {offsets = [0, 95], sizes = [8, 1024], strides = [1, 1]} : vector<8x1280xf32> to vector<8x1024xf32>
    %128 = vector.broadcast %20 : vector<1x1024xf32> to vector<8x1024xf32>
    %129 = arith.mulf %127, %128 : vector<8x1024xf32>
    %130 = vector.extract_strided_slice %126 {offsets = [0, 96], sizes = [8, 1024], strides = [1, 1]} : vector<8x1280xf32> to vector<8x1024xf32>
    %131 = vector.extract_strided_slice %126 {offsets = [0, 97], sizes = [8, 1024], strides = [1, 1]} : vector<8x1280xf32> to vector<8x1024xf32>
    %132 = vector.broadcast %24 : vector<1x1024xf32> to vector<8x1024xf32>
    %133 = arith.mulf %131, %132 : vector<8x1024xf32>
    %134 = vector.extract_strided_slice %126 {offsets = [0, 127], sizes = [8, 1024], strides = [1, 1]} : vector<8x1280xf32> to vector<8x1024xf32>
    %135 = vector.broadcast %20 : vector<1x1024xf32> to vector<8x1024xf32>
    %136 = arith.mulf %134, %135 : vector<8x1024xf32>
    %137 = vector.extract_strided_slice %126 {offsets = [0, 128], sizes = [8, 1024], strides = [1, 1]} : vector<8x1280xf32> to vector<8x1024xf32>
    %138 = vector.extract_strided_slice %126 {offsets = [0, 129], sizes = [8, 1024], strides = [1, 1]} : vector<8x1280xf32> to vector<8x1024xf32>
    %139 = vector.broadcast %24 : vector<1x1024xf32> to vector<8x1024xf32>
    %140 = arith.mulf %138, %139 : vector<8x1024xf32>
    %141 = vector.extract_strided_slice %126 {offsets = [0, 159], sizes = [8, 1024], strides = [1, 1]} : vector<8x1280xf32> to vector<8x1024xf32>
    %142 = vector.broadcast %20 : vector<1x1024xf32> to vector<8x1024xf32>
    %143 = arith.mulf %141, %142 : vector<8x1024xf32>
    %144 = vector.extract_strided_slice %126 {offsets = [0, 160], sizes = [8, 1024], strides = [1, 1]} : vector<8x1280xf32> to vector<8x1024xf32>
    %145 = vector.extract_strided_slice %126 {offsets = [0, 161], sizes = [8, 1024], strides = [1, 1]} : vector<8x1280xf32> to vector<8x1024xf32>
    %146 = vector.broadcast %24 : vector<1x1024xf32> to vector<8x1024xf32>
    %147 = arith.mulf %145, %146 : vector<8x1024xf32>
    %148 = tpu.concatenate %129, %130, %133, %136, %137, %140, %143, %144, %147 in 0 : vector<8x1024xf32>, vector<8x1024xf32>, vector<8x1024xf32>, vector<8x1024xf32>, vector<8x1024xf32>, vector<8x1024xf32>, vector<8x1024xf32>, vector<8x1024xf32>, vector<8x1024xf32> -> vector<72x1024xf32>
    %c3 = arith.constant 3 : index
    %c0_29 = arith.constant 0 : index
    %c0_30 = arith.constant 0 : index
    %149 = vector.load %arg2[%c3, %c0_29, %c0_30] : memref<4x8x72xf32, #tpu.memory_space<vmem>>, vector<1x8x72xf32>
    %150 = vector.shape_cast %149 : vector<1x8x72xf32> to vector<8x72xf32>
    %cst_31 = arith.constant dense<0.000000e+00> : vector<8x1024xf32>
    %151 = tpu.matmul %150, %148, %cst_31 {dimension_numbers = #tpu.dot_dimension_numbers<[1], [0], [0], [1], [0, 0, 1, 1], [], []>} : vector<8x72xf32>, vector<72x1024xf32>, vector<8x1024xf32> -> vector<8x1024xf32>
    %c3_32 = arith.constant 3 : index
    %c0_33 = arith.constant 0 : index
    %c0_34 = arith.constant 0 : index
    %152 = vector.load %arg3[%c3_32, %c0_33, %c0_34] : memref<4x8x1xf32, #tpu.memory_space<vmem>>, vector<1x8x1xf32>
    %153 = vector.shape_cast %152 : vector<1x8x1xf32> to vector<8x1xf32>
    %154 = vector.broadcast %153 : vector<8x1xf32> to vector<8x1024xf32>
    %155 = arith.addf %151, %154 : vector<8x1024xf32>
    %cst_35 = arith.constant 0.000000e+00 : f32
    %156 = vector.broadcast %cst_35 : f32 to vector<8x1024xf32>
    %157 = arith.maximumf %155, %156 : vector<8x1024xf32>
    %c0_36 = arith.constant 0 : index
    %c0_37 = arith.constant 0 : index
    %158 = vector.load %arg4[%c0_36, %c0_37] : memref<8x1024xf32, #tpu.memory_space<vmem>>, vector<8x1024xf32>
    %159 = arith.mulf %157, %158 : vector<8x1024xf32>
    %cst_38 = arith.constant dense<0.000000e+00> : vector<8xf32>
    %160 = vector.multi_reduction <add>, %159, %cst_38 [1] : vector<8x1024xf32> to vector<8xf32>
    %161 = vector.shape_cast %160 : vector<8xf32> to vector<8x1xf32>
    %cst_39 = arith.constant dense<0.000000e+00> : vector<1xf32>
    %162 = vector.multi_reduction <add>, %161, %cst_39 [0] : vector<8x1xf32> to vector<1xf32>
    %163 = vector.shape_cast %162 : vector<1xf32> to vector<1x1xf32>
    %c0_40 = arith.constant 0 : index
    %c0_41 = arith.constant 0 : index
    %164 = vector.load %arg5[%c0_40, %c0_41] : memref<1x1xf32, #tpu.memory_space<vmem>>, vector<1x1xf32>
    %165 = arith.addf %163, %164 : vector<1x1xf32>
    %c0_42 = arith.constant 0 : index
    %c0_43 = arith.constant 0 : index
    %c0_44 = arith.constant 0 : index
    %166 = vector.load %arg6[%c0_42, %c0_43, %c0_44] : memref<1x1x1xf32, #tpu.memory_space<vmem>>, vector<1x1x1xf32>
    %167 = vector.shape_cast %166 : vector<1x1x1xf32> to vector<1x1xf32>
    %168 = vector.shape_cast %165 : vector<1x1xf32> to vector<1x1x1xf32>
    tpu.vector_store %arg6[%c0_42, %c0_43, %c0_44], %168 {strides = array<i32>} : memref<1x1x1xf32, #tpu.memory_space<vmem>>, vector<1x1x1xf32>,
    return
  }
  func.func @transform_0(%arg0: i32) -> (i32, i32, i32) {
    %c0_i32 = arith.constant 0 : i32
    %c0_i32_0 = arith.constant 0 : i32
    %c0_i32_1 = arith.constant 0 : i32
    return %arg0, %c0_i32, %c0_i32_0 : i32, i32, i32
  }
  func.func @transform_1(%arg0: i32) -> (i32, i32, i32) {
    %c0_i32 = arith.constant 0 : i32
    %c0_i32_0 = arith.constant 0 : i32
    %c0_i32_1 = arith.constant 0 : i32
    %c0_i32_2 = arith.constant 0 : i32
    return %c0_i32, %c0_i32_0, %c0_i32_1 : i32, i32, i32
  }
  func.func @transform_2(%arg0: i32) -> (i32, i32, i32) {
    %c0_i32 = arith.constant 0 : i32
    %c0_i32_0 = arith.constant 0 : i32
    %c0_i32_1 = arith.constant 0 : i32
    %c0_i32_2 = arith.constant 0 : i32
    return %c0_i32, %c0_i32_0, %c0_i32_1 : i32, i32, i32
  }
  func.func @transform_3(%arg0: i32) -> (i32, i32) {
    %c0_i32 = arith.constant 0 : i32
    %c0_i32_0 = arith.constant 0 : i32
    %c0_i32_1 = arith.constant 0 : i32
    return %c0_i32, %c0_i32_0 : i32, i32
  }
  func.func @transform_4(%arg0: i32) -> (i32, i32) {
    %c0_i32 = arith.constant 0 : i32
    %c0_i32_0 = arith.constant 0 : i32
    %c0_i32_1 = arith.constant 0 : i32
    return %c0_i32, %c0_i32_0 : i32, i32
  }
  func.func @transform_5(%arg0: i32) -> (i32, i32, i32) {
    %c0_i32 = arith.constant 0 : i32
    %c0_i32_0 = arith.constant 0 : i32
    %c0_i32_1 = arith.constant 0 : i32
    return %arg0, %c0_i32, %c0_i32_0 : i32, i32, i32
  }
}

</mosaic_0001>

<llo_original>
// kernel: energy_based_model.1
$region0: #{energy_based_model.1}
  #allocation0 [shape = 'u32[]', space=smem, size = 0x4, offset = 0x4, fixed_abs, tag = 'smem constant byte address 0x4 - core index']
  #allocation1 [shape = 'u32[72,128]{1,0:T(1,128)}', space=vmem, size = 0x9000, scoped, tag = 'internal scratch']
  #allocation2 [shape = 'f32[1,1]{1,0:T(1,128)S(1)}', space=vmem, size = 0x200, scoped, tag = 'scoped memory for energy_based_model.1']
  %s0 = inlined_call_operand.vmem [shape: f32[2,3,1024], index: 0, kind: input, shape index: {}]
  %s1 = inlined_call_operand.vmem [shape: f32[4,8,72], index: 1, kind: input, shape index: {}]
  %s2 = inlined_call_operand.vmem [shape: f32[4,8,1], index: 2, kind: input, shape index: {}]
  %s3 = inlined_call_operand.vmem [shape: f32[8,1024], index: 3, kind: input, shape index: {}]
  %s4 = inlined_call_operand.<no memory space> [shape: f32[1,1], index: 4, kind: input, shape index: {}]
  %s5 = inlined_call_operand.vmem [shape: f32[2,1,1], index: 5, kind: output, shape index: {}]
  %s6 = sld [smem:[#allocation0]]
  $region53: #{energy_based_model.1} parent=0
    _
  %s8 = ssub.s32 1, %s6
  %s9 = scalar_select 0, %s8, %s6
  %v10 = vstv %s4
  %11 = vst [vmem:[#allocation2] sm:$0x1] %v10
  loop: start=0, step=1, limit=4
  $region2: #{energy_based_model.1} parent=0 // loop_pre_header
    _
  $region3: #{energy_based_model.1} parent=0 // loop_header
    %s13 = sphi 0, %s17
    %p14 = scmp.ge.s32.totalorder %s13, 4
    %s23 = sphi 0, %s25
    %s26 = sphi 0, %s23
    %s27 = sphi 0, %s26
    %s43 = sphi 0, %s27
    %s47 = sphi 0, %s47
    %s49 = sphi 0, %s47
    %s50 = sphi 0, %s49
    %s64 = sphi 0, %s50
    %s68 = sphi 0, %s68
    %s70 = sphi 0, %s68
    %s71 = sphi 0, %s70
    %s85 = sphi 0, %s71
    %s89 = sphi 0, %s89
    %s91 = sphi 0, %s89
    %s92 = sphi 0, %s91
    %s106 = sphi 0, %s92
    %s110 = sphi 0, %s110
    %s112 = sphi 0, %s110
    %s113 = sphi 0, %s112
    %s127 = sphi 0, %s113
    %s133 = sphi 0, %s135
    %s136 = sphi 0, %s133
    %s137 = sphi 0, %s136
    %s153 = sphi 0, %s137
  $region4: #{energy_based_model.1} parent=0 // loop_header_branch
    %16 = sbr.rel (%p14) target = $region8
  $region5: #{energy_based_model.1} parent=0 // loop_body
    %s18 = ssub.s32 %s13, 1
    %s19 = ssub.s32 %s13, 2
    %s20 = sadd.s32 %s13, 1
    %s21 = ssub.s32 %s13, %s20
    %p22 = scmp.eq.s32.totalorder %s21, 0
    %s24 = sadd.s32 %s23, 1
    %s25 = scalar_select %p22, %s23, %s24
    %p28 = pneg %p22
    %p29 = scmp.eq.s32.totalorder %s13, 1
    %p30 = por %p28, %p29
    %p31 = scmp.ne.s32.totalorder %s23, %s26
    %p32 = scmp.eq.s32.totalorder %s13, 0
    %p33 = por %p31, %p32
    %p34 = scmp.ne.s32.totalorder %s23, %s26
    %p35 = scmp.eq.s32.totalorder %s18, 1
    %p36 = por %p34, %p35
    %p37 = scmp.ne.s32.totalorder %s26, %s27
    %p38 = scmp.eq.s32.totalorder %s18, 0
    %p39 = por %p37, %p38
    %p40 = scmp.ne.s32.totalorder %s26, %s27
    %p41 = scmp.eq.s32.totalorder %s19, 1
    %p42 = por %p40, %p41
    %p44 = scmp.ne.s32.totalorder %s27, %s43
    %p45 = scmp.eq.s32.totalorder %s19, 0
    %p46 = por %p44, %p45
    %s48 = sadd.s32 %s47, 1
    %p51 = scmp.eq.s32.totalorder %s13, 1
    %p52 = scmp.ne.s32.totalorder %s47, %s49
    %p53 = scmp.eq.s32.totalorder %s13, 0
    %p54 = por %p52, %p53
    %p55 = scmp.ne.s32.totalorder %s47, %s49
    %p56 = scmp.eq.s32.totalorder %s18, 1
    %p57 = por %p55, %p56
    %p58 = scmp.ne.s32.totalorder %s49, %s50
    %p59 = scmp.eq.s32.totalorder %s18, 0
    %p60 = por %p58, %p59
    %p61 = scmp.ne.s32.totalorder %s49, %s50
    %p62 = scmp.eq.s32.totalorder %s19, 1
    %p63 = por %p61, %p62
    %p65 = scmp.ne.s32.totalorder %s50, %s64
    %p66 = scmp.eq.s32.totalorder %s19, 0
    %p67 = por %p65, %p66
    %s69 = sadd.s32 %s68, 1
    %p72 = scmp.eq.s32.totalorder %s13, 1
    %p73 = scmp.ne.s32.totalorder %s68, %s70
    %p74 = scmp.eq.s32.totalorder %s13, 0
    %p75 = por %p73, %p74
    %p76 = scmp.ne.s32.totalorder %s68, %s70
    %p77 = scmp.eq.s32.totalorder %s18, 1
    %p78 = por %p76, %p77
    %p79 = scmp.ne.s32.totalorder %s70, %s71
    %p80 = scmp.eq.s32.totalorder %s18, 0
    %p81 = por %p79, %p80
    %p82 = scmp.ne.s32.totalorder %s70, %s71
    %p83 = scmp.eq.s32.totalorder %s19, 1
    %p84 = por %p82, %p83
    %p86 = scmp.ne.s32.totalorder %s71, %s85
    %p87 = scmp.eq.s32.totalorder %s19, 0
    %p88 = por %p86, %p87
    %s90 = sadd.s32 %s89, 1
    %p93 = scmp.eq.s32.totalorder %s13, 1
    %p94 = scmp.ne.s32.totalorder %s89, %s91
    %p95 = scmp.eq.s32.totalorder %s13, 0
    %p96 = por %p94, %p95
    %p97 = scmp.ne.s32.totalorder %s89, %s91
    %p98 = scmp.eq.s32.totalorder %s18, 1
    %p99 = por %p97, %p98
    %p100 = scmp.ne.s32.totalorder %s91, %s92
    %p101 = scmp.eq.s32.totalorder %s18, 0
    %p102 = por %p100, %p101
    %p103 = scmp.ne.s32.totalorder %s91, %s92
    %p104 = scmp.eq.s32.totalorder %s19, 1
    %p105 = por %p103, %p104
    %p107 = scmp.ne.s32.totalorder %s92, %s106
    %p108 = scmp.eq.s32.totalorder %s19, 0
    %p109 = por %p107, %p108
    %s111 = sadd.s32 %s110, 1
    %p114 = scmp.eq.s32.totalorder %s13, 1
    %p115 = scmp.ne.s32.totalorder %s110, %s112
    %p116 = scmp.eq.s32.totalorder %s13, 0
    %p117 = por %p115, %p116
    %p118 = scmp.ne.s32.totalorder %s110, %s112
    %p119 = scmp.eq.s32.totalorder %s18, 1
    %p120 = por %p118, %p119
    %p121 = scmp.ne.s32.totalorder %s112, %s113
    %p122 = scmp.eq.s32.totalorder %s18, 0
    %p123 = por %p121, %p122
    %p124 = scmp.ne.s32.totalorder %s112, %s113
    %p125 = scmp.eq.s32.totalorder %s19, 1
    %p126 = por %p124, %p125
    %p128 = scmp.ne.s32.totalorder %s113, %s127
    %p129 = scmp.eq.s32.totalorder %s19, 0
    %p130 = por %p128, %p129
    %s131 = ssub.s32 %s13, %s20
    %p132 = scmp.eq.s32.totalorder %s131, 0
    %s134 = sadd.s32 %s133, 1
    %s135 = scalar_select %p132, %s133, %s134
    %p138 = pneg %p132
    %p139 = scmp.eq.s32.totalorder %s13, 1
    %p140 = por %p138, %p139
    %p141 = scmp.ne.s32.totalorder %s133, %s136
    %p142 = scmp.eq.s32.totalorder %s13, 0
    %p143 = por %p141, %p142
    %p144 = scmp.ne.s32.totalorder %s133, %s136
    %p145 = scmp.eq.s32.totalorder %s18, 1
    %p146 = por %p144, %p145
    %p147 = scmp.ne.s32.totalorder %s136, %s137
    %p148 = scmp.eq.s32.totalorder %s18, 0
    %p149 = por %p147, %p148
    %p150 = scmp.ne.s32.totalorder %s136, %s137
    %p151 = scmp.eq.s32.totalorder %s19, 1
    %p152 = por %p150, %p151
    %p154 = scmp.ne.s32.totalorder %s137, %s153
    %p155 = scmp.eq.s32.totalorder %s19, 0
    %p156 = por %p154, %p155
    %p157 = scmp.le.s32.totalorder 1, %s13
    %p158 = scmp.lt.s32.totalorder %s13, 3
    %p159 = pnand %p157, %p158
    %p160 = pneg %p159
    // Predicated region
    $region9: #{energy_based_model.1} parent=5 // pred_check
      _
    $region10: #{energy_based_model.1} parent=5 // pred_check_branch
      %162 = sbr.rel (%p159) target = $region12
    $region11: #{energy_based_model.1} parent=5 // pred_region
      %s163 = ssub.s32 %s13, 1
      // Predicated region
      $region13: #{energy_based_model.1} parent=11 // pred_check
        %p164 = pneg %p60
      $region14: #{energy_based_model.1} parent=11 // pred_check_branch
        %166 = sbr.rel (%p164) target = $region16
      $region15: #{energy_based_model.1} parent=11 // pred_region
        _
      $region16: #{energy_based_model.1} parent=11 // pred_fallthru
        _
      // Predicated region
      $region17: #{energy_based_model.1} parent=11 // pred_check
        %p167 = pneg %p81
      $region18: #{energy_based_model.1} parent=11 // pred_check_branch
        %169 = sbr.rel (%p167) target = $region20
      $region19: #{energy_based_model.1} parent=11 // pred_region
        _
      $region20: #{energy_based_model.1} parent=11 // pred_fallthru
        _
      // Predicated region
      $region21: #{energy_based_model.1} parent=11 // pred_check
        %p170 = pneg %p102
      $region22: #{energy_based_model.1} parent=11 // pred_check_branch
        %172 = sbr.rel (%p170) target = $region24
      $region23: #{energy_based_model.1} parent=11 // pred_region
        _
      $region24: #{energy_based_model.1} parent=11 // pred_fallthru
        _
      // Predicated region
      $region25: #{energy_based_model.1} parent=11 // pred_check
        %p173 = pneg %p123
      $region26: #{energy_based_model.1} parent=11 // pred_check_branch
        %175 = sbr.rel (%p173) target = $region28
      $region27: #{energy_based_model.1} parent=11 // pred_region
        _
      $region28: #{energy_based_model.1} parent=11 // pred_fallthru
        _
    $region12: #{energy_based_model.1} parent=5 // pred_fallthru
      _
    %p176 = scmp.lt.s32.totalorder %s13, 2
    // Predicated region
    $region29: #{energy_based_model.1} parent=5 // pred_check
      %p177 = pneg %p176
    $region30: #{energy_based_model.1} parent=5 // pred_check_branch
      %179 = sbr.rel (%p177) target = $region32
    $region31: #{energy_based_model.1} parent=5 // pred_region
      // Predicated region
      $region33: #{energy_based_model.1} parent=31 // pred_check
        %p180 = pneg %p33
      $region34: #{energy_based_model.1} parent=31 // pred_check_branch
        %182 = sbr.rel (%p180) target = $region36
      $region35: #{energy_based_model.1} parent=31 // pred_region
        %p183 = scmp.lt.s32.totalorder %s13, 1
        %s184 = scalar_select %p183, %s13, 1
        %s185 = smul.addr %s184, 8
        %s186 = smul.addr %s185, 4
        %s187 = scalar_lea.vmem %s0, %s186
      $region36: #{energy_based_model.1} parent=31 // pred_fallthru
        _
    $region32: #{energy_based_model.1} parent=5 // pred_fallthru
      _
    %p188 = scmp.le.s32.totalorder 1, %s13
    %p189 = scmp.lt.s32.totalorder %s13, 3
    %p190 = pnand %p188, %p189
    %p191 = pneg %p190
    // Predicated region
    $region37: #{energy_based_model.1} parent=5 // pred_check
      _
    $region38: #{energy_based_model.1} parent=5 // pred_check_branch
      %193 = sbr.rel (%p190) target = $region40
    $region39: #{energy_based_model.1} parent=5 // pred_region
      %s194 = ssub.s32 %s13, 1
      %p195 = scmp.lt.s32.totalorder %s18, 1
      %s196 = scalar_select %p195, %s18, 1
      %s197 = smul.addr %s196, 8
      %s198 = smul.addr %s197, 4
      %s199 = scalar_lea.vmem %s0, %s198
      %p200 = pneg %p39
      %p201 = pneg %p36
      %p202 = pneg %p60
      %p203 = pneg %p57
      %p204 = pneg %p81
      %p205 = pneg %p78
      %p206 = pneg %p102
      %p207 = pneg %p99
      %p208 = pneg %p123
      %p209 = pneg %p120
      %p210 = pneg %p149
      %p211 = pneg %p146
      %p212 = scmp.lt.s32.totalorder %s18, 1
      %s213 = scalar_select %p212, %s18, 1
      %s214 = scalar_lea.vmem %s5, %s213
      %p215 = scmp.lt.s32.totalorder %s18, 1
      %s216 = scalar_select %p215, %s18, 1
      %s217 = smul.addr %s216, 8
      %s218 = smul.addr %s217, 4
      %s219 = scalar_lea.vmem %s0, %s218
      %p220 = scmp.lt.s32.totalorder %s18, 1
      %s221 = scalar_select %p220, %s18, 1
      %s222 = scalar_lea.vmem %s5, %s221
      %v223 = vlaneseq
      %v224 = vand.u32 %v223, 127
      %v225 = vadd.s32 %v224, 128
      %v226 = vadd.s32 %v224, 256
      %v227 = vadd.s32 %v224, 384
      %v228 = vadd.s32 %v224, 512
      %v229 = vadd.s32 %v224, 640
      %v230 = vadd.s32 %v224, 768
      %v231 = vadd.s32 %v224, 896
      %vm232 = vcmp.lt.s32.totalorder %v224, 0
      %v233 = vsub.s32 0, %v224
      %v234 = vsel %vm232, %v233, %v224
      %v235 = vshrl.u32 %v234, 5
      %v236 = vand.u32 %v234, 31
      %v237 = vsub.s32 0, %v236
      %v238 = vsel %vm232, %v237, %v236
      %vm239 = vcmp.lt.s32.totalorder %v225, 0
      %v240 = vsub.s32 0, %v225
      %v241 = vsel %vm239, %v240, %v225
      %v242 = vshrl.u32 %v241, 5
      %v243 = vand.u32 %v241, 31
      %v244 = vsub.s32 0, %v243
      %v245 = vsel %vm239, %v244, %v243
      %vm246 = vcmp.lt.s32.totalorder %v226, 0
      %v247 = vsub.s32 0, %v226
      %v248 = vsel %vm246, %v247, %v226
      %v249 = vshrl.u32 %v248, 5
      %v250 = vand.u32 %v248, 31
      %v251 = vsub.s32 0, %v250
      %v252 = vsel %vm246, %v251, %v250
      %vm253 = vcmp.lt.s32.totalorder %v227, 0
      %v254 = vsub.s32 0, %v227
      %v255 = vsel %vm253, %v254, %v227
      %v256 = vshrl.u32 %v255, 5
      %v257 = vand.u32 %v255, 31
      %v258 = vsub.s32 0, %v257
      %v259 = vsel %vm253, %v258, %v257
      %vm260 = vcmp.lt.s32.totalorder %v228, 0
      %v261 = vsub.s32 0, %v228
      %v262 = vsel %vm260, %v261, %v228
      %v263 = vshrl.u32 %v262, 5
      %v264 = vand.u32 %v262, 31
      %v265 = vsub.s32 0, %v264
      %v266 = vsel %vm260, %v265, %v264
      %vm267 = vcmp.lt.s32.totalorder %v229, 0
      %v268 = vsub.s32 0, %v229
      %v269 = vsel %vm267, %v268, %v229
      %v270 = vshrl.u32 %v269, 5
      %v271 = vand.u32 %v269, 31
      %v272 = vsub.s32 0, %v271
      %v273 = vsel %vm267, %v272, %v271
      %vm274 = vcmp.lt.s32.totalorder %v230, 0
      %v275 = vsub.s32 0, %v230
      %v276 = vsel %vm274, %v275, %v230
      %v277 = vshrl.u32 %v276, 5
      %v278 = vand.u32 %v276, 31
      %v279 = vsub.s32 0, %v278
      %v280 = vsel %vm274, %v279, %v278
      %vm281 = vcmp.lt.s32.totalorder %v231, 0
      %v282 = vsub.s32 0, %v231
      %v283 = vsel %vm281, %v282, %v231
      %v284 = vshrl.u32 %v283, 5
      %v285 = vand.u32 %v283, 31
      %v286 = vsub.s32 0, %v285
      %v287 = vsel %vm281, %v286, %v285
      %vm288 = vcmp.ne.s32.totalorder %v238, 0
      %vm289 = vcmp.ne.s32.totalorder %v245, 0
      %vm290 = vcmp.ne.s32.totalorder %v252, 0
      %vm291 = vcmp.ne.s32.totalorder %v259, 0
      %vm292 = vcmp.ne.s32.totalorder %v266, 0
      %vm293 = vcmp.ne.s32.totalorder %v273, 0
      %vm294 = vcmp.ne.s32.totalorder %v280, 0
      %vm295 = vcmp.ne.s32.totalorder %v287, 0
      %vm296 = vcmp.lt.s32.totalorder %v238, 0
      %vm297 = vcmp.lt.s32.totalorder %v245, 0
      %vm298 = vcmp.lt.s32.totalorder %v252, 0
      %vm299 = vcmp.lt.s32.totalorder %v259, 0
      %vm300 = vcmp.lt.s32.totalorder %v266, 0
      %vm301 = vcmp.lt.s32.totalorder %v273, 0
      %vm302 = vcmp.lt.s32.totalorder %v280, 0
      %vm303 = vcmp.lt.s32.totalorder %v287, 0
      %vm304 = vmand %vm296, %vm288
      %vm305 = vmand %vm297, %vm289
      %vm306 = vmand %vm298, %vm290
      %vm307 = vmand %vm299, %vm291
      %vm308 = vmand %vm300, %vm292
      %vm309 = vmand %vm301, %vm293
      %vm310 = vmand %vm302, %vm294
      %vm311 = vmand %vm303, %vm295
      %v312 = vadd.s32 %v238, 32
      %v313 = vadd.s32 %v245, 32
      %v314 = vadd.s32 %v252, 32
      %v315 = vadd.s32 %v259, 32
      %v316 = vadd.s32 %v266, 32
      %v317 = vadd.s32 %v273, 32
      %v318 = vadd.s32 %v280, 32
      %v319 = vadd.s32 %v287, 32
      %v320 = vsel %vm304, %v312, %v238
      %v321 = vsel %vm305, %v313, %v245
      %v322 = vsel %vm306, %v314, %v252
      %v323 = vsel %vm307, %v315, %v259
      %v324 = vsel %vm308, %v316, %v266
      %v325 = vsel %vm309, %v317, %v273
      %v326 = vsel %vm310, %v318, %v280
      %v327 = vsel %vm311, %v319, %v287
      %vm328 = vcmp.ne.s32.totalorder %v320, 0
      %vm329 = vcmp.ne.s32.totalorder %v321, 0
      %vm330 = vcmp.ne.s32.totalorder %v322, 0
      %vm331 = vcmp.ne.s32.totalorder %v323, 0
      %vm332 = vcmp.ne.s32.totalorder %v324, 0
      %vm333 = vcmp.ne.s32.totalorder %v325, 0
      %vm334 = vcmp.ne.s32.totalorder %v326, 0
      %vm335 = vcmp.ne.s32.totalorder %v327, 0
      %v336 = vsel %vm328, 1, 0
      %v337 = vsel %vm329, 1, 0
      %v338 = vsel %vm330, 1, 0
      %v339 = vsel %vm331, 1, 0
      %v340 = vsel %vm332, 1, 0
      %v341 = vsel %vm333, 1, 0
      %v342 = vsel %vm334, 1, 0
      %v343 = vsel %vm335, 1, 0
      %v344 = vcvt.s32.f32 %v336
      %v345 = vcvt.s32.f32 %v337
      %v346 = vcvt.s32.f32 %v338
      %v347 = vcvt.s32.f32 %v339
      %v348 = vcvt.s32.f32 %v340
      %v349 = vcvt.s32.f32 %v341
      %v350 = vcvt.s32.f32 %v342
      %v351 = vcvt.s32.f32 %v343
      %vm352 = vcmp.ne.s32.totalorder %v320, 31
      %vm353 = vcmp.ne.s32.totalorder %v321, 31
      %vm354 = vcmp.ne.s32.totalorder %v322, 31
      %vm355 = vcmp.ne.s32.totalorder %v323, 31
      %vm356 = vcmp.ne.s32.totalorder %v324, 31
      %vm357 = vcmp.ne.s32.totalorder %v325, 31
      %vm358 = vcmp.ne.s32.totalorder %v326, 31
      %vm359 = vcmp.ne.s32.totalorder %v327, 31
      %v360 = vsel %vm352, 1, 0
      %v361 = vsel %vm353, 1, 0
      %v362 = vsel %vm354, 1, 0
      %v363 = vsel %vm355, 1, 0
      %v364 = vsel %vm356, 1, 0
      %v365 = vsel %vm357, 1, 0
      %v366 = vsel %vm358, 1, 0
      %v367 = vsel %vm359, 1, 0
      %v368 = vcvt.s32.f32 %v360
      %v369 = vcvt.s32.f32 %v361
      %v370 = vcvt.s32.f32 %v362
      %v371 = vcvt.s32.f32 %v363
      %v372 = vcvt.s32.f32 %v364
      %v373 = vcvt.s32.f32 %v365
      %v374 = vcvt.s32.f32 %v366
      %v375 = vcvt.s32.f32 %v367
      %v376 = vld [vmem:[%s219] sm:$0x77]
      %v377 = vld [vmem:[%s219 + $0x8] sm:$0x77]
      %v378 = vld [vmem:[%s219 + $0x10] sm:$0x77]
      %v379 = vld [vmem:[%s219 + $0x18] sm:$0x77]
      %384 = vst [vmem:[#allocation1] ss:$2 sm:$0xff] %v376
      %s385 = scalar_lea.vmem [#allocation1], 16
      %386 = vst [vmem:[%s385] ss:$2 sm:$0xff] %v377
      %s387 = scalar_lea.vmem [#allocation1], 32
      %388 = vst [vmem:[%s387] ss:$2 sm:$0xff] %v378
      %s389 = scalar_lea.vmem [#allocation1], 48
      %390 = vst [vmem:[%s389] ss:$2 sm:$0xff] %v379
      %v391 = vld.sshfl [vmem:[#allocation1] sm:$0xff pattern:$0x75316420]
      %v392 = vld.sshfl [vmem:[#allocation1 + $0x8] sm:$0xff pattern:$0x75316420]
      %v393 = vld.sshfl [vmem:[#allocation1 + $0x10] sm:$0xff pattern:$0x75316420]
      %v394 = vld.sshfl [vmem:[#allocation1 + $0x18] sm:$0xff pattern:$0x75316420]
      %v395 = vld.sshfl [vmem:[#allocation1 + $0x20] sm:$0xff pattern:$0x75316420]
      %v396 = vld.sshfl [vmem:[#allocation1 + $0x28] sm:$0xff pattern:$0x75316420]
      %v397 = vld.sshfl [vmem:[#allocation1 + $0x30] sm:$0xff pattern:$0x75316420]
      %v398 = vld.sshfl [vmem:[#allocation1 + $0x38] sm:$0xff pattern:$0x75316420]
      %vm407 = vcmask 1042432
      %v408 = vsel %vm407, %v391, 0.0
      %v409 = vsel %vm407, %v392, 0.0
      %v410 = vsel %vm407, %v393, 0.0
      %v411 = vsel %vm407, %v394, 0.0
      %v412 = vsel %vm407, %v395, 0.0
      %v413 = vsel %vm407, %v396, 0.0
      %v414 = vsel %vm407, %v397, 0.0
      %v415 = vsel %vm407, %v398, 0.0
      %424 = vrot.lane.b32.xlu0 %v344, 95
      %v425 = vpop.permute.xlu0 %424
      %426 = vrot.lane.b32.xlu0 %v345, 95
      %v427 = vpop.permute.xlu0 %426
      %428 = vrot.lane.b32.xlu0 %v346, 95
      %v429 = vpop.permute.xlu0 %428
      %430 = vrot.lane.b32.xlu0 %v347, 95
      %v431 = vpop.permute.xlu0 %430
      %432 = vrot.lane.b32.xlu0 %v348, 95
      %v433 = vpop.permute.xlu0 %432
      %434 = vrot.lane.b32.xlu0 %v349, 95
      %v435 = vpop.permute.xlu0 %434
      %436 = vrot.lane.b32.xlu0 %v350, 95
      %v437 = vpop.permute.xlu0 %436
      %438 = vrot.lane.b32.xlu0 %v351, 95
      %v439 = vpop.permute.xlu0 %438
      %vm440 = vcmask 777216
      %v441 = vsel %vm440, %v425, %v427
      %v442 = vsel %vm440, %v427, %v429
      %v443 = vsel %vm440, %v429, %v431
      %v444 = vsel %vm440, %v431, %v433
      %v445 = vsel %vm440, %v433, %v435
      %v446 = vsel %vm440, %v435, %v437
      %v447 = vsel %vm440, %v437, %v439
      %v457 = vmul.f32 %v425, 0.0
      %v458 = vmul.f32 %v408, %v441
      %v459 = vmul.f32 %v409, %v442
      %v460 = vmul.f32 %v410, %v443
      %v461 = vmul.f32 %v411, %v444
      %v462 = vmul.f32 %v412, %v445
      %v463 = vmul.f32 %v413, %v446
      %v464 = vmul.f32 %v414, %v447
      %v465 = vmul.f32 %v415, %v439
      %474 = vrot.lane.b32.xlu0 %v368, 97
      %v475 = vpop.permute.xlu0 %474
      %476 = vrot.lane.b32.xlu0 %v369, 97
      %v477 = vpop.permute.xlu0 %476
      %478 = vrot.lane.b32.xlu0 %v370, 97
      %v479 = vpop.permute.xlu0 %478
      %480 = vrot.lane.b32.xlu0 %v371, 97
      %v481 = vpop.permute.xlu0 %480
      %482 = vrot.lane.b32.xlu0 %v372, 97
      %v483 = vpop.permute.xlu0 %482
      %484 = vrot.lane.b32.xlu0 %v373, 97
      %v485 = vpop.permute.xlu0 %484
      %486 = vrot.lane.b32.xlu0 %v374, 97
      %v487 = vpop.permute.xlu0 %486
      %488 = vrot.lane.b32.xlu0 %v375, 97
      %v489 = vpop.permute.xlu0 %488
      %vm490 = vcmask 793600
      %v491 = vsel %vm490, %v475, %v477
      %v492 = vsel %vm490, %v477, %v479
      %v493 = vsel %vm490, %v479, %v481
      %v494 = vsel %vm490, %v481, %v483
      %v495 = vsel %vm490, %v483, %v485
      %v496 = vsel %vm490, %v485, %v487
      %v497 = vsel %vm490, %v487, %v489
      %v507 = vmul.f32 %v475, 0.0
      %v508 = vmul.f32 %v408, %v491
      %v509 = vmul.f32 %v409, %v492
      %v510 = vmul.f32 %v410, %v493
      %v511 = vmul.f32 %v411, %v494
      %v512 = vmul.f32 %v412, %v495
      %v513 = vmul.f32 %v413, %v496
      %v514 = vmul.f32 %v414, %v497
      %v515 = vmul.f32 %v415, %v489
      %516 = vrot.lane.b32.xlu0 %v344, 127
      %v517 = vpop.permute.xlu0 %516
      %518 = vrot.lane.b32.xlu0 %v345, 127
      %v519 = vpop.permute.xlu0 %518
      %520 = vrot.lane.b32.xlu0 %v346, 127
      %v521 = vpop.permute.xlu0 %520
      %522 = vrot.lane.b32.xlu0 %v347, 127
      %v523 = vpop.permute.xlu0 %522
      %524 = vrot.lane.b32.xlu0 %v348, 127
      %v525 = vpop.permute.xlu0 %524
      %526 = vrot.lane.b32.xlu0 %v349, 127
      %v527 = vpop.permute.xlu0 %526
      %528 = vrot.lane.b32.xlu0 %v350, 127
      %v529 = vpop.permute.xlu0 %528
      %530 = vrot.lane.b32.xlu0 %v351, 127
      %v531 = vpop.permute.xlu0 %530
      %vm532 = vcmask 1039360
      %v533 = vsel %vm532, %v517, %v519
      %v534 = vsel %vm532, %v519, %v521
      %v535 = vsel %vm532, %v521, %v523
      %v536 = vsel %vm532, %v523, %v525
      %v537 = vsel %vm532, %v525, %v527
      %v538 = vsel %vm532, %v527, %v529
      %v539 = vsel %vm532, %v529, %v531
      %v549 = vmul.f32 %v517, 0.0
      %v550 = vmul.f32 %v408, %v533
      %v551 = vmul.f32 %v409, %v534
      %v552 = vmul.f32 %v410, %v535
      %v553 = vmul.f32 %v411, %v536
      %v554 = vmul.f32 %v412, %v537
      %v555 = vmul.f32 %v413, %v538
      %v556 = vmul.f32 %v414, %v539
      %v557 = vmul.f32 %v415, %v531
      %558 = vrot.lane.b32.xlu0 %v368, 1
      %v559 = vpop.permute.xlu0 %558
      %560 = vrot.lane.b32.xlu0 %v369, 1
      %v561 = vpop.permute.xlu0 %560
      %562 = vrot.lane.b32.xlu0 %v370, 1
      %v563 = vpop.permute.xlu0 %562
      %564 = vrot.lane.b32.xlu0 %v371, 1
      %v565 = vpop.permute.xlu0 %564
      %566 = vrot.lane.b32.xlu0 %v372, 1
      %v567 = vpop.permute.xlu0 %566
      %568 = vrot.lane.b32.xlu0 %v373, 1
      %v569 = vpop.permute.xlu0 %568
      %570 = vrot.lane.b32.xlu0 %v374, 1
      %v571 = vpop.permute.xlu0 %570
      %572 = vrot.lane.b32.xlu0 %v375, 1
      %v573 = vpop.permute.xlu0 %572
      %vm574 = vcmask 7168
      %v575 = vsel %vm574, %v559, %v561
      %v576 = vsel %vm574, %v561, %v563
      %v577 = vsel %vm574, %v563, %v565
      %v578 = vsel %vm574, %v565, %v567
      %v579 = vsel %vm574, %v567, %v569
      %v580 = vsel %vm574, %v569, %v571
      %v581 = vsel %vm574, %v571, %v573
      %v591 = vmul.f32 %v408, %v559
      %v592 = vmul.f32 %v409, %v575
      %v593 = vmul.f32 %v410, %v576
      %v594 = vmul.f32 %v411, %v577
      %v595 = vmul.f32 %v412, %v578
      %v596 = vmul.f32 %v413, %v579
      %v597 = vmul.f32 %v414, %v580
      %v598 = vmul.f32 %v415, %v581
      %v599 = vmul.f32 %v573, 0.0
      %600 = vrot.lane.b32.xlu0 %v344, 31
      %v601 = vpop.permute.xlu0 %600
      %602 = vrot.lane.b32.xlu0 %v345, 31
      %v603 = vpop.permute.xlu0 %602
      %604 = vrot.lane.b32.xlu0 %v346, 31
      %v605 = vpop.permute.xlu0 %604
      %606 = vrot.lane.b32.xlu0 %v347, 31
      %v607 = vpop.permute.xlu0 %606
      %608 = vrot.lane.b32.xlu0 %v348, 31
      %v609 = vpop.permute.xlu0 %608
      %610 = vrot.lane.b32.xlu0 %v349, 31
      %v611 = vpop.permute.xlu0 %610
      %612 = vrot.lane.b32.xlu0 %v350, 31
      %v613 = vpop.permute.xlu0 %612
      %614 = vrot.lane.b32.xlu0 %v351, 31
      %v615 = vpop.permute.xlu0 %614
      %vm616 = vcmask 252928
      %v617 = vsel %vm616, %v601, %v603
      %v618 = vsel %vm616, %v603, %v605
      %v619 = vsel %vm616, %v605, %v607
      %v620 = vsel %vm616, %v607, %v609
      %v621 = vsel %vm616, %v609, %v611
      %v622 = vsel %vm616, %v611, %v613
      %v623 = vsel %vm616, %v613, %v615
      %v633 = vmul.f32 %v408, %v601
      %v634 = vmul.f32 %v409, %v617
      %v635 = vmul.f32 %v410, %v618
      %v636 = vmul.f32 %v411, %v619
      %v637 = vmul.f32 %v412, %v620
      %v638 = vmul.f32 %v413, %v621
      %v639 = vmul.f32 %v414, %v622
      %v640 = vmul.f32 %v415, %v623
      %v641 = vmul.f32 %v615, 0.0
      %642 = vrot.lane.b32.xlu0 %v368, 33
      %v643 = vpop.permute.xlu0 %642
      %644 = vrot.lane.b32.xlu0 %v369, 33
      %v645 = vpop.permute.xlu0 %644
      %646 = vrot.lane.b32.xlu0 %v370, 33
      %v647 = vpop.permute.xlu0 %646
      %648 = vrot.lane.b32.xlu0 %v371, 33
      %v649 = vpop.permute.xlu0 %648
      %650 = vrot.lane.b32.xlu0 %v372, 33
      %v651 = vpop.permute.xlu0 %650
      %652 = vrot.lane.b32.xlu0 %v373, 33
      %v653 = vpop.permute.xlu0 %652
      %654 = vrot.lane.b32.xlu0 %v374, 33
      %v655 = vpop.permute.xlu0 %654
      %656 = vrot.lane.b32.xlu0 %v375, 33
      %v657 = vpop.permute.xlu0 %656
      %vm658 = vcmask 269312
      %v659 = vsel %vm658, %v643, %v645
      %v660 = vsel %vm658, %v645, %v647
      %v661 = vsel %vm658, %v647, %v649
      %v662 = vsel %vm658, %v649, %v651
      %v663 = vsel %vm658, %v651, %v653
      %v664 = vsel %vm658, %v653, %v655
      %v665 = vsel %vm658, %v655, %v657
      %v675 = vmul.f32 %v408, %v643
      %v676 = vmul.f32 %v409, %v659
      %v677 = vmul.f32 %v410, %v660
      %v678 = vmul.f32 %v411, %v661
      %v679 = vmul.f32 %v412, %v662
      %v680 = vmul.f32 %v413, %v663
      %v681 = vmul.f32 %v414, %v664
      %v682 = vmul.f32 %v415, %v665
      %v683 = vmul.f32 %v657, 0.0
      %693 = vrot.lane.b32.xlu0 0.0, 127
      %v694 = vpop.permute.xlu0 %693
      %695 = vrot.lane.b32.xlu0 %v408, 127
      %v696 = vpop.permute.xlu0 %695
      %697 = vrot.lane.b32.xlu0 %v409, 127
      %v698 = vpop.permute.xlu0 %697
      %699 = vrot.lane.b32.xlu0 %v410, 127
      %v700 = vpop.permute.xlu0 %699
      %701 = vrot.lane.b32.xlu0 %v411, 127
      %v702 = vpop.permute.xlu0 %701
      %703 = vrot.lane.b32.xlu0 %v412, 127
      %v704 = vpop.permute.xlu0 %703
      %705 = vrot.lane.b32.xlu0 %v413, 127
      %v706 = vpop.permute.xlu0 %705
      %707 = vrot.lane.b32.xlu0 %v414, 127
      %v708 = vpop.permute.xlu0 %707
      %709 = vrot.lane.b32.xlu0 %v415, 127
      %v710 = vpop.permute.xlu0 %709
      %v711 = vsel %vm532, %v694, %v696
      %v712 = vsel %vm532, %v696, %v698
      %v713 = vsel %vm532, %v698, %v700
      %v714 = vsel %vm532, %v700, %v702
      %v715 = vsel %vm532, %v702, %v704
      %v716 = vsel %vm532, %v704, %v706
      %v717 = vsel %vm532, %v706, %v708
      %v718 = vsel %vm532, %v708, %v710
      %728 = vrot.lane.b32.xlu0 %v507, 126
      %v729 = vpop.permute.xlu0 %728
      %730 = vrot.lane.b32.xlu0 %v508, 126
      %v731 = vpop.permute.xlu0 %730
      %732 = vrot.lane.b32.xlu0 %v509, 126
      %v733 = vpop.permute.xlu0 %732
      %734 = vrot.lane.b32.xlu0 %v510, 126
      %v735 = vpop.permute.xlu0 %734
      %736 = vrot.lane.b32.xlu0 %v511, 126
      %v737 = vpop.permute.xlu0 %736
      %738 = vrot.lane.b32.xlu0 %v512, 126
      %v739 = vpop.permute.xlu0 %738
      %740 = vrot.lane.b32.xlu0 %v513, 126
      %v741 = vpop.permute.xlu0 %740
      %742 = vrot.lane.b32.xlu0 %v514, 126
      %v743 = vpop.permute.xlu0 %742
      %744 = vrot.lane.b32.xlu0 %v515, 126
      %v745 = vpop.permute.xlu0 %744
      %vm746 = vcmask 1031168
      %v747 = vsel %vm746, %v729, %v731
      %v748 = vsel %vm746, %v731, %v733
      %v749 = vsel %vm746, %v733, %v735
      %v750 = vsel %vm746, %v735, %v737
      %v751 = vsel %vm746, %v737, %v739
      %v752 = vsel %vm746, %v739, %v741
      %v753 = vsel %vm746, %v741, %v743
      %v754 = vsel %vm746, %v743, %v745
      %764 = vrot.lane.b32.xlu0 %v549, 96
      %v765 = vpop.permute.xlu0 %764
      %766 = vrot.lane.b32.xlu0 %v550, 96
      %v767 = vpop.permute.xlu0 %766
      %768 = vrot.lane.b32.xlu0 %v551, 96
      %v769 = vpop.permute.xlu0 %768
      %770 = vrot.lane.b32.xlu0 %v552, 96
      %v771 = vpop.permute.xlu0 %770
      %772 = vrot.lane.b32.xlu0 %v553, 96
      %v773 = vpop.permute.xlu0 %772
      %774 = vrot.lane.b32.xlu0 %v554, 96
      %v775 = vpop.permute.xlu0 %774
      %776 = vrot.lane.b32.xlu0 %v555, 96
      %v777 = vpop.permute.xlu0 %776
      %778 = vrot.lane.b32.xlu0 %v556, 96
      %v779 = vpop.permute.xlu0 %778
      %780 = vrot.lane.b32.xlu0 %v557, 96
      %v781 = vpop.permute.xlu0 %780
      %vm782 = vcmask 785408
      %v783 = vsel %vm782, %v765, %v767
      %v784 = vsel %vm782, %v767, %v769
      %v785 = vsel %vm782, %v769, %v771
      %v786 = vsel %vm782, %v771, %v773
      %v787 = vsel %vm782, %v773, %v775
      %v788 = vsel %vm782, %v775, %v777
      %v789 = vsel %vm782, %v777, %v779
      %v790 = vsel %vm782, %v779, %v781
      %791 = vrot.lane.b32.xlu0 %v408, 95
      %v792 = vpop.permute.xlu0 %791
      %793 = vrot.lane.b32.xlu0 %v409, 95
      %v794 = vpop.permute.xlu0 %793
      %795 = vrot.lane.b32.xlu0 %v410, 95
      %v796 = vpop.permute.xlu0 %795
      %797 = vrot.lane.b32.xlu0 %v411, 95
      %v798 = vpop.permute.xlu0 %797
      %799 = vrot.lane.b32.xlu0 %v412, 95
      %v800 = vpop.permute.xlu0 %799
      %801 = vrot.lane.b32.xlu0 %v413, 95
      %v802 = vpop.permute.xlu0 %801
      %803 = vrot.lane.b32.xlu0 %v414, 95
      %v804 = vpop.permute.xlu0 %803
      %805 = vrot.lane.b32.xlu0 %v415, 95
      %v806 = vpop.permute.xlu0 %805
      %v807 = vsel %vm440, %v792, %v794
      %v808 = vsel %vm440, %v794, %v796
      %v809 = vsel %vm440, %v796, %v798
      %v810 = vsel %vm440, %v798, %v800
      %v811 = vsel %vm440, %v800, %v802
      %v812 = vsel %vm440, %v802, %v804
      %v813 = vsel %vm440, %v804, %v806
      %823 = vrot.lane.b32.xlu0 %v591, 94
      %v824 = vpop.permute.xlu0 %823
      %825 = vrot.lane.b32.xlu0 %v592, 94
      %v826 = vpop.permute.xlu0 %825
      %827 = vrot.lane.b32.xlu0 %v593, 94
      %v828 = vpop.permute.xlu0 %827
      %829 = vrot.lane.b32.xlu0 %v594, 94
      %v830 = vpop.permute.xlu0 %829
      %831 = vrot.lane.b32.xlu0 %v595, 94
      %v832 = vpop.permute.xlu0 %831
      %833 = vrot.lane.b32.xlu0 %v596, 94
      %v834 = vpop.permute.xlu0 %833
      %835 = vrot.lane.b32.xlu0 %v597, 94
      %v836 = vpop.permute.xlu0 %835
      %837 = vrot.lane.b32.xlu0 %v598, 94
      %v838 = vpop.permute.xlu0 %837
      %839 = vrot.lane.b32.xlu0 %v599, 94
      %v840 = vpop.permute.xlu0 %839
      %vm841 = vcmask 769024
      %v842 = vsel %vm841, %v824, %v826
      %v843 = vsel %vm841, %v826, %v828
      %v844 = vsel %vm841, %v828, %v830
      %v845 = vsel %vm841, %v830, %v832
      %v846 = vsel %vm841, %v832, %v834
      %v847 = vsel %vm841, %v834, %v836
      %v848 = vsel %vm841, %v836, %v838
      %v849 = vsel %vm841, %v838, %v840
      %859 = vrot.lane.b32.xlu0 %v633, 64
      %v860 = vpop.permute.xlu0 %859
      %861 = vrot.lane.b32.xlu0 %v634, 64
      %v862 = vpop.permute.xlu0 %861
      %863 = vrot.lane.b32.xlu0 %v635, 64
      %v864 = vpop.permute.xlu0 %863
      %865 = vrot.lane.b32.xlu0 %v636, 64
      %v866 = vpop.permute.xlu0 %865
      %867 = vrot.lane.b32.xlu0 %v637, 64
      %v868 = vpop.permute.xlu0 %867
      %869 = vrot.lane.b32.xlu0 %v638, 64
      %v870 = vpop.permute.xlu0 %869
      %871 = vrot.lane.b32.xlu0 %v639, 64
      %v872 = vpop.permute.xlu0 %871
      %873 = vrot.lane.b32.xlu0 %v640, 64
      %v874 = vpop.permute.xlu0 %873
      %875 = vrot.lane.b32.xlu0 %v641, 64
      %v876 = vpop.permute.xlu0 %875
      %vm877 = vcmask 523264
      %v878 = vsel %vm877, %v860, %v862
      %v879 = vsel %vm877, %v862, %v864
      %v880 = vsel %vm877, %v864, %v866
      %v881 = vsel %vm877, %v866, %v868
      %v882 = vsel %vm877, %v868, %v870
      %v883 = vsel %vm877, %v870, %v872
      %v884 = vsel %vm877, %v872, %v874
      %v885 = vsel %vm877, %v874, %v876
      %886 = vrot.lane.b32.xlu0 %v408, 63
      %v887 = vpop.permute.xlu0 %886
      %888 = vrot.lane.b32.xlu0 %v409, 63
      %v889 = vpop.permute.xlu0 %888
      %890 = vrot.lane.b32.xlu0 %v410, 63
      %v891 = vpop.permute.xlu0 %890
      %892 = vrot.lane.b32.xlu0 %v411, 63
      %v893 = vpop.permute.xlu0 %892
      %894 = vrot.lane.b32.xlu0 %v412, 63
      %v895 = vpop.permute.xlu0 %894
      %896 = vrot.lane.b32.xlu0 %v413, 63
      %v897 = vpop.permute.xlu0 %896
      %898 = vrot.lane.b32.xlu0 %v414, 63
      %v899 = vpop.permute.xlu0 %898
      %900 = vrot.lane.b32.xlu0 %v415, 63
      %v901 = vpop.permute.xlu0 %900
      %902 = vrot.lane.b32.xlu0 0.0, 63
      %v903 = vpop.permute.xlu0 %902
      %vm904 = vcmask 515072
      %v905 = vsel %vm904, %v887, %v889
      %v906 = vsel %vm904, %v889, %v891
      %v907 = vsel %vm904, %v891, %v893
      %v908 = vsel %vm904, %v893, %v895
      %v909 = vsel %vm904, %v895, %v897
      %v910 = vsel %vm904, %v897, %v899
      %v911 = vsel %vm904, %v899, %v901
      %v912 = vsel %vm904, %v901, %v903
      %922 = vrot.lane.b32.xlu0 %v675, 62
      %v923 = vpop.permute.xlu0 %922
      %924 = vrot.lane.b32.xlu0 %v676, 62
      %v925 = vpop.permute.xlu0 %924
      %926 = vrot.lane.b32.xlu0 %v677, 62
      %v927 = vpop.permute.xlu0 %926
      %928 = vrot.lane.b32.xlu0 %v678, 62
      %v929 = vpop.permute.xlu0 %928
      %930 = vrot.lane.b32.xlu0 %v679, 62
      %v931 = vpop.permute.xlu0 %930
      %932 = vrot.lane.b32.xlu0 %v680, 62
      %v933 = vpop.permute.xlu0 %932
      %934 = vrot.lane.b32.xlu0 %v681, 62
      %v935 = vpop.permute.xlu0 %934
      %936 = vrot.lane.b32.xlu0 %v682, 62
      %v937 = vpop.permute.xlu0 %936
      %938 = vrot.lane.b32.xlu0 %v683, 62
      %v939 = vpop.permute.xlu0 %938
      %vm940 = vcmask 506880
      %v941 = vsel %vm940, %v923, %v925
      %v942 = vsel %vm940, %v925, %v927
      %v943 = vsel %vm940, %v927, %v929
      %v944 = vsel %vm940, %v929, %v931
      %v945 = vsel %vm940, %v931, %v933
      %v946 = vsel %vm940, %v933, %v935
      %v947 = vsel %vm940, %v935, %v937
      %v948 = vsel %vm940, %v937, %v939
      %v949 = vld [vmem:[%s1] sm:$0xff]
      %v950 = vld [vmem:[%s2] sm:$0xff]
      %952 = vset.pattern.permute.xlu0 0
      %953 = vperm.xlu0 %952, %v950
      %v954 = vpop.permute.xlu0 %953
      %965 = vrot.lane.b32.xlu0 %v457, 33
      %v966 = vpop.permute.xlu0 %965
      %967 = vrot.lane.b32.xlu0 %v458, 33
      %v968 = vpop.permute.xlu0 %967
      %969 = vrot.lane.b32.xlu0 %v459, 33
      %v970 = vpop.permute.xlu0 %969
      %971 = vrot.lane.b32.xlu0 %v460, 33
      %v972 = vpop.permute.xlu0 %971
      %973 = vrot.lane.b32.xlu0 %v461, 33
      %v974 = vpop.permute.xlu0 %973
      %975 = vrot.lane.b32.xlu0 %v462, 33
      %v976 = vpop.permute.xlu0 %975
      %977 = vrot.lane.b32.xlu0 %v463, 33
      %v978 = vpop.permute.xlu0 %977
      %979 = vrot.lane.b32.xlu0 %v464, 33
      %v980 = vpop.permute.xlu0 %979
      %981 = vrot.lane.b32.xlu0 %v465, 33
      %v982 = vpop.permute.xlu0 %981
      %983 = vrot.lane.b32.xlu0 %v711, 33
      %v984 = vpop.permute.xlu0 %983
      %985 = vrot.lane.b32.xlu0 %v712, 33
      %v986 = vpop.permute.xlu0 %985
      %987 = vrot.lane.b32.xlu0 %v713, 33
      %v988 = vpop.permute.xlu0 %987
      %989 = vrot.lane.b32.xlu0 %v714, 33
      %v990 = vpop.permute.xlu0 %989
      %991 = vrot.lane.b32.xlu0 %v715, 33
      %v992 = vpop.permute.xlu0 %991
      %993 = vrot.lane.b32.xlu0 %v716, 33
      %v994 = vpop.permute.xlu0 %993
      %995 = vrot.lane.b32.xlu0 %v717, 33
      %v996 = vpop.permute.xlu0 %995
      %997 = vrot.lane.b32.xlu0 %v718, 33
      %v998 = vpop.permute.xlu0 %997
      %999 = vrot.lane.b32.xlu0 %v710, 33
      %v1000 = vpop.permute.xlu0 %999
      %1001 = vrot.lane.b32.xlu0 %v747, 33
      %v1002 = vpop.permute.xlu0 %1001
      %1003 = vrot.lane.b32.xlu0 %v748, 33
      %v1004 = vpop.permute.xlu0 %1003
      %1005 = vrot.lane.b32.xlu0 %v749, 33
      %v1006 = vpop.permute.xlu0 %1005
      %1007 = vrot.lane.b32.xlu0 %v750, 33
      %v1008 = vpop.permute.xlu0 %1007
      %1009 = vrot.lane.b32.xlu0 %v751, 33
      %v1010 = vpop.permute.xlu0 %1009
      %1011 = vrot.lane.b32.xlu0 %v752, 33
      %v1012 = vpop.permute.xlu0 %1011
      %1013 = vrot.lane.b32.xlu0 %v753, 33
      %v1014 = vpop.permute.xlu0 %1013
      %1015 = vrot.lane.b32.xlu0 %v754, 33
      %v1016 = vpop.permute.xlu0 %1015
      %1017 = vrot.lane.b32.xlu0 %v745, 33
      %v1018 = vpop.permute.xlu0 %1017
      %1019 = vrot.lane.b32.xlu0 %v783, 33
      %v1020 = vpop.permute.xlu0 %1019
      %1021 = vrot.lane.b32.xlu0 %v784, 33
      %v1022 = vpop.permute.xlu0 %1021
      %1023 = vrot.lane.b32.xlu0 %v785, 33
      %v1024 = vpop.permute.xlu0 %1023
      %1025 = vrot.lane.b32.xlu0 %v786, 33
      %v1026 = vpop.permute.xlu0 %1025
      %1027 = vrot.lane.b32.xlu0 %v787, 33
      %v1028 = vpop.permute.xlu0 %1027
      %1029 = vrot.lane.b32.xlu0 %v788, 33
      %v1030 = vpop.permute.xlu0 %1029
      %1031 = vrot.lane.b32.xlu0 %v789, 33
      %v1032 = vpop.permute.xlu0 %1031
      %1033 = vrot.lane.b32.xlu0 %v790, 33
      %v1034 = vpop.permute.xlu0 %1033
      %1035 = vrot.lane.b32.xlu0 %v781, 33
      %v1036 = vpop.permute.xlu0 %1035
      %1037 = vrot.lane.b32.xlu0 %v792, 33
      %v1038 = vpop.permute.xlu0 %1037
      %1039 = vrot.lane.b32.xlu0 %v807, 33
      %v1040 = vpop.permute.xlu0 %1039
      %1041 = vrot.lane.b32.xlu0 %v808, 33
      %v1042 = vpop.permute.xlu0 %1041
      %1043 = vrot.lane.b32.xlu0 %v809, 33
      %v1044 = vpop.permute.xlu0 %1043
      %1045 = vrot.lane.b32.xlu0 %v810, 33
      %v1046 = vpop.permute.xlu0 %1045
      %1047 = vrot.lane.b32.xlu0 %v811, 33
      %v1048 = vpop.permute.xlu0 %1047
      %1049 = vrot.lane.b32.xlu0 %v812, 33
      %v1050 = vpop.permute.xlu0 %1049
      %1051 = vrot.lane.b32.xlu0 %v813, 33
      %v1052 = vpop.permute.xlu0 %1051
      %1053 = vrot.lane.b32.xlu0 %v806, 33
      %v1054 = vpop.permute.xlu0 %1053
      %1055 = vrot.lane.b32.xlu0 %v824, 33
      %v1056 = vpop.permute.xlu0 %1055
      %1057 = vrot.lane.b32.xlu0 %v842, 33
      %v1058 = vpop.permute.xlu0 %1057
      %1059 = vrot.lane.b32.xlu0 %v843, 33
      %v1060 = vpop.permute.xlu0 %1059
      %1061 = vrot.lane.b32.xlu0 %v844, 33
      %v1062 = vpop.permute.xlu0 %1061
      %1063 = vrot.lane.b32.xlu0 %v845, 33
      %v1064 = vpop.permute.xlu0 %1063
      %1065 = vrot.lane.b32.xlu0 %v846, 33
      %v1066 = vpop.permute.xlu0 %1065
      %1067 = vrot.lane.b32.xlu0 %v847, 33
      %v1068 = vpop.permute.xlu0 %1067
      %1069 = vrot.lane.b32.xlu0 %v848, 33
      %v1070 = vpop.permute.xlu0 %1069
      %1071 = vrot.lane.b32.xlu0 %v849, 33
      %v1072 = vpop.permute.xlu0 %1071
      %1073 = vrot.lane.b32.xlu0 %v860, 33
      %v1074 = vpop.permute.xlu0 %1073
      %1075 = vrot.lane.b32.xlu0 %v878, 33
      %v1076 = vpop.permute.xlu0 %1075
      %1077 = vrot.lane.b32.xlu0 %v879, 33
      %v1078 = vpop.permute.xlu0 %1077
      %1079 = vrot.lane.b32.xlu0 %v880, 33
      %v1080 = vpop.permute.xlu0 %1079
      %1081 = vrot.lane.b32.xlu0 %v881, 33
      %v1082 = vpop.permute.xlu0 %1081
      %1083 = vrot.lane.b32.xlu0 %v882, 33
      %v1084 = vpop.permute.xlu0 %1083
      %1085 = vrot.lane.b32.xlu0 %v883, 33
      %v1086 = vpop.permute.xlu0 %1085
      %1087 = vrot.lane.b32.xlu0 %v884, 33
      %v1088 = vpop.permute.xlu0 %1087
      %1089 = vrot.lane.b32.xlu0 %v885, 33
      %v1090 = vpop.permute.xlu0 %1089
      %1091 = vrot.lane.b32.xlu0 %v887, 33
      %v1092 = vpop.permute.xlu0 %1091
      %1093 = vrot.lane.b32.xlu0 %v905, 33
      %v1094 = vpop.permute.xlu0 %1093
      %1095 = vrot.lane.b32.xlu0 %v906, 33
      %v1096 = vpop.permute.xlu0 %1095
      %1097 = vrot.lane.b32.xlu0 %v907, 33
      %v1098 = vpop.permute.xlu0 %1097
      %1099 = vrot.lane.b32.xlu0 %v908, 33
      %v1100 = vpop.permute.xlu0 %1099
      %1101 = vrot.lane.b32.xlu0 %v909, 33
      %v1102 = vpop.permute.xlu0 %1101
      %1103 = vrot.lane.b32.xlu0 %v910, 33
      %v1104 = vpop.permute.xlu0 %1103
      %1105 = vrot.lane.b32.xlu0 %v911, 33
      %v1106 = vpop.permute.xlu0 %1105
      %1107 = vrot.lane.b32.xlu0 %v912, 33
      %v1108 = vpop.permute.xlu0 %1107
      %1109 = vrot.lane.b32.xlu0 %v923, 33
      %v1110 = vpop.permute.xlu0 %1109
      %1111 = vrot.lane.b32.xlu0 %v941, 33
      %v1112 = vpop.permute.xlu0 %1111
      %1113 = vrot.lane.b32.xlu0 %v942, 33
      %v1114 = vpop.permute.xlu0 %1113
      %1115 = vrot.lane.b32.xlu0 %v943, 33
      %v1116 = vpop.permute.xlu0 %1115
      %1117 = vrot.lane.b32.xlu0 %v944, 33
      %v1118 = vpop.permute.xlu0 %1117
      %1119 = vrot.lane.b32.xlu0 %v945, 33
      %v1120 = vpop.permute.xlu0 %1119
      %1121 = vrot.lane.b32.xlu0 %v946, 33
      %v1122 = vpop.permute.xlu0 %1121
      %1123 = vrot.lane.b32.xlu0 %v947, 33
      %v1124 = vpop.permute.xlu0 %1123
      %1125 = vrot.lane.b32.xlu0 %v948, 33
      %v1126 = vpop.permute.xlu0 %1125
      %v1127 = vsel %vm658, %v966, %v968
      %v1128 = vsel %vm658, %v968, %v970
      %v1129 = vsel %vm658, %v970, %v972
      %v1130 = vsel %vm658, %v972, %v974
      %v1131 = vsel %vm658, %v974, %v976
      %v1132 = vsel %vm658, %v976, %v978
      %v1133 = vsel %vm658, %v978, %v980
      %v1134 = vsel %vm658, %v980, %v982
      %v1135 = vsel %vm658, %v984, %v986
      %v1136 = vsel %vm658, %v986, %v988
      %v1137 = vsel %vm658, %v988, %v990
      %v1138 = vsel %vm658, %v990, %v992
      %v1139 = vsel %vm658, %v992, %v994
      %v1140 = vsel %vm658, %v994, %v996
      %v1141 = vsel %vm658, %v996, %v998
      %v1142 = vsel %vm658, %v998, %v1000
      %v1143 = vsel %vm658, %v1002, %v1004
      %v1144 = vsel %vm658, %v1004, %v1006
      %v1145 = vsel %vm658, %v1006, %v1008
      %v1146 = vsel %vm658, %v1008, %v1010
      %v1147 = vsel %vm658, %v1010, %v1012
      %v1148 = vsel %vm658, %v1012, %v1014
      %v1149 = vsel %vm658, %v1014, %v1016
      %v1150 = vsel %vm658, %v1016, %v1018
      %v1151 = vsel %vm658, %v1020, %v1022
      %v1152 = vsel %vm658, %v1022, %v1024
      %v1153 = vsel %vm658, %v1024, %v1026
      %v1154 = vsel %vm658, %v1026, %v1028
      %v1155 = vsel %vm658, %v1028, %v1030
      %v1156 = vsel %vm658, %v1030, %v1032
      %v1157 = vsel %vm658, %v1032, %v1034
      %v1158 = vsel %vm658, %v1034, %v1036
      %v1159 = vsel %vm658, %v1038, %v1040
      %v1160 = vsel %vm658, %v1040, %v1042
      %v1161 = vsel %vm658, %v1042, %v1044
      %v1162 = vsel %vm658, %v1044, %v1046
      %v1163 = vsel %vm658, %v1046, %v1048
      %v1164 = vsel %vm658, %v1048, %v1050
      %v1165 = vsel %vm658, %v1050, %v1052
      %v1166 = vsel %vm658, %v1052, %v1054
      %v1167 = vsel %vm658, %v1056, %v1058
      %v1168 = vsel %vm658, %v1058, %v1060
      %v1169 = vsel %vm658, %v1060, %v1062
      %v1170 = vsel %vm658, %v1062, %v1064
      %v1171 = vsel %vm658, %v1064, %v1066
      %v1172 = vsel %vm658, %v1066, %v1068
      %v1173 = vsel %vm658, %v1068, %v1070
      %v1174 = vsel %vm658, %v1070, %v1072
      %v1175 = vsel %vm658, %v1074, %v1076
      %v1176 = vsel %vm658, %v1076, %v1078
      %v1177 = vsel %vm658, %v1078, %v1080
      %v1178 = vsel %vm658, %v1080, %v1082
      %v1179 = vsel %vm658, %v1082, %v1084
      %v1180 = vsel %vm658, %v1084, %v1086
      %v1181 = vsel %vm658, %v1086, %v1088
      %v1182 = vsel %vm658, %v1088, %v1090
      %v1183 = vsel %vm658, %v1092, %v1094
      %v1184 = vsel %vm658, %v1094, %v1096
      %v1185 = vsel %vm658, %v1096, %v1098
      %v1186 = vsel %vm658, %v1098, %v1100
      %v1187 = vsel %vm658, %v1100, %v1102
      %v1188 = vsel %vm658, %v1102, %v1104
      %v1189 = vsel %vm658, %v1104, %v1106
      %v1190 = vsel %vm658, %v1106, %v1108
      %v1191 = vsel %vm658, %v1110, %v1112
      %v1192 = vsel %vm658, %v1112, %v1114
      %v1193 = vsel %vm658, %v1114, %v1116
      %v1194 = vsel %vm658, %v1116, %v1118
      %v1195 = vsel %vm658, %v1118, %v1120
      %v1196 = vsel %vm658, %v1120, %v1122
      %v1197 = vsel %vm658, %v1122, %v1124
      %v1198 = vsel %vm658, %v1124, %v1126
      %vm1271 = vcmask 588800
      %v1273 = vsel %vm1271, %v949, 0
      %1275 = vmatpush.msra.mxu0 0.0
      %1276 = vmatpush.msra.mxu0 0.0
      %1277 = vmatpush.msra.mxu0 0.0
      %1278 = vmatpush.msra.mxu0 0.0
      %1279 = vmatpush.msra.mxu0 0.0
      %1280 = vmatpush.msra.mxu0 0.0
      %1281 = vmatpush.msra.mxu0 0.0
      %1282 = vmatpush.msra.mxu0 %v1191
      %1283 = vmatpush.msra.mxu0 %v1183
      %1284 = vmatpush.msra.mxu0 %v1175
      %1285 = vmatpush.msra.mxu0 %v1167
      %1286 = vmatpush.msra.mxu0 %v1159
      %1287 = vmatpush.msra.mxu0 %v1151
      %1288 = vmatpush.msra.mxu0 %v1143
      %1289 = vmatpush.msra.mxu0 %v1135
      %1290 = vmatpush.msra.mxu0 %v1127
      %1291 = vmatmul.f32.gmra.mxu0 %v1273
      %v1292 = vpop.f32.mrf.mxu0
      %v1293 = vadd.f32 %v954, %v1292
      %1294 = vdwg.mxu0
      %1295 = vmatpush.msra.mxu0 0.0
      %1296 = vmatpush.msra.mxu0 0.0
      %1297 = vmatpush.msra.mxu0 0.0
      %1298 = vmatpush.msra.mxu0 0.0
      %1299 = vmatpush.msra.mxu0 0.0
      %1300 = vmatpush.msra.mxu0 0.0
      %1301 = vmatpush.msra.mxu0 0.0
      %1302 = vmatpush.msra.mxu0 %v1192
      %1303 = vmatpush.msra.mxu0 %v1184
      %1304 = vmatpush.msra.mxu0 %v1176
      %1305 = vmatpush.msra.mxu0 %v1168
      %1306 = vmatpush.msra.mxu0 %v1160
      %1307 = vmatpush.msra.mxu0 %v1152
      %1308 = vmatpush.msra.mxu0 %v1144
      %1309 = vmatpush.msra.mxu0 %v1136
      %1310 = vmatpush.msra.mxu0 %v1128
      %1311 = vmatmul.f32.gmra.mxu0 %v1273
      %v1312 = vpop.f32.mrf.mxu0
      %v1313 = vadd.f32 %v954, %v1312
      %1314 = vdwg.mxu0
      %1315 = vmatpush.msra.mxu0 0.0
      %1316 = vmatpush.msra.mxu0 0.0
      %1317 = vmatpush.msra.mxu0 0.0
      %1318 = vmatpush.msra.mxu0 0.0
      %1319 = vmatpush.msra.mxu0 0.0
      %1320 = vmatpush.msra.mxu0 0.0
      %1321 = vmatpush.msra.mxu0 0.0
      %1322 = vmatpush.msra.mxu0 %v1193
      %1323 = vmatpush.msra.mxu0 %v1185
      %1324 = vmatpush.msra.mxu0 %v1177
      %1325 = vmatpush.msra.mxu0 %v1169
      %1326 = vmatpush.msra.mxu0 %v1161
      %1327 = vmatpush.msra.mxu0 %v1153
      %1328 = vmatpush.msra.mxu0 %v1145
      %1329 = vmatpush.msra.mxu0 %v1137
      %1330 = vmatpush.msra.mxu0 %v1129
      %1331 = vmatmul.f32.gmra.mxu0 %v1273
      %v1332 = vpop.f32.mrf.mxu0
      %v1333 = vadd.f32 %v954, %v1332
      %1334 = vdwg.mxu0
      %1335 = vmatpush.msra.mxu0 0.0
      %1336 = vmatpush.msra.mxu0 0.0
      %1337 = vmatpush.msra.mxu0 0.0
      %1338 = vmatpush.msra.mxu0 0.0
      %1339 = vmatpush.msra.mxu0 0.0
      %1340 = vmatpush.msra.mxu0 0.0
      %1341 = vmatpush.msra.mxu0 0.0
      %1342 = vmatpush.msra.mxu0 %v1194
      %1343 = vmatpush.msra.mxu0 %v1186
      %1344 = vmatpush.msra.mxu0 %v1178
      %1345 = vmatpush.msra.mxu0 %v1170
      %1346 = vmatpush.msra.mxu0 %v1162
      %1347 = vmatpush.msra.mxu0 %v1154
      %1348 = vmatpush.msra.mxu0 %v1146
      %1349 = vmatpush.msra.mxu0 %v1138
      %1350 = vmatpush.msra.mxu0 %v1130
      %1351 = vmatmul.f32.gmra.mxu0 %v1273
      %v1352 = vpop.f32.mrf.mxu0
      %v1353 = vadd.f32 %v954, %v1352
      %1354 = vdwg.mxu0
      %1355 = vmatpush.msra.mxu0 0.0
      %1356 = vmatpush.msra.mxu0 0.0
      %1357 = vmatpush.msra.mxu0 0.0
      %1358 = vmatpush.msra.mxu0 0.0
      %1359 = vmatpush.msra.mxu0 0.0
      %1360 = vmatpush.msra.mxu0 0.0
      %1361 = vmatpush.msra.mxu0 0.0
      %1362 = vmatpush.msra.mxu0 %v1195
      %1363 = vmatpush.msra.mxu0 %v1187
      %1364 = vmatpush.msra.mxu0 %v1179
      %1365 = vmatpush.msra.mxu0 %v1171
      %1366 = vmatpush.msra.mxu0 %v1163
      %1367 = vmatpush.msra.mxu0 %v1155
      %1368 = vmatpush.msra.mxu0 %v1147
      %1369 = vmatpush.msra.mxu0 %v1139
      %1370 = vmatpush.msra.mxu0 %v1131
      %1371 = vmatmul.f32.gmra.mxu0 %v1273
      %v1372 = vpop.f32.mrf.mxu0
      %v1373 = vadd.f32 %v954, %v1372
      %1374 = vdwg.mxu0
      %1375 = vmatpush.msra.mxu0 0.0
      %1376 = vmatpush.msra.mxu0 0.0
      %1377 = vmatpush.msra.mxu0 0.0
      %1378 = vmatpush.msra.mxu0 0.0
      %1379 = vmatpush.msra.mxu0 0.0
      %1380 = vmatpush.msra.mxu0 0.0
      %1381 = vmatpush.msra.mxu0 0.0
      %1382 = vmatpush.msra.mxu0 %v1196
      %1383 = vmatpush.msra.mxu0 %v1188
      %1384 = vmatpush.msra.mxu0 %v1180
      %1385 = vmatpush.msra.mxu0 %v1172
      %1386 = vmatpush.msra.mxu0 %v1164
      %1387 = vmatpush.msra.mxu0 %v1156
      %1388 = vmatpush.msra.mxu0 %v1148
      %1389 = vmatpush.msra.mxu0 %v1140
      %1390 = vmatpush.msra.mxu0 %v1132
      %1391 = vmatmul.f32.gmra.mxu0 %v1273
      %v1392 = vpop.f32.mrf.mxu0
      %v1393 = vadd.f32 %v954, %v1392
      %1394 = vdwg.mxu0
      %1395 = vmatpush.msra.mxu0 0.0
      %1396 = vmatpush.msra.mxu0 0.0
      %1397 = vmatpush.msra.mxu0 0.0
      %1398 = vmatpush.msra.mxu0 0.0
      %1399 = vmatpush.msra.mxu0 0.0
      %1400 = vmatpush.msra.mxu0 0.0
      %1401 = vmatpush.msra.mxu0 0.0
      %1402 = vmatpush.msra.mxu0 %v1197
      %1403 = vmatpush.msra.mxu0 %v1189
      %1404 = vmatpush.msra.mxu0 %v1181
      %1405 = vmatpush.msra.mxu0 %v1173
      %1406 = vmatpush.msra.mxu0 %v1165
      %1407 = vmatpush.msra.mxu0 %v1157
      %1408 = vmatpush.msra.mxu0 %v1149
      %1409 = vmatpush.msra.mxu0 %v1141
      %1410 = vmatpush.msra.mxu0 %v1133
      %1411 = vmatmul.f32.gmra.mxu0 %v1273
      %v1412 = vpop.f32.mrf.mxu0
      %v1413 = vadd.f32 %v954, %v1412
      %1414 = vdwg.mxu0
      %1415 = vmatpush.msra.mxu0 0.0
      %1416 = vmatpush.msra.mxu0 0.0
      %1417 = vmatpush.msra.mxu0 0.0
      %1418 = vmatpush.msra.mxu0 0.0
      %1419 = vmatpush.msra.mxu0 0.0
      %1420 = vmatpush.msra.mxu0 0.0
      %1421 = vmatpush.msra.mxu0 0.0
      %1422 = vmatpush.msra.mxu0 %v1198
      %1423 = vmatpush.msra.mxu0 %v1190
      %1424 = vmatpush.msra.mxu0 %v1182
      %1425 = vmatpush.msra.mxu0 %v1174
      %1426 = vmatpush.msra.mxu0 %v1166
      %1427 = vmatpush.msra.mxu0 %v1158
      %1428 = vmatpush.msra.mxu0 %v1150
      %1429 = vmatpush.msra.mxu0 %v1142
      %1430 = vmatpush.msra.mxu0 %v1134
      %1431 = vmatmul.f32.gmra.mxu0 %v1273
      %v1432 = vpop.f32.mrf.mxu0
      %v1433 = vadd.f32 %v954, %v1432
      %1434 = vdwg.mxu0
      %v1435 = vmax.f32 %v1293, 0.0
      %v1436 = vmax.f32 %v1313, 0.0
      %v1437 = vmax.f32 %v1333, 0.0
      %v1438 = vmax.f32 %v1353, 0.0
      %v1439 = vmax.f32 %v1373, 0.0
      %v1440 = vmax.f32 %v1393, 0.0
      %v1441 = vmax.f32 %v1413, 0.0
      %v1442 = vmax.f32 %v1433, 0.0
      %v1443 = vmul.f32 %v1435, %v441
      %v1444 = vmul.f32 %v1436, %v442
      %v1445 = vmul.f32 %v1437, %v443
      %v1446 = vmul.f32 %v1438, %v444
      %v1447 = vmul.f32 %v1439, %v445
      %v1448 = vmul.f32 %v1440, %v446
      %v1449 = vmul.f32 %v1441, %v447
      %v1450 = vmul.f32 %v1442, %v439
      %v1451 = vmul.f32 %v1435, %v491
      %v1452 = vmul.f32 %v1436, %v492
      %v1453 = vmul.f32 %v1437, %v493
      %v1454 = vmul.f32 %v1438, %v494
      %v1455 = vmul.f32 %v1439, %v495
      %v1456 = vmul.f32 %v1440, %v496
      %v1457 = vmul.f32 %v1441, %v497
      %v1458 = vmul.f32 %v1442, %v489
      %v1459 = vmul.f32 %v1435, %v533
      %v1460 = vmul.f32 %v1436, %v534
      %v1461 = vmul.f32 %v1437, %v535
      %v1462 = vmul.f32 %v1438, %v536
      %v1463 = vmul.f32 %v1439, %v537
      %v1464 = vmul.f32 %v1440, %v538
      %v1465 = vmul.f32 %v1441, %v539
      %v1466 = vmul.f32 %v1442, %v531
      %v1467 = vmul.f32 %v1435, %v559
      %v1468 = vmul.f32 %v1436, %v575
      %v1469 = vmul.f32 %v1437, %v576
      %v1470 = vmul.f32 %v1438, %v577
      %v1471 = vmul.f32 %v1439, %v578
      %v1472 = vmul.f32 %v1440, %v579
      %v1473 = vmul.f32 %v1441, %v580
      %v1474 = vmul.f32 %v1442, %v581
      %v1475 = vmul.f32 %v1435, %v601
      %v1476 = vmul.f32 %v1436, %v617
      %v1477 = vmul.f32 %v1437, %v618
      %v1478 = vmul.f32 %v1438, %v619
      %v1479 = vmul.f32 %v1439, %v620
      %v1480 = vmul.f32 %v1440, %v621
      %v1481 = vmul.f32 %v1441, %v622
      %v1482 = vmul.f32 %v1442, %v623
      %v1483 = vmul.f32 %v1435, %v643
      %v1484 = vmul.f32 %v1436, %v659
      %v1485 = vmul.f32 %v1437, %v660
      %v1486 = vmul.f32 %v1438, %v661
      %v1487 = vmul.f32 %v1439, %v662
      %v1488 = vmul.f32 %v1440, %v663
      %v1489 = vmul.f32 %v1441, %v664
      %v1490 = vmul.f32 %v1442, %v665
      %1499 = vrot.lane.b32.xlu0 %v1435, 127
      %v1500 = vpop.permute.xlu0 %1499
      %1501 = vrot.lane.b32.xlu0 %v1436, 127
      %v1502 = vpop.permute.xlu0 %1501
      %1503 = vrot.lane.b32.xlu0 %v1437, 127
      %v1504 = vpop.permute.xlu0 %1503
      %1505 = vrot.lane.b32.xlu0 %v1438, 127
      %v1506 = vpop.permute.xlu0 %1505
      %1507 = vrot.lane.b32.xlu0 %v1439, 127
      %v1508 = vpop.permute.xlu0 %1507
      %1509 = vrot.lane.b32.xlu0 %v1440, 127
      %v1510 = vpop.permute.xlu0 %1509
      %1511 = vrot.lane.b32.xlu0 %v1441, 127
      %v1512 = vpop.permute.xlu0 %1511
      %1513 = vrot.lane.b32.xlu0 %v1442, 127
      %v1514 = vpop.permute.xlu0 %1513
      %v1515 = vsel %vm532, %v694, %v1500
      %v1516 = vsel %vm532, %v1500, %v1502
      %v1517 = vsel %vm532, %v1502, %v1504
      %v1518 = vsel %vm532, %v1504, %v1506
      %v1519 = vsel %vm532, %v1506, %v1508
      %v1520 = vsel %vm532, %v1508, %v1510
      %v1521 = vsel %vm532, %v1510, %v1512
      %v1522 = vsel %vm532, %v1512, %v1514
      %1531 = vrot.lane.b32.xlu0 %v1451, 126
      %v1532 = vpop.permute.xlu0 %1531
      %1533 = vrot.lane.b32.xlu0 %v1452, 126
      %v1534 = vpop.permute.xlu0 %1533
      %1535 = vrot.lane.b32.xlu0 %v1453, 126
      %v1536 = vpop.permute.xlu0 %1535
      %1537 = vrot.lane.b32.xlu0 %v1454, 126
      %v1538 = vpop.permute.xlu0 %1537
      %1539 = vrot.lane.b32.xlu0 %v1455, 126
      %v1540 = vpop.permute.xlu0 %1539
      %1541 = vrot.lane.b32.xlu0 %v1456, 126
      %v1542 = vpop.permute.xlu0 %1541
      %1543 = vrot.lane.b32.xlu0 %v1457, 126
      %v1544 = vpop.permute.xlu0 %1543
      %1545 = vrot.lane.b32.xlu0 %v1458, 126
      %v1546 = vpop.permute.xlu0 %1545
      %v1547 = vsel %vm746, %v729, %v1532
      %v1548 = vsel %vm746, %v1532, %v1534
      %v1549 = vsel %vm746, %v1534, %v1536
      %v1550 = vsel %vm746, %v1536, %v1538
      %v1551 = vsel %vm746, %v1538, %v1540
      %v1552 = vsel %vm746, %v1540, %v1542
      %v1553 = vsel %vm746, %v1542, %v1544
      %v1554 = vsel %vm746, %v1544, %v1546
      %1563 = vrot.lane.b32.xlu0 %v1459, 96
      %v1564 = vpop.permute.xlu0 %1563
      %1565 = vrot.lane.b32.xlu0 %v1460, 96
      %v1566 = vpop.permute.xlu0 %1565
      %1567 = vrot.lane.b32.xlu0 %v1461, 96
      %v1568 = vpop.permute.xlu0 %1567
      %1569 = vrot.lane.b32.xlu0 %v1462, 96
      %v1570 = vpop.permute.xlu0 %1569
      %1571 = vrot.lane.b32.xlu0 %v1463, 96
      %v1572 = vpop.permute.xlu0 %1571
      %1573 = vrot.lane.b32.xlu0 %v1464, 96
      %v1574 = vpop.permute.xlu0 %1573
      %1575 = vrot.lane.b32.xlu0 %v1465, 96
      %v1576 = vpop.permute.xlu0 %1575
      %1577 = vrot.lane.b32.xlu0 %v1466, 96
      %v1578 = vpop.permute.xlu0 %1577
      %v1579 = vsel %vm782, %v765, %v1564
      %v1580 = vsel %vm782, %v1564, %v1566
      %v1581 = vsel %vm782, %v1566, %v1568
      %v1582 = vsel %vm782, %v1568, %v1570
      %v1583 = vsel %vm782, %v1570, %v1572
      %v1584 = vsel %vm782, %v1572, %v1574
      %v1585 = vsel %vm782, %v1574, %v1576
      %v1586 = vsel %vm782, %v1576, %v1578
      %1587 = vrot.lane.b32.xlu0 %v1435, 95
      %v1588 = vpop.permute.xlu0 %1587
      %1589 = vrot.lane.b32.xlu0 %v1436, 95
      %v1590 = vpop.permute.xlu0 %1589
      %1591 = vrot.lane.b32.xlu0 %v1437, 95
      %v1592 = vpop.permute.xlu0 %1591
      %1593 = vrot.lane.b32.xlu0 %v1438, 95
      %v1594 = vpop.permute.xlu0 %1593
      %1595 = vrot.lane.b32.xlu0 %v1439, 95
      %v1596 = vpop.permute.xlu0 %1595
      %1597 = vrot.lane.b32.xlu0 %v1440, 95
      %v1598 = vpop.permute.xlu0 %1597
      %1599 = vrot.lane.b32.xlu0 %v1441, 95
      %v1600 = vpop.permute.xlu0 %1599
      %1601 = vrot.lane.b32.xlu0 %v1442, 95
      %v1602 = vpop.permute.xlu0 %1601
      %v1603 = vsel %vm440, %v1588, %v1590
      %v1604 = vsel %vm440, %v1590, %v1592
      %v1605 = vsel %vm440, %v1592, %v1594
      %v1606 = vsel %vm440, %v1594, %v1596
      %v1607 = vsel %vm440, %v1596, %v1598
      %v1608 = vsel %vm440, %v1598, %v1600
      %v1609 = vsel %vm440, %v1600, %v1602
      %1618 = vrot.lane.b32.xlu0 %v1467, 94
      %v1619 = vpop.permute.xlu0 %1618
      %1620 = vrot.lane.b32.xlu0 %v1468, 94
      %v1621 = vpop.permute.xlu0 %1620
      %1622 = vrot.lane.b32.xlu0 %v1469, 94
      %v1623 = vpop.permute.xlu0 %1622
      %1624 = vrot.lane.b32.xlu0 %v1470, 94
      %v1625 = vpop.permute.xlu0 %1624
      %1626 = vrot.lane.b32.xlu0 %v1471, 94
      %v1627 = vpop.permute.xlu0 %1626
      %1628 = vrot.lane.b32.xlu0 %v1472, 94
      %v1629 = vpop.permute.xlu0 %1628
      %1630 = vrot.lane.b32.xlu0 %v1473, 94
      %v1631 = vpop.permute.xlu0 %1630
      %1632 = vrot.lane.b32.xlu0 %v1474, 94
      %v1633 = vpop.permute.xlu0 %1632
      %v1634 = vsel %vm841, %v1619, %v1621
      %v1635 = vsel %vm841, %v1621, %v1623
      %v1636 = vsel %vm841, %v1623, %v1625
      %v1637 = vsel %vm841, %v1625, %v1627
      %v1638 = vsel %vm841, %v1627, %v1629
      %v1639 = vsel %vm841, %v1629, %v1631
      %v1640 = vsel %vm841, %v1631, %v1633
      %v1641 = vsel %vm841, %v1633, %v840
      %1650 = vrot.lane.b32.xlu0 %v1475, 64
      %v1651 = vpop.permute.xlu0 %1650
      %1652 = vrot.lane.b32.xlu0 %v1476, 64
      %v1653 = vpop.permute.xlu0 %1652
      %1654 = vrot.lane.b32.xlu0 %v1477, 64
      %v1655 = vpop.permute.xlu0 %1654
      %1656 = vrot.lane.b32.xlu0 %v1478, 64
      %v1657 = vpop.permute.xlu0 %1656
      %1658 = vrot.lane.b32.xlu0 %v1479, 64
      %v1659 = vpop.permute.xlu0 %1658
      %1660 = vrot.lane.b32.xlu0 %v1480, 64
      %v1661 = vpop.permute.xlu0 %1660
      %1662 = vrot.lane.b32.xlu0 %v1481, 64
      %v1663 = vpop.permute.xlu0 %1662
      %1664 = vrot.lane.b32.xlu0 %v1482, 64
      %v1665 = vpop.permute.xlu0 %1664
      %v1666 = vsel %vm877, %v1651, %v1653
      %v1667 = vsel %vm877, %v1653, %v1655
      %v1668 = vsel %vm877, %v1655, %v1657
      %v1669 = vsel %vm877, %v1657, %v1659
      %v1670 = vsel %vm877, %v1659, %v1661
      %v1671 = vsel %vm877, %v1661, %v1663
      %v1672 = vsel %vm877, %v1663, %v1665
      %v1673 = vsel %vm877, %v1665, %v876
      %1674 = vrot.lane.b32.xlu0 %v1435, 63
      %v1675 = vpop.permute.xlu0 %1674
      %1676 = vrot.lane.b32.xlu0 %v1436, 63
      %v1677 = vpop.permute.xlu0 %1676
      %1678 = vrot.lane.b32.xlu0 %v1437, 63
      %v1679 = vpop.permute.xlu0 %1678
      %1680 = vrot.lane.b32.xlu0 %v1438, 63
      %v1681 = vpop.permute.xlu0 %1680
      %1682 = vrot.lane.b32.xlu0 %v1439, 63
      %v1683 = vpop.permute.xlu0 %1682
      %1684 = vrot.lane.b32.xlu0 %v1440, 63
      %v1685 = vpop.permute.xlu0 %1684
      %1686 = vrot.lane.b32.xlu0 %v1441, 63
      %v1687 = vpop.permute.xlu0 %1686
      %1688 = vrot.lane.b32.xlu0 %v1442, 63
      %v1689 = vpop.permute.xlu0 %1688
      %v1690 = vsel %vm904, %v1675, %v1677
      %v1691 = vsel %vm904, %v1677, %v1679
      %v1692 = vsel %vm904, %v1679, %v1681
      %v1693 = vsel %vm904, %v1681, %v1683
      %v1694 = vsel %vm904, %v1683, %v1685
      %v1695 = vsel %vm904, %v1685, %v1687
      %v1696 = vsel %vm904, %v1687, %v1689
      %v1697 = vsel %vm904, %v1689, %v903
      %1706 = vrot.lane.b32.xlu0 %v1483, 62
      %v1707 = vpop.permute.xlu0 %1706
      %1708 = vrot.lane.b32.xlu0 %v1484, 62
      %v1709 = vpop.permute.xlu0 %1708
      %1710 = vrot.lane.b32.xlu0 %v1485, 62
      %v1711 = vpop.permute.xlu0 %1710
      %1712 = vrot.lane.b32.xlu0 %v1486, 62
      %v1713 = vpop.permute.xlu0 %1712
      %1714 = vrot.lane.b32.xlu0 %v1487, 62
      %v1715 = vpop.permute.xlu0 %1714
      %1716 = vrot.lane.b32.xlu0 %v1488, 62
      %v1717 = vpop.permute.xlu0 %1716
      %1718 = vrot.lane.b32.xlu0 %v1489, 62
      %v1719 = vpop.permute.xlu0 %1718
      %1720 = vrot.lane.b32.xlu0 %v1490, 62
      %v1721 = vpop.permute.xlu0 %1720
      %v1722 = vsel %vm940, %v1707, %v1709
      %v1723 = vsel %vm940, %v1709, %v1711
      %v1724 = vsel %vm940, %v1711, %v1713
      %v1725 = vsel %vm940, %v1713, %v1715
      %v1726 = vsel %vm940, %v1715, %v1717
      %v1727 = vsel %vm940, %v1717, %v1719
      %v1728 = vsel %vm940, %v1719, %v1721
      %v1729 = vsel %vm940, %v1721, %v939
      %s1730 = scalar_lea.vmem %s1, 8
      %v1731 = vld [vmem:[%s1730] sm:$0xff]
      %s1732 = scalar_lea.vmem %s2, 8
      %v1733 = vld [vmem:[%s1732] sm:$0xff]
      %1735 = vset.pattern.permute.xlu0 0
      %1736 = vperm.xlu0 %1735, %v1733
      %v1737 = vpop.permute.xlu0 %1736
      %1747 = vrot.lane.b32.xlu0 %v1443, 33
      %v1748 = vpop.permute.xlu0 %1747
      %1749 = vrot.lane.b32.xlu0 %v1444, 33
      %v1750 = vpop.permute.xlu0 %1749
      %1751 = vrot.lane.b32.xlu0 %v1445, 33
      %v1752 = vpop.permute.xlu0 %1751
      %1753 = vrot.lane.b32.xlu0 %v1446, 33
      %v1754 = vpop.permute.xlu0 %1753
      %1755 = vrot.lane.b32.xlu0 %v1447, 33
      %v1756 = vpop.permute.xlu0 %1755
      %1757 = vrot.lane.b32.xlu0 %v1448, 33
      %v1758 = vpop.permute.xlu0 %1757
      %1759 = vrot.lane.b32.xlu0 %v1449, 33
      %v1760 = vpop.permute.xlu0 %1759
      %1761 = vrot.lane.b32.xlu0 %v1450, 33
      %v1762 = vpop.permute.xlu0 %1761
      %1763 = vrot.lane.b32.xlu0 %v1515, 33
      %v1764 = vpop.permute.xlu0 %1763
      %1765 = vrot.lane.b32.xlu0 %v1516, 33
      %v1766 = vpop.permute.xlu0 %1765
      %1767 = vrot.lane.b32.xlu0 %v1517, 33
      %v1768 = vpop.permute.xlu0 %1767
      %1769 = vrot.lane.b32.xlu0 %v1518, 33
      %v1770 = vpop.permute.xlu0 %1769
      %1771 = vrot.lane.b32.xlu0 %v1519, 33
      %v1772 = vpop.permute.xlu0 %1771
      %1773 = vrot.lane.b32.xlu0 %v1520, 33
      %v1774 = vpop.permute.xlu0 %1773
      %1775 = vrot.lane.b32.xlu0 %v1521, 33
      %v1776 = vpop.permute.xlu0 %1775
      %1777 = vrot.lane.b32.xlu0 %v1522, 33
      %v1778 = vpop.permute.xlu0 %1777
      %1779 = vrot.lane.b32.xlu0 %v1514, 33
      %v1780 = vpop.permute.xlu0 %1779
      %1781 = vrot.lane.b32.xlu0 %v1547, 33
      %v1782 = vpop.permute.xlu0 %1781
      %1783 = vrot.lane.b32.xlu0 %v1548, 33
      %v1784 = vpop.permute.xlu0 %1783
      %1785 = vrot.lane.b32.xlu0 %v1549, 33
      %v1786 = vpop.permute.xlu0 %1785
      %1787 = vrot.lane.b32.xlu0 %v1550, 33
      %v1788 = vpop.permute.xlu0 %1787
      %1789 = vrot.lane.b32.xlu0 %v1551, 33
      %v1790 = vpop.permute.xlu0 %1789
      %1791 = vrot.lane.b32.xlu0 %v1552, 33
      %v1792 = vpop.permute.xlu0 %1791
      %1793 = vrot.lane.b32.xlu0 %v1553, 33
      %v1794 = vpop.permute.xlu0 %1793
      %1795 = vrot.lane.b32.xlu0 %v1554, 33
      %v1796 = vpop.permute.xlu0 %1795
      %1797 = vrot.lane.b32.xlu0 %v1546, 33
      %v1798 = vpop.permute.xlu0 %1797
      %1799 = vrot.lane.b32.xlu0 %v1579, 33
      %v1800 = vpop.permute.xlu0 %1799
      %1801 = vrot.lane.b32.xlu0 %v1580, 33
      %v1802 = vpop.permute.xlu0 %1801
      %1803 = vrot.lane.b32.xlu0 %v1581, 33
      %v1804 = vpop.permute.xlu0 %1803
      %1805 = vrot.lane.b32.xlu0 %v1582, 33
      %v1806 = vpop.permute.xlu0 %1805
      %1807 = vrot.lane.b32.xlu0 %v1583, 33
      %v1808 = vpop.permute.xlu0 %1807
      %1809 = vrot.lane.b32.xlu0 %v1584, 33
      %v1810 = vpop.permute.xlu0 %1809
      %1811 = vrot.lane.b32.xlu0 %v1585, 33
      %v1812 = vpop.permute.xlu0 %1811
      %1813 = vrot.lane.b32.xlu0 %v1586, 33
      %v1814 = vpop.permute.xlu0 %1813
      %1815 = vrot.lane.b32.xlu0 %v1578, 33
      %v1816 = vpop.permute.xlu0 %1815
      %1817 = vrot.lane.b32.xlu0 %v1588, 33
      %v1818 = vpop.permute.xlu0 %1817
      %1819 = vrot.lane.b32.xlu0 %v1603, 33
      %v1820 = vpop.permute.xlu0 %1819
      %1821 = vrot.lane.b32.xlu0 %v1604, 33
      %v1822 = vpop.permute.xlu0 %1821
      %1823 = vrot.lane.b32.xlu0 %v1605, 33
      %v1824 = vpop.permute.xlu0 %1823
      %1825 = vrot.lane.b32.xlu0 %v1606, 33
      %v1826 = vpop.permute.xlu0 %1825
      %1827 = vrot.lane.b32.xlu0 %v1607, 33
      %v1828 = vpop.permute.xlu0 %1827
      %1829 = vrot.lane.b32.xlu0 %v1608, 33
      %v1830 = vpop.permute.xlu0 %1829
      %1831 = vrot.lane.b32.xlu0 %v1609, 33
      %v1832 = vpop.permute.xlu0 %1831
      %1833 = vrot.lane.b32.xlu0 %v1602, 33
      %v1834 = vpop.permute.xlu0 %1833
      %1835 = vrot.lane.b32.xlu0 %v1619, 33
      %v1836 = vpop.permute.xlu0 %1835
      %1837 = vrot.lane.b32.xlu0 %v1634, 33
      %v1838 = vpop.permute.xlu0 %1837
      %1839 = vrot.lane.b32.xlu0 %v1635, 33
      %v1840 = vpop.permute.xlu0 %1839
      %1841 = vrot.lane.b32.xlu0 %v1636, 33
      %v1842 = vpop.permute.xlu0 %1841
      %1843 = vrot.lane.b32.xlu0 %v1637, 33
      %v1844 = vpop.permute.xlu0 %1843
      %1845 = vrot.lane.b32.xlu0 %v1638, 33
      %v1846 = vpop.permute.xlu0 %1845
      %1847 = vrot.lane.b32.xlu0 %v1639, 33
      %v1848 = vpop.permute.xlu0 %1847
      %1849 = vrot.lane.b32.xlu0 %v1640, 33
      %v1850 = vpop.permute.xlu0 %1849
      %1851 = vrot.lane.b32.xlu0 %v1641, 33
      %v1852 = vpop.permute.xlu0 %1851
      %1853 = vrot.lane.b32.xlu0 %v1651, 33
      %v1854 = vpop.permute.xlu0 %1853
      %1855 = vrot.lane.b32.xlu0 %v1666, 33
      %v1856 = vpop.permute.xlu0 %1855
      %1857 = vrot.lane.b32.xlu0 %v1667, 33
      %v1858 = vpop.permute.xlu0 %1857
      %1859 = vrot.lane.b32.xlu0 %v1668, 33
      %v1860 = vpop.permute.xlu0 %1859
      %1861 = vrot.lane.b32.xlu0 %v1669, 33
      %v1862 = vpop.permute.xlu0 %1861
      %1863 = vrot.lane.b32.xlu0 %v1670, 33
      %v1864 = vpop.permute.xlu0 %1863
      %1865 = vrot.lane.b32.xlu0 %v1671, 33
      %v1866 = vpop.permute.xlu0 %1865
      %1867 = vrot.lane.b32.xlu0 %v1672, 33
      %v1868 = vpop.permute.xlu0 %1867
      %1869 = vrot.lane.b32.xlu0 %v1673, 33
      %v1870 = vpop.permute.xlu0 %1869
      %1871 = vrot.lane.b32.xlu0 %v1675, 33
      %v1872 = vpop.permute.xlu0 %1871
      %1873 = vrot.lane.b32.xlu0 %v1690, 33
      %v1874 = vpop.permute.xlu0 %1873
      %1875 = vrot.lane.b32.xlu0 %v1691, 33
      %v1876 = vpop.permute.xlu0 %1875
      %1877 = vrot.lane.b32.xlu0 %v1692, 33
      %v1878 = vpop.permute.xlu0 %1877
      %1879 = vrot.lane.b32.xlu0 %v1693, 33
      %v1880 = vpop.permute.xlu0 %1879
      %1881 = vrot.lane.b32.xlu0 %v1694, 33
      %v1882 = vpop.permute.xlu0 %1881
      %1883 = vrot.lane.b32.xlu0 %v1695, 33
      %v1884 = vpop.permute.xlu0 %1883
      %1885 = vrot.lane.b32.xlu0 %v1696, 33
      %v1886 = vpop.permute.xlu0 %1885
      %1887 = vrot.lane.b32.xlu0 %v1697, 33
      %v1888 = vpop.permute.xlu0 %1887
      %1889 = vrot.lane.b32.xlu0 %v1707, 33
      %v1890 = vpop.permute.xlu0 %1889
      %1891 = vrot.lane.b32.xlu0 %v1722, 33
      %v1892 = vpop.permute.xlu0 %1891
      %1893 = vrot.lane.b32.xlu0 %v1723, 33
      %v1894 = vpop.permute.xlu0 %1893
      %1895 = vrot.lane.b32.xlu0 %v1724, 33
      %v1896 = vpop.permute.xlu0 %1895
      %1897 = vrot.lane.b32.xlu0 %v1725, 33
      %v1898 = vpop.permute.xlu0 %1897
      %1899 = vrot.lane.b32.xlu0 %v1726, 33
      %v1900 = vpop.permute.xlu0 %1899
      %1901 = vrot.lane.b32.xlu0 %v1727, 33
      %v1902 = vpop.permute.xlu0 %1901
      %1903 = vrot.lane.b32.xlu0 %v1728, 33
      %v1904 = vpop.permute.xlu0 %1903
      %1905 = vrot.lane.b32.xlu0 %v1729, 33
      %v1906 = vpop.permute.xlu0 %1905
      %v1907 = vsel %vm658, %v966, %v1748
      %v1908 = vsel %vm658, %v1748, %v1750
      %v1909 = vsel %vm658, %v1750, %v1752
      %v1910 = vsel %vm658, %v1752, %v1754
      %v1911 = vsel %vm658, %v1754, %v1756
      %v1912 = vsel %vm658, %v1756, %v1758
      %v1913 = vsel %vm658, %v1758, %v1760
      %v1914 = vsel %vm658, %v1760, %v1762
      %v1915 = vsel %vm658, %v1764, %v1766
      %v1916 = vsel %vm658, %v1766, %v1768
      %v1917 = vsel %vm658, %v1768, %v1770
      %v1918 = vsel %vm658, %v1770, %v1772
      %v1919 = vsel %vm658, %v1772, %v1774
      %v1920 = vsel %vm658, %v1774, %v1776
      %v1921 = vsel %vm658, %v1776, %v1778
      %v1922 = vsel %vm658, %v1778, %v1780
      %v1923 = vsel %vm658, %v1782, %v1784
      %v1924 = vsel %vm658, %v1784, %v1786
      %v1925 = vsel %vm658, %v1786, %v1788
      %v1926 = vsel %vm658, %v1788, %v1790
      %v1927 = vsel %vm658, %v1790, %v1792
      %v1928 = vsel %vm658, %v1792, %v1794
      %v1929 = vsel %vm658, %v1794, %v1796
      %v1930 = vsel %vm658, %v1796, %v1798
      %v1931 = vsel %vm658, %v1800, %v1802
      %v1932 = vsel %vm658, %v1802, %v1804
      %v1933 = vsel %vm658, %v1804, %v1806
      %v1934 = vsel %vm658, %v1806, %v1808
      %v1935 = vsel %vm658, %v1808, %v1810
      %v1936 = vsel %vm658, %v1810, %v1812
      %v1937 = vsel %vm658, %v1812, %v1814
      %v1938 = vsel %vm658, %v1814, %v1816
      %v1939 = vsel %vm658, %v1818, %v1820
      %v1940 = vsel %vm658, %v1820, %v1822
      %v1941 = vsel %vm658, %v1822, %v1824
      %v1942 = vsel %vm658, %v1824, %v1826
      %v1943 = vsel %vm658, %v1826, %v1828
      %v1944 = vsel %vm658, %v1828, %v1830
      %v1945 = vsel %vm658, %v1830, %v1832
      %v1946 = vsel %vm658, %v1832, %v1834
      %v1947 = vsel %vm658, %v1836, %v1838
      %v1948 = vsel %vm658, %v1838, %v1840
      %v1949 = vsel %vm658, %v1840, %v1842
      %v1950 = vsel %vm658, %v1842, %v1844
      %v1951 = vsel %vm658, %v1844, %v1846
      %v1952 = vsel %vm658, %v1846, %v1848
      %v1953 = vsel %vm658, %v1848, %v1850
      %v1954 = vsel %vm658, %v1850, %v1852
      %v1955 = vsel %vm658, %v1854, %v1856
      %v1956 = vsel %vm658, %v1856, %v1858
      %v1957 = vsel %vm658, %v1858, %v1860
      %v1958 = vsel %vm658, %v1860, %v1862
      %v1959 = vsel %vm658, %v1862, %v1864
      %v1960 = vsel %vm658, %v1864, %v1866
      %v1961 = vsel %vm658, %v1866, %v1868
      %v1962 = vsel %vm658, %v1868, %v1870
      %v1963 = vsel %vm658, %v1872, %v1874
      %v1964 = vsel %vm658, %v1874, %v1876
      %v1965 = vsel %vm658, %v1876, %v1878
      %v1966 = vsel %vm658, %v1878, %v1880
      %v1967 = vsel %vm658, %v1880, %v1882
      %v1968 = vsel %vm658, %v1882, %v1884
      %v1969 = vsel %vm658, %v1884, %v1886
      %v1970 = vsel %vm658, %v1886, %v1888
      %v1971 = vsel %vm658, %v1890, %v1892
      %v1972 = vsel %vm658, %v1892, %v1894
      %v1973 = vsel %vm658, %v1894, %v1896
      %v1974 = vsel %vm658, %v1896, %v1898
      %v1975 = vsel %vm658, %v1898, %v1900
      %v1976 = vsel %vm658, %v1900, %v1902
      %v1977 = vsel %vm658, %v1902, %v1904
      %v1978 = vsel %vm658, %v1904, %v1906
      %v2052 = vsel %vm1271, %v1731, 0
      %2054 = vmatpush.msra.mxu0 0.0
      %2055 = vmatpush.msra.mxu0 0.0
      %2056 = vmatpush.msra.mxu0 0.0
      %2057 = vmatpush.msra.mxu0 0.0
      %2058 = vmatpush.msra.mxu0 0.0
      %2059 = vmatpush.msra.mxu0 0.0
      %2060 = vmatpush.msra.mxu0 0.0
      %2061 = vmatpush.msra.mxu0 %v1971
      %2062 = vmatpush.msra.mxu0 %v1963
      %2063 = vmatpush.msra.mxu0 %v1955
      %2064 = vmatpush.msra.mxu0 %v1947
      %2065 = vmatpush.msra.mxu0 %v1939
      %2066 = vmatpush.msra.mxu0 %v1931
      %2067 = vmatpush.msra.mxu0 %v1923
      %2068 = vmatpush.msra.mxu0 %v1915
      %2069 = vmatpush.msra.mxu0 %v1907
      %2070 = vmatmul.f32.gmra.mxu0 %v2052
      %v2071 = vpop.f32.mrf.mxu0
      %v2072 = vadd.f32 %v1737, %v2071
      %2073 = vdwg.mxu0
      %2074 = vmatpush.msra.mxu0 0.0
      %2075 = vmatpush.msra.mxu0 0.0
      %2076 = vmatpush.msra.mxu0 0.0
      %2077 = vmatpush.msra.mxu0 0.0
      %2078 = vmatpush.msra.mxu0 0.0
      %2079 = vmatpush.msra.mxu0 0.0
      %2080 = vmatpush.msra.mxu0 0.0
      %2081 = vmatpush.msra.mxu0 %v1972
      %2082 = vmatpush.msra.mxu0 %v1964
      %2083 = vmatpush.msra.mxu0 %v1956
      %2084 = vmatpush.msra.mxu0 %v1948
      %2085 = vmatpush.msra.mxu0 %v1940
      %2086 = vmatpush.msra.mxu0 %v1932
      %2087 = vmatpush.msra.mxu0 %v1924
      %2088 = vmatpush.msra.mxu0 %v1916
      %2089 = vmatpush.msra.mxu0 %v1908
      %2090 = vmatmul.f32.gmra.mxu0 %v2052
      %v2091 = vpop.f32.mrf.mxu0
      %v2092 = vadd.f32 %v1737, %v2091
      %2093 = vdwg.mxu0
      %2094 = vmatpush.msra.mxu0 0.0
      %2095 = vmatpush.msra.mxu0 0.0
      %2096 = vmatpush.msra.mxu0 0.0
      %2097 = vmatpush.msra.mxu0 0.0
      %2098 = vmatpush.msra.mxu0 0.0
      %2099 = vmatpush.msra.mxu0 0.0
      %2100 = vmatpush.msra.mxu0 0.0
      %2101 = vmatpush.msra.mxu0 %v1973
      %2102 = vmatpush.msra.mxu0 %v1965
      %2103 = vmatpush.msra.mxu0 %v1957
      %2104 = vmatpush.msra.mxu0 %v1949
      %2105 = vmatpush.msra.mxu0 %v1941
      %2106 = vmatpush.msra.mxu0 %v1933
      %2107 = vmatpush.msra.mxu0 %v1925
      %2108 = vmatpush.msra.mxu0 %v1917
      %2109 = vmatpush.msra.mxu0 %v1909
      %2110 = vmatmul.f32.gmra.mxu0 %v2052
      %v2111 = vpop.f32.mrf.mxu0
      %v2112 = vadd.f32 %v1737, %v2111
      %2113 = vdwg.mxu0
      %2114 = vmatpush.msra.mxu0 0.0
      %2115 = vmatpush.msra.mxu0 0.0
      %2116 = vmatpush.msra.mxu0 0.0
      %2117 = vmatpush.msra.mxu0 0.0
      %2118 = vmatpush.msra.mxu0 0.0
      %2119 = vmatpush.msra.mxu0 0.0
      %2120 = vmatpush.msra.mxu0 0.0
      %2121 = vmatpush.msra.mxu0 %v1974
      %2122 = vmatpush.msra.mxu0 %v1966
      %2123 = vmatpush.msra.mxu0 %v1958
      %2124 = vmatpush.msra.mxu0 %v1950
      %2125 = vmatpush.msra.mxu0 %v1942
      %2126 = vmatpush.msra.mxu0 %v1934
      %2127 = vmatpush.msra.mxu0 %v1926
      %2128 = vmatpush.msra.mxu0 %v1918
      %2129 = vmatpush.msra.mxu0 %v1910
      %2130 = vmatmul.f32.gmra.mxu0 %v2052
      %v2131 = vpop.f32.mrf.mxu0
      %v2132 = vadd.f32 %v1737, %v2131
      %2133 = vdwg.mxu0
      %2134 = vmatpush.msra.mxu0 0.0
      %2135 = vmatpush.msra.mxu0 0.0
      %2136 = vmatpush.msra.mxu0 0.0
      %2137 = vmatpush.msra.mxu0 0.0
      %2138 = vmatpush.msra.mxu0 0.0
      %2139 = vmatpush.msra.mxu0 0.0
      %2140 = vmatpush.msra.mxu0 0.0
      %2141 = vmatpush.msra.mxu0 %v1975
      %2142 = vmatpush.msra.mxu0 %v1967
      %2143 = vmatpush.msra.mxu0 %v1959
      %2144 = vmatpush.msra.mxu0 %v1951
      %2145 = vmatpush.msra.mxu0 %v1943
      %2146 = vmatpush.msra.mxu0 %v1935
      %2147 = vmatpush.msra.mxu0 %v1927
      %2148 = vmatpush.msra.mxu0 %v1919
      %2149 = vmatpush.msra.mxu0 %v1911
      %2150 = vmatmul.f32.gmra.mxu0 %v2052
      %v2151 = vpop.f32.mrf.mxu0
      %v2152 = vadd.f32 %v1737, %v2151
      %2153 = vdwg.mxu0
      %2154 = vmatpush.msra.mxu0 0.0
      %2155 = vmatpush.msra.mxu0 0.0
      %2156 = vmatpush.msra.mxu0 0.0
      %2157 = vmatpush.msra.mxu0 0.0
      %2158 = vmatpush.msra.mxu0 0.0
      %2159 = vmatpush.msra.mxu0 0.0
      %2160 = vmatpush.msra.mxu0 0.0
      %2161 = vmatpush.msra.mxu0 %v1976
      %2162 = vmatpush.msra.mxu0 %v1968
      %2163 = vmatpush.msra.mxu0 %v1960
      %2164 = vmatpush.msra.mxu0 %v1952
      %2165 = vmatpush.msra.mxu0 %v1944
      %2166 = vmatpush.msra.mxu0 %v1936
      %2167 = vmatpush.msra.mxu0 %v1928
      %2168 = vmatpush.msra.mxu0 %v1920
      %2169 = vmatpush.msra.mxu0 %v1912
      %2170 = vmatmul.f32.gmra.mxu0 %v2052
      %v2171 = vpop.f32.mrf.mxu0
      %v2172 = vadd.f32 %v1737, %v2171
      %2173 = vdwg.mxu0
      %2174 = vmatpush.msra.mxu0 0.0
      %2175 = vmatpush.msra.mxu0 0.0
      %2176 = vmatpush.msra.mxu0 0.0
      %2177 = vmatpush.msra.mxu0 0.0
      %2178 = vmatpush.msra.mxu0 0.0
      %2179 = vmatpush.msra.mxu0 0.0
      %2180 = vmatpush.msra.mxu0 0.0
      %2181 = vmatpush.msra.mxu0 %v1977
      %2182 = vmatpush.msra.mxu0 %v1969
      %2183 = vmatpush.msra.mxu0 %v1961
      %2184 = vmatpush.msra.mxu0 %v1953
      %2185 = vmatpush.msra.mxu0 %v1945
      %2186 = vmatpush.msra.mxu0 %v1937
      %2187 = vmatpush.msra.mxu0 %v1929
      %2188 = vmatpush.msra.mxu0 %v1921
      %2189 = vmatpush.msra.mxu0 %v1913
      %2190 = vmatmul.f32.gmra.mxu0 %v2052
      %v2191 = vpop.f32.mrf.mxu0
      %v2192 = vadd.f32 %v1737, %v2191
      %2193 = vdwg.mxu0
      %2194 = vmatpush.msra.mxu0 0.0
      %2195 = vmatpush.msra.mxu0 0.0
      %2196 = vmatpush.msra.mxu0 0.0
      %2197 = vmatpush.msra.mxu0 0.0
      %2198 = vmatpush.msra.mxu0 0.0
      %2199 = vmatpush.msra.mxu0 0.0
      %2200 = vmatpush.msra.mxu0 0.0
      %2201 = vmatpush.msra.mxu0 %v1978
      %2202 = vmatpush.msra.mxu0 %v1970
      %2203 = vmatpush.msra.mxu0 %v1962
      %2204 = vmatpush.msra.mxu0 %v1954
      %2205 = vmatpush.msra.mxu0 %v1946
      %2206 = vmatpush.msra.mxu0 %v1938
      %2207 = vmatpush.msra.mxu0 %v1930
      %2208 = vmatpush.msra.mxu0 %v1922
      %2209 = vmatpush.msra.mxu0 %v1914
      %2210 = vmatmul.f32.gmra.mxu0 %v2052
      %v2211 = vpop.f32.mrf.mxu0
      %v2212 = vadd.f32 %v1737, %v2211
      %2213 = vdwg.mxu0
      %v2214 = vmax.f32 %v2072, 0.0
      %v2215 = vmax.f32 %v2092, 0.0
      %v2216 = vmax.f32 %v2112, 0.0
      %v2217 = vmax.f32 %v2132, 0.0
      %v2218 = vmax.f32 %v2152, 0.0
      %v2219 = vmax.f32 %v2172, 0.0
      %v2220 = vmax.f32 %v2192, 0.0
      %v2221 = vmax.f32 %v2212, 0.0
      %v2222 = vmul.f32 %v2214, %v441
      %v2223 = vmul.f32 %v2215, %v442
      %v2224 = vmul.f32 %v2216, %v443
      %v2225 = vmul.f32 %v2217, %v444
      %v2226 = vmul.f32 %v2218, %v445
      %v2227 = vmul.f32 %v2219, %v446
      %v2228 = vmul.f32 %v2220, %v447
      %v2229 = vmul.f32 %v2221, %v439
      %v2230 = vmul.f32 %v2214, %v491
      %v2231 = vmul.f32 %v2215, %v492
      %v2232 = vmul.f32 %v2216, %v493
      %v2233 = vmul.f32 %v2217, %v494
      %v2234 = vmul.f32 %v2218, %v495
      %v2235 = vmul.f32 %v2219, %v496
      %v2236 = vmul.f32 %v2220, %v497
      %v2237 = vmul.f32 %v2221, %v489
      %v2238 = vmul.f32 %v2214, %v533
      %v2239 = vmul.f32 %v2215, %v534
      %v2240 = vmul.f32 %v2216, %v535
      %v2241 = vmul.f32 %v2217, %v536
      %v2242 = vmul.f32 %v2218, %v537
      %v2243 = vmul.f32 %v2219, %v538
      %v2244 = vmul.f32 %v2220, %v539
      %v2245 = vmul.f32 %v2221, %v531
      %v2246 = vmul.f32 %v2214, %v559
      %v2247 = vmul.f32 %v2215, %v575
      %v2248 = vmul.f32 %v2216, %v576
      %v2249 = vmul.f32 %v2217, %v577
      %v2250 = vmul.f32 %v2218, %v578
      %v2251 = vmul.f32 %v2219, %v579
      %v2252 = vmul.f32 %v2220, %v580
      %v2253 = vmul.f32 %v2221, %v581
      %v2254 = vmul.f32 %v2214, %v601
      %v2255 = vmul.f32 %v2215, %v617
      %v2256 = vmul.f32 %v2216, %v618
      %v2257 = vmul.f32 %v2217, %v619
      %v2258 = vmul.f32 %v2218, %v620
      %v2259 = vmul.f32 %v2219, %v621
      %v2260 = vmul.f32 %v2220, %v622
      %v2261 = vmul.f32 %v2221, %v623
      %v2262 = vmul.f32 %v2214, %v643
      %v2263 = vmul.f32 %v2215, %v659
      %v2264 = vmul.f32 %v2216, %v660
      %v2265 = vmul.f32 %v2217, %v661
      %v2266 = vmul.f32 %v2218, %v662
      %v2267 = vmul.f32 %v2219, %v663
      %v2268 = vmul.f32 %v2220, %v664
      %v2269 = vmul.f32 %v2221, %v665
      %2278 = vrot.lane.b32.xlu0 %v2214, 127
      %v2279 = vpop.permute.xlu0 %2278
      %2280 = vrot.lane.b32.xlu0 %v2215, 127
      %v2281 = vpop.permute.xlu0 %2280
      %2282 = vrot.lane.b32.xlu0 %v2216, 127
      %v2283 = vpop.permute.xlu0 %2282
      %2284 = vrot.lane.b32.xlu0 %v2217, 127
      %v2285 = vpop.permute.xlu0 %2284
      %2286 = vrot.lane.b32.xlu0 %v2218, 127
      %v2287 = vpop.permute.xlu0 %2286
      %2288 = vrot.lane.b32.xlu0 %v2219, 127
      %v2289 = vpop.permute.xlu0 %2288
      %2290 = vrot.lane.b32.xlu0 %v2220, 127
      %v2291 = vpop.permute.xlu0 %2290
      %2292 = vrot.lane.b32.xlu0 %v2221, 127
      %v2293 = vpop.permute.xlu0 %2292
      %v2294 = vsel %vm532, %v694, %v2279
      %v2295 = vsel %vm532, %v2279, %v2281
      %v2296 = vsel %vm532, %v2281, %v2283
      %v2297 = vsel %vm532, %v2283, %v2285
      %v2298 = vsel %vm532, %v2285, %v2287
      %v2299 = vsel %vm532, %v2287, %v2289
      %v2300 = vsel %vm532, %v2289, %v2291
      %v2301 = vsel %vm532, %v2291, %v2293
      %2310 = vrot.lane.b32.xlu0 %v2230, 126
      %v2311 = vpop.permute.xlu0 %2310
      %2312 = vrot.lane.b32.xlu0 %v2231, 126
      %v2313 = vpop.permute.xlu0 %2312
      %2314 = vrot.lane.b32.xlu0 %v2232, 126
      %v2315 = vpop.permute.xlu0 %2314
      %2316 = vrot.lane.b32.xlu0 %v2233, 126
      %v2317 = vpop.permute.xlu0 %2316
      %2318 = vrot.lane.b32.xlu0 %v2234, 126
      %v2319 = vpop.permute.xlu0 %2318
      %2320 = vrot.lane.b32.xlu0 %v2235, 126
      %v2321 = vpop.permute.xlu0 %2320
      %2322 = vrot.lane.b32.xlu0 %v2236, 126
      %v2323 = vpop.permute.xlu0 %2322
      %2324 = vrot.lane.b32.xlu0 %v2237, 126
      %v2325 = vpop.permute.xlu0 %2324
      %v2326 = vsel %vm746, %v729, %v2311
      %v2327 = vsel %vm746, %v2311, %v2313
      %v2328 = vsel %vm746, %v2313, %v2315
      %v2329 = vsel %vm746, %v2315, %v2317
      %v2330 = vsel %vm746, %v2317, %v2319
      %v2331 = vsel %vm746, %v2319, %v2321
      %v2332 = vsel %vm746, %v2321, %v2323
      %v2333 = vsel %vm746, %v2323, %v2325
      %2342 = vrot.lane.b32.xlu0 %v2238, 96
      %v2343 = vpop.permute.xlu0 %2342
      %2344 = vrot.lane.b32.xlu0 %v2239, 96
      %v2345 = vpop.permute.xlu0 %2344
      %2346 = vrot.lane.b32.xlu0 %v2240, 96
      %v2347 = vpop.permute.xlu0 %2346
      %2348 = vrot.lane.b32.xlu0 %v2241, 96
      %v2349 = vpop.permute.xlu0 %2348
      %2350 = vrot.lane.b32.xlu0 %v2242, 96
      %v2351 = vpop.permute.xlu0 %2350
      %2352 = vrot.lane.b32.xlu0 %v2243, 96
      %v2353 = vpop.permute.xlu0 %2352
      %2354 = vrot.lane.b32.xlu0 %v2244, 96
      %v2355 = vpop.permute.xlu0 %2354
      %2356 = vrot.lane.b32.xlu0 %v2245, 96
      %v2357 = vpop.permute.xlu0 %2356
      %v2358 = vsel %vm782, %v765, %v2343
      %v2359 = vsel %vm782, %v2343, %v2345
      %v2360 = vsel %vm782, %v2345, %v2347
      %v2361 = vsel %vm782, %v2347, %v2349
      %v2362 = vsel %vm782, %v2349, %v2351
      %v2363 = vsel %vm782, %v2351, %v2353
      %v2364 = vsel %vm782, %v2353, %v2355
      %v2365 = vsel %vm782, %v2355, %v2357
      %2366 = vrot.lane.b32.xlu0 %v2214, 95
      %v2367 = vpop.permute.xlu0 %2366
      %2368 = vrot.lane.b32.xlu0 %v2215, 95
      %v2369 = vpop.permute.xlu0 %2368
      %2370 = vrot.lane.b32.xlu0 %v2216, 95
      %v2371 = vpop.permute.xlu0 %2370
      %2372 = vrot.lane.b32.xlu0 %v2217, 95
      %v2373 = vpop.permute.xlu0 %2372
      %2374 = vrot.lane.b32.xlu0 %v2218, 95
      %v2375 = vpop.permute.xlu0 %2374
      %2376 = vrot.lane.b32.xlu0 %v2219, 95
      %v2377 = vpop.permute.xlu0 %2376
      %2378 = vrot.lane.b32.xlu0 %v2220, 95
      %v2379 = vpop.permute.xlu0 %2378
      %2380 = vrot.lane.b32.xlu0 %v2221, 95
      %v2381 = vpop.permute.xlu0 %2380
      %v2382 = vsel %vm440, %v2367, %v2369
      %v2383 = vsel %vm440, %v2369, %v2371
      %v2384 = vsel %vm440, %v2371, %v2373
      %v2385 = vsel %vm440, %v2373, %v2375
      %v2386 = vsel %vm440, %v2375, %v2377
      %v2387 = vsel %vm440, %v2377, %v2379
      %v2388 = vsel %vm440, %v2379, %v2381
      %2397 = vrot.lane.b32.xlu0 %v2246, 94
      %v2398 = vpop.permute.xlu0 %2397
      %2399 = vrot.lane.b32.xlu0 %v2247, 94
      %v2400 = vpop.permute.xlu0 %2399
      %2401 = vrot.lane.b32.xlu0 %v2248, 94
      %v2402 = vpop.permute.xlu0 %2401
      %2403 = vrot.lane.b32.xlu0 %v2249, 94
      %v2404 = vpop.permute.xlu0 %2403
      %2405 = vrot.lane.b32.xlu0 %v2250, 94
      %v2406 = vpop.permute.xlu0 %2405
      %2407 = vrot.lane.b32.xlu0 %v2251, 94
      %v2408 = vpop.permute.xlu0 %2407
      %2409 = vrot.lane.b32.xlu0 %v2252, 94
      %v2410 = vpop.permute.xlu0 %2409
      %2411 = vrot.lane.b32.xlu0 %v2253, 94
      %v2412 = vpop.permute.xlu0 %2411
      %v2413 = vsel %vm841, %v2398, %v2400
      %v2414 = vsel %vm841, %v2400, %v2402
      %v2415 = vsel %vm841, %v2402, %v2404
      %v2416 = vsel %vm841, %v2404, %v2406
      %v2417 = vsel %vm841, %v2406, %v2408
      %v2418 = vsel %vm841, %v2408, %v2410
      %v2419 = vsel %vm841, %v2410, %v2412
      %v2420 = vsel %vm841, %v2412, %v840
      %2429 = vrot.lane.b32.xlu0 %v2254, 64
      %v2430 = vpop.permute.xlu0 %2429
      %2431 = vrot.lane.b32.xlu0 %v2255, 64
      %v2432 = vpop.permute.xlu0 %2431
      %2433 = vrot.lane.b32.xlu0 %v2256, 64
      %v2434 = vpop.permute.xlu0 %2433
      %2435 = vrot.lane.b32.xlu0 %v2257, 64
      %v2436 = vpop.permute.xlu0 %2435
      %2437 = vrot.lane.b32.xlu0 %v2258, 64
      %v2438 = vpop.permute.xlu0 %2437
      %2439 = vrot.lane.b32.xlu0 %v2259, 64
      %v2440 = vpop.permute.xlu0 %2439
      %2441 = vrot.lane.b32.xlu0 %v2260, 64
      %v2442 = vpop.permute.xlu0 %2441
      %2443 = vrot.lane.b32.xlu0 %v2261, 64
      %v2444 = vpop.permute.xlu0 %2443
      %v2445 = vsel %vm877, %v2430, %v2432
      %v2446 = vsel %vm877, %v2432, %v2434
      %v2447 = vsel %vm877, %v2434, %v2436
      %v2448 = vsel %vm877, %v2436, %v2438
      %v2449 = vsel %vm877, %v2438, %v2440
      %v2450 = vsel %vm877, %v2440, %v2442
      %v2451 = vsel %vm877, %v2442, %v2444
      %v2452 = vsel %vm877, %v2444, %v876
      %2453 = vrot.lane.b32.xlu0 %v2214, 63
      %v2454 = vpop.permute.xlu0 %2453
      %2455 = vrot.lane.b32.xlu0 %v2215, 63
      %v2456 = vpop.permute.xlu0 %2455
      %2457 = vrot.lane.b32.xlu0 %v2216, 63
      %v2458 = vpop.permute.xlu0 %2457
      %2459 = vrot.lane.b32.xlu0 %v2217, 63
      %v2460 = vpop.permute.xlu0 %2459
      %2461 = vrot.lane.b32.xlu0 %v2218, 63
      %v2462 = vpop.permute.xlu0 %2461
      %2463 = vrot.lane.b32.xlu0 %v2219, 63
      %v2464 = vpop.permute.xlu0 %2463
      %2465 = vrot.lane.b32.xlu0 %v2220, 63
      %v2466 = vpop.permute.xlu0 %2465
      %2467 = vrot.lane.b32.xlu0 %v2221, 63
      %v2468 = vpop.permute.xlu0 %2467
      %v2469 = vsel %vm904, %v2454, %v2456
      %v2470 = vsel %vm904, %v2456, %v2458
      %v2471 = vsel %vm904, %v2458, %v2460
      %v2472 = vsel %vm904, %v2460, %v2462
      %v2473 = vsel %vm904, %v2462, %v2464
      %v2474 = vsel %vm904, %v2464, %v2466
      %v2475 = vsel %vm904, %v2466, %v2468
      %v2476 = vsel %vm904, %v2468, %v903
      %2485 = vrot.lane.b32.xlu0 %v2262, 62
      %v2486 = vpop.permute.xlu0 %2485
      %2487 = vrot.lane.b32.xlu0 %v2263, 62
      %v2488 = vpop.permute.xlu0 %2487
      %2489 = vrot.lane.b32.xlu0 %v2264, 62
      %v2490 = vpop.permute.xlu0 %2489
      %2491 = vrot.lane.b32.xlu0 %v2265, 62
      %v2492 = vpop.permute.xlu0 %2491
      %2493 = vrot.lane.b32.xlu0 %v2266, 62
      %v2494 = vpop.permute.xlu0 %2493
      %2495 = vrot.lane.b32.xlu0 %v2267, 62
      %v2496 = vpop.permute.xlu0 %2495
      %2497 = vrot.lane.b32.xlu0 %v2268, 62
      %v2498 = vpop.permute.xlu0 %2497
      %2499 = vrot.lane.b32.xlu0 %v2269, 62
      %v2500 = vpop.permute.xlu0 %2499
      %v2501 = vsel %vm940, %v2486, %v2488
      %v2502 = vsel %vm940, %v2488, %v2490
      %v2503 = vsel %vm940, %v2490, %v2492
      %v2504 = vsel %vm940, %v2492, %v2494
      %v2505 = vsel %vm940, %v2494, %v2496
      %v2506 = vsel %vm940, %v2496, %v2498
      %v2507 = vsel %vm940, %v2498, %v2500
      %v2508 = vsel %vm940, %v2500, %v939
      %s2509 = scalar_lea.vmem %s1, 16
      %v2510 = vld [vmem:[%s2509] sm:$0xff]
      %s2511 = scalar_lea.vmem %s2, 16
      %v2512 = vld [vmem:[%s2511] sm:$0xff]
      %2514 = vset.pattern.permute.xlu0 0
      %2515 = vperm.xlu0 %2514, %v2512
      %v2516 = vpop.permute.xlu0 %2515
      %2526 = vrot.lane.b32.xlu0 %v2222, 33
      %v2527 = vpop.permute.xlu0 %2526
      %2528 = vrot.lane.b32.xlu0 %v2223, 33
      %v2529 = vpop.permute.xlu0 %2528
      %2530 = vrot.lane.b32.xlu0 %v2224, 33
      %v2531 = vpop.permute.xlu0 %2530
      %2532 = vrot.lane.b32.xlu0 %v2225, 33
      %v2533 = vpop.permute.xlu0 %2532
      %2534 = vrot.lane.b32.xlu0 %v2226, 33
      %v2535 = vpop.permute.xlu0 %2534
      %2536 = vrot.lane.b32.xlu0 %v2227, 33
      %v2537 = vpop.permute.xlu0 %2536
      %2538 = vrot.lane.b32.xlu0 %v2228, 33
      %v2539 = vpop.permute.xlu0 %2538
      %2540 = vrot.lane.b32.xlu0 %v2229, 33
      %v2541 = vpop.permute.xlu0 %2540
      %2542 = vrot.lane.b32.xlu0 %v2294, 33
      %v2543 = vpop.permute.xlu0 %2542
      %2544 = vrot.lane.b32.xlu0 %v2295, 33
      %v2545 = vpop.permute.xlu0 %2544
      %2546 = vrot.lane.b32.xlu0 %v2296, 33
      %v2547 = vpop.permute.xlu0 %2546
      %2548 = vrot.lane.b32.xlu0 %v2297, 33
      %v2549 = vpop.permute.xlu0 %2548
      %2550 = vrot.lane.b32.xlu0 %v2298, 33
      %v2551 = vpop.permute.xlu0 %2550
      %2552 = vrot.lane.b32.xlu0 %v2299, 33
      %v2553 = vpop.permute.xlu0 %2552
      %2554 = vrot.lane.b32.xlu0 %v2300, 33
      %v2555 = vpop.permute.xlu0 %2554
      %2556 = vrot.lane.b32.xlu0 %v2301, 33
      %v2557 = vpop.permute.xlu0 %2556
      %2558 = vrot.lane.b32.xlu0 %v2293, 33
      %v2559 = vpop.permute.xlu0 %2558
      %2560 = vrot.lane.b32.xlu0 %v2326, 33
      %v2561 = vpop.permute.xlu0 %2560
      %2562 = vrot.lane.b32.xlu0 %v2327, 33
      %v2563 = vpop.permute.xlu0 %2562
      %2564 = vrot.lane.b32.xlu0 %v2328, 33
      %v2565 = vpop.permute.xlu0 %2564
      %2566 = vrot.lane.b32.xlu0 %v2329, 33
      %v2567 = vpop.permute.xlu0 %2566
      %2568 = vrot.lane.b32.xlu0 %v2330, 33
      %v2569 = vpop.permute.xlu0 %2568
      %2570 = vrot.lane.b32.xlu0 %v2331, 33
      %v2571 = vpop.permute.xlu0 %2570
      %2572 = vrot.lane.b32.xlu0 %v2332, 33
      %v2573 = vpop.permute.xlu0 %2572
      %2574 = vrot.lane.b32.xlu0 %v2333, 33
      %v2575 = vpop.permute.xlu0 %2574
      %2576 = vrot.lane.b32.xlu0 %v2325, 33
      %v2577 = vpop.permute.xlu0 %2576
      %2578 = vrot.lane.b32.xlu0 %v2358, 33
      %v2579 = vpop.permute.xlu0 %2578
      %2580 = vrot.lane.b32.xlu0 %v2359, 33
      %v2581 = vpop.permute.xlu0 %2580
      %2582 = vrot.lane.b32.xlu0 %v2360, 33
      %v2583 = vpop.permute.xlu0 %2582
      %2584 = vrot.lane.b32.xlu0 %v2361, 33
      %v2585 = vpop.permute.xlu0 %2584
      %2586 = vrot.lane.b32.xlu0 %v2362, 33
      %v2587 = vpop.permute.xlu0 %2586
      %2588 = vrot.lane.b32.xlu0 %v2363, 33
      %v2589 = vpop.permute.xlu0 %2588
      %2590 = vrot.lane.b32.xlu0 %v2364, 33
      %v2591 = vpop.permute.xlu0 %2590
      %2592 = vrot.lane.b32.xlu0 %v2365, 33
      %v2593 = vpop.permute.xlu0 %2592
      %2594 = vrot.lane.b32.xlu0 %v2357, 33
      %v2595 = vpop.permute.xlu0 %2594
      %2596 = vrot.lane.b32.xlu0 %v2367, 33
      %v2597 = vpop.permute.xlu0 %2596
      %2598 = vrot.lane.b32.xlu0 %v2382, 33
      %v2599 = vpop.permute.xlu0 %2598
      %2600 = vrot.lane.b32.xlu0 %v2383, 33
      %v2601 = vpop.permute.xlu0 %2600
      %2602 = vrot.lane.b32.xlu0 %v2384, 33
      %v2603 = vpop.permute.xlu0 %2602
      %2604 = vrot.lane.b32.xlu0 %v2385, 33
      %v2605 = vpop.permute.xlu0 %2604
      %2606 = vrot.lane.b32.xlu0 %v2386, 33
      %v2607 = vpop.permute.xlu0 %2606
      %2608 = vrot.lane.b32.xlu0 %v2387, 33
      %v2609 = vpop.permute.xlu0 %2608
      %2610 = vrot.lane.b32.xlu0 %v2388, 33
      %v2611 = vpop.permute.xlu0 %2610
      %2612 = vrot.lane.b32.xlu0 %v2381, 33
      %v2613 = vpop.permute.xlu0 %2612
      %2614 = vrot.lane.b32.xlu0 %v2398, 33
      %v2615 = vpop.permute.xlu0 %2614
      %2616 = vrot.lane.b32.xlu0 %v2413, 33
      %v2617 = vpop.permute.xlu0 %2616
      %2618 = vrot.lane.b32.xlu0 %v2414, 33
      %v2619 = vpop.permute.xlu0 %2618
      %2620 = vrot.lane.b32.xlu0 %v2415, 33
      %v2621 = vpop.permute.xlu0 %2620
      %2622 = vrot.lane.b32.xlu0 %v2416, 33
      %v2623 = vpop.permute.xlu0 %2622
      %2624 = vrot.lane.b32.xlu0 %v2417, 33
      %v2625 = vpop.permute.xlu0 %2624
      %2626 = vrot.lane.b32.xlu0 %v2418, 33
      %v2627 = vpop.permute.xlu0 %2626
      %2628 = vrot.lane.b32.xlu0 %v2419, 33
      %v2629 = vpop.permute.xlu0 %2628
      %2630 = vrot.lane.b32.xlu0 %v2420, 33
      %v2631 = vpop.permute.xlu0 %2630
      %2632 = vrot.lane.b32.xlu0 %v2430, 33
      %v2633 = vpop.permute.xlu0 %2632
      %2634 = vrot.lane.b32.xlu0 %v2445, 33
      %v2635 = vpop.permute.xlu0 %2634
      %2636 = vrot.lane.b32.xlu0 %v2446, 33
      %v2637 = vpop.permute.xlu0 %2636
      %2638 = vrot.lane.b32.xlu0 %v2447, 33
      %v2639 = vpop.permute.xlu0 %2638
      %2640 = vrot.lane.b32.xlu0 %v2448, 33
      %v2641 = vpop.permute.xlu0 %2640
      %2642 = vrot.lane.b32.xlu0 %v2449, 33
      %v2643 = vpop.permute.xlu0 %2642
      %2644 = vrot.lane.b32.xlu0 %v2450, 33
      %v2645 = vpop.permute.xlu0 %2644
      %2646 = vrot.lane.b32.xlu0 %v2451, 33
      %v2647 = vpop.permute.xlu0 %2646
      %2648 = vrot.lane.b32.xlu0 %v2452, 33
      %v2649 = vpop.permute.xlu0 %2648
      %2650 = vrot.lane.b32.xlu0 %v2454, 33
      %v2651 = vpop.permute.xlu0 %2650
      %2652 = vrot.lane.b32.xlu0 %v2469, 33
      %v2653 = vpop.permute.xlu0 %2652
      %2654 = vrot.lane.b32.xlu0 %v2470, 33
      %v2655 = vpop.permute.xlu0 %2654
      %2656 = vrot.lane.b32.xlu0 %v2471, 33
      %v2657 = vpop.permute.xlu0 %2656
      %2658 = vrot.lane.b32.xlu0 %v2472, 33
      %v2659 = vpop.permute.xlu0 %2658
      %2660 = vrot.lane.b32.xlu0 %v2473, 33
      %v2661 = vpop.permute.xlu0 %2660
      %2662 = vrot.lane.b32.xlu0 %v2474, 33
      %v2663 = vpop.permute.xlu0 %2662
      %2664 = vrot.lane.b32.xlu0 %v2475, 33
      %v2665 = vpop.permute.xlu0 %2664
      %2666 = vrot.lane.b32.xlu0 %v2476, 33
      %v2667 = vpop.permute.xlu0 %2666
      %2668 = vrot.lane.b32.xlu0 %v2486, 33
      %v2669 = vpop.permute.xlu0 %2668
      %2670 = vrot.lane.b32.xlu0 %v2501, 33
      %v2671 = vpop.permute.xlu0 %2670
      %2672 = vrot.lane.b32.xlu0 %v2502, 33
      %v2673 = vpop.permute.xlu0 %2672
      %2674 = vrot.lane.b32.xlu0 %v2503, 33
      %v2675 = vpop.permute.xlu0 %2674
      %2676 = vrot.lane.b32.xlu0 %v2504, 33
      %v2677 = vpop.permute.xlu0 %2676
      %2678 = vrot.lane.b32.xlu0 %v2505, 33
      %v2679 = vpop.permute.xlu0 %2678
      %2680 = vrot.lane.b32.xlu0 %v2506, 33
      %v2681 = vpop.permute.xlu0 %2680
      %2682 = vrot.lane.b32.xlu0 %v2507, 33
      %v2683 = vpop.permute.xlu0 %2682
      %2684 = vrot.lane.b32.xlu0 %v2508, 33
      %v2685 = vpop.permute.xlu0 %2684
      %v2686 = vsel %vm658, %v966, %v2527
      %v2687 = vsel %vm658, %v2527, %v2529
      %v2688 = vsel %vm658, %v2529, %v2531
      %v2689 = vsel %vm658, %v2531, %v2533
      %v2690 = vsel %vm658, %v2533, %v2535
      %v2691 = vsel %vm658, %v2535, %v2537
      %v2692 = vsel %vm658, %v2537, %v2539
      %v2693 = vsel %vm658, %v2539, %v2541
      %v2694 = vsel %vm658, %v2543, %v2545
      %v2695 = vsel %vm658, %v2545, %v2547
      %v2696 = vsel %vm658, %v2547, %v2549
      %v2697 = vsel %vm658, %v2549, %v2551
      %v2698 = vsel %vm658, %v2551, %v2553
      %v2699 = vsel %vm658, %v2553, %v2555
      %v2700 = vsel %vm658, %v2555, %v2557
      %v2701 = vsel %vm658, %v2557, %v2559
      %v2702 = vsel %vm658, %v2561, %v2563
      %v2703 = vsel %vm658, %v2563, %v2565
      %v2704 = vsel %vm658, %v2565, %v2567
      %v2705 = vsel %vm658, %v2567, %v2569
      %v2706 = vsel %vm658, %v2569, %v2571
      %v2707 = vsel %vm658, %v2571, %v2573
      %v2708 = vsel %vm658, %v2573, %v2575
      %v2709 = vsel %vm658, %v2575, %v2577
      %v2710 = vsel %vm658, %v2579, %v2581
      %v2711 = vsel %vm658, %v2581, %v2583
      %v2712 = vsel %vm658, %v2583, %v2585
      %v2713 = vsel %vm658, %v2585, %v2587
      %v2714 = vsel %vm658, %v2587, %v2589
      %v2715 = vsel %vm658, %v2589, %v2591
      %v2716 = vsel %vm658, %v2591, %v2593
      %v2717 = vsel %vm658, %v2593, %v2595
      %v2718 = vsel %vm658, %v2597, %v2599
      %v2719 = vsel %vm658, %v2599, %v2601
      %v2720 = vsel %vm658, %v2601, %v2603
      %v2721 = vsel %vm658, %v2603, %v2605
      %v2722 = vsel %vm658, %v2605, %v2607
      %v2723 = vsel %vm658, %v2607, %v2609
      %v2724 = vsel %vm658, %v2609, %v2611
      %v2725 = vsel %vm658, %v2611, %v2613
      %v2726 = vsel %vm658, %v2615, %v2617
      %v2727 = vsel %vm658, %v2617, %v2619
      %v2728 = vsel %vm658, %v2619, %v2621
      %v2729 = vsel %vm658, %v2621, %v2623
      %v2730 = vsel %vm658, %v2623, %v2625
      %v2731 = vsel %vm658, %v2625, %v2627
      %v2732 = vsel %vm658, %v2627, %v2629
      %v2733 = vsel %vm658, %v2629, %v2631
      %v2734 = vsel %vm658, %v2633, %v2635
      %v2735 = vsel %vm658, %v2635, %v2637
      %v2736 = vsel %vm658, %v2637, %v2639
      %v2737 = vsel %vm658, %v2639, %v2641
      %v2738 = vsel %vm658, %v2641, %v2643
      %v2739 = vsel %vm658, %v2643, %v2645
      %v2740 = vsel %vm658, %v2645, %v2647
      %v2741 = vsel %vm658, %v2647, %v2649
      %v2742 = vsel %vm658, %v2651, %v2653
      %v2743 = vsel %vm658, %v2653, %v2655
      %v2744 = vsel %vm658, %v2655, %v2657
      %v2745 = vsel %vm658, %v2657, %v2659
      %v2746 = vsel %vm658, %v2659, %v2661
      %v2747 = vsel %vm658, %v2661, %v2663
      %v2748 = vsel %vm658, %v2663, %v2665
      %v2749 = vsel %vm658, %v2665, %v2667
      %v2750 = vsel %vm658, %v2669, %v2671
      %v2751 = vsel %vm658, %v2671, %v2673
      %v2752 = vsel %vm658, %v2673, %v2675
      %v2753 = vsel %vm658, %v2675, %v2677
      %v2754 = vsel %vm658, %v2677, %v2679
      %v2755 = vsel %vm658, %v2679, %v2681
      %v2756 = vsel %vm658, %v2681, %v2683
      %v2757 = vsel %vm658, %v2683, %v2685
      %v2831 = vsel %vm1271, %v2510, 0
      %2833 = vmatpush.msra.mxu0 0.0
      %2834 = vmatpush.msra.mxu0 0.0
      %2835 = vmatpush.msra.mxu0 0.0
      %2836 = vmatpush.msra.mxu0 0.0
      %2837 = vmatpush.msra.mxu0 0.0
      %2838 = vmatpush.msra.mxu0 0.0
      %2839 = vmatpush.msra.mxu0 0.0
      %2840 = vmatpush.msra.mxu0 %v2750
      %2841 = vmatpush.msra.mxu0 %v2742
      %2842 = vmatpush.msra.mxu0 %v2734
      %2843 = vmatpush.msra.mxu0 %v2726
      %2844 = vmatpush.msra.mxu0 %v2718
      %2845 = vmatpush.msra.mxu0 %v2710
      %2846 = vmatpush.msra.mxu0 %v2702
      %2847 = vmatpush.msra.mxu0 %v2694
      %2848 = vmatpush.msra.mxu0 %v2686
      %2849 = vmatmul.f32.gmra.mxu0 %v2831
      %v2850 = vpop.f32.mrf.mxu0
      %v2851 = vadd.f32 %v2516, %v2850
      %2852 = vdwg.mxu0
      %2853 = vmatpush.msra.mxu0 0.0
      %2854 = vmatpush.msra.mxu0 0.0
      %2855 = vmatpush.msra.mxu0 0.0
      %2856 = vmatpush.msra.mxu0 0.0
      %2857 = vmatpush.msra.mxu0 0.0
      %2858 = vmatpush.msra.mxu0 0.0
      %2859 = vmatpush.msra.mxu0 0.0
      %2860 = vmatpush.msra.mxu0 %v2751
      %2861 = vmatpush.msra.mxu0 %v2743
      %2862 = vmatpush.msra.mxu0 %v2735
      %2863 = vmatpush.msra.mxu0 %v2727
      %2864 = vmatpush.msra.mxu0 %v2719
      %2865 = vmatpush.msra.mxu0 %v2711
      %2866 = vmatpush.msra.mxu0 %v2703
      %2867 = vmatpush.msra.mxu0 %v2695
      %2868 = vmatpush.msra.mxu0 %v2687
      %2869 = vmatmul.f32.gmra.mxu0 %v2831
      %v2870 = vpop.f32.mrf.mxu0
      %v2871 = vadd.f32 %v2516, %v2870
      %2872 = vdwg.mxu0
      %2873 = vmatpush.msra.mxu0 0.0
      %2874 = vmatpush.msra.mxu0 0.0
      %2875 = vmatpush.msra.mxu0 0.0
      %2876 = vmatpush.msra.mxu0 0.0
      %2877 = vmatpush.msra.mxu0 0.0
      %2878 = vmatpush.msra.mxu0 0.0
      %2879 = vmatpush.msra.mxu0 0.0
      %2880 = vmatpush.msra.mxu0 %v2752
      %2881 = vmatpush.msra.mxu0 %v2744
      %2882 = vmatpush.msra.mxu0 %v2736
      %2883 = vmatpush.msra.mxu0 %v2728
      %2884 = vmatpush.msra.mxu0 %v2720
      %2885 = vmatpush.msra.mxu0 %v2712
      %2886 = vmatpush.msra.mxu0 %v2704
      %2887 = vmatpush.msra.mxu0 %v2696
      %2888 = vmatpush.msra.mxu0 %v2688
      %2889 = vmatmul.f32.gmra.mxu0 %v2831
      %v2890 = vpop.f32.mrf.mxu0
      %v2891 = vadd.f32 %v2516, %v2890
      %2892 = vdwg.mxu0
      %2893 = vmatpush.msra.mxu0 0.0
      %2894 = vmatpush.msra.mxu0 0.0
      %2895 = vmatpush.msra.mxu0 0.0
      %2896 = vmatpush.msra.mxu0 0.0
      %2897 = vmatpush.msra.mxu0 0.0
      %2898 = vmatpush.msra.mxu0 0.0
      %2899 = vmatpush.msra.mxu0 0.0
      %2900 = vmatpush.msra.mxu0 %v2753
      %2901 = vmatpush.msra.mxu0 %v2745
      %2902 = vmatpush.msra.mxu0 %v2737
      %2903 = vmatpush.msra.mxu0 %v2729
      %2904 = vmatpush.msra.mxu0 %v2721
      %2905 = vmatpush.msra.mxu0 %v2713
      %2906 = vmatpush.msra.mxu0 %v2705
      %2907 = vmatpush.msra.mxu0 %v2697
      %2908 = vmatpush.msra.mxu0 %v2689
      %2909 = vmatmul.f32.gmra.mxu0 %v2831
      %v2910 = vpop.f32.mrf.mxu0
      %v2911 = vadd.f32 %v2516, %v2910
      %2912 = vdwg.mxu0
      %2913 = vmatpush.msra.mxu0 0.0
      %2914 = vmatpush.msra.mxu0 0.0
      %2915 = vmatpush.msra.mxu0 0.0
      %2916 = vmatpush.msra.mxu0 0.0
      %2917 = vmatpush.msra.mxu0 0.0
      %2918 = vmatpush.msra.mxu0 0.0
      %2919 = vmatpush.msra.mxu0 0.0
      %2920 = vmatpush.msra.mxu0 %v2754
      %2921 = vmatpush.msra.mxu0 %v2746
      %2922 = vmatpush.msra.mxu0 %v2738
      %2923 = vmatpush.msra.mxu0 %v2730
      %2924 = vmatpush.msra.mxu0 %v2722
      %2925 = vmatpush.msra.mxu0 %v2714
      %2926 = vmatpush.msra.mxu0 %v2706
      %2927 = vmatpush.msra.mxu0 %v2698
      %2928 = vmatpush.msra.mxu0 %v2690
      %2929 = vmatmul.f32.gmra.mxu0 %v2831
      %v2930 = vpop.f32.mrf.mxu0
      %v2931 = vadd.f32 %v2516, %v2930
      %2932 = vdwg.mxu0
      %2933 = vmatpush.msra.mxu0 0.0
      %2934 = vmatpush.msra.mxu0 0.0
      %2935 = vmatpush.msra.mxu0 0.0
      %2936 = vmatpush.msra.mxu0 0.0
      %2937 = vmatpush.msra.mxu0 0.0
      %2938 = vmatpush.msra.mxu0 0.0
      %2939 = vmatpush.msra.mxu0 0.0
      %2940 = vmatpush.msra.mxu0 %v2755
      %2941 = vmatpush.msra.mxu0 %v2747
      %2942 = vmatpush.msra.mxu0 %v2739
      %2943 = vmatpush.msra.mxu0 %v2731
      %2944 = vmatpush.msra.mxu0 %v2723
      %2945 = vmatpush.msra.mxu0 %v2715
      %2946 = vmatpush.msra.mxu0 %v2707
      %2947 = vmatpush.msra.mxu0 %v2699
      %2948 = vmatpush.msra.mxu0 %v2691
      %2949 = vmatmul.f32.gmra.mxu0 %v2831
      %v2950 = vpop.f32.mrf.mxu0
      %v2951 = vadd.f32 %v2516, %v2950
      %2952 = vdwg.mxu0
      %2953 = vmatpush.msra.mxu0 0.0
      %2954 = vmatpush.msra.mxu0 0.0
      %2955 = vmatpush.msra.mxu0 0.0
      %2956 = vmatpush.msra.mxu0 0.0
      %2957 = vmatpush.msra.mxu0 0.0
      %2958 = vmatpush.msra.mxu0 0.0
      %2959 = vmatpush.msra.mxu0 0.0
      %2960 = vmatpush.msra.mxu0 %v2756
      %2961 = vmatpush.msra.mxu0 %v2748
      %2962 = vmatpush.msra.mxu0 %v2740
      %2963 = vmatpush.msra.mxu0 %v2732
      %2964 = vmatpush.msra.mxu0 %v2724
      %2965 = vmatpush.msra.mxu0 %v2716
      %2966 = vmatpush.msra.mxu0 %v2708
      %2967 = vmatpush.msra.mxu0 %v2700
      %2968 = vmatpush.msra.mxu0 %v2692
      %2969 = vmatmul.f32.gmra.mxu0 %v2831
      %v2970 = vpop.f32.mrf.mxu0
      %v2971 = vadd.f32 %v2516, %v2970
      %2972 = vdwg.mxu0
      %2973 = vmatpush.msra.mxu0 0.0
      %2974 = vmatpush.msra.mxu0 0.0
      %2975 = vmatpush.msra.mxu0 0.0
      %2976 = vmatpush.msra.mxu0 0.0
      %2977 = vmatpush.msra.mxu0 0.0
      %2978 = vmatpush.msra.mxu0 0.0
      %2979 = vmatpush.msra.mxu0 0.0
      %2980 = vmatpush.msra.mxu0 %v2757
      %2981 = vmatpush.msra.mxu0 %v2749
      %2982 = vmatpush.msra.mxu0 %v2741
      %2983 = vmatpush.msra.mxu0 %v2733
      %2984 = vmatpush.msra.mxu0 %v2725
      %2985 = vmatpush.msra.mxu0 %v2717
      %2986 = vmatpush.msra.mxu0 %v2709
      %2987 = vmatpush.msra.mxu0 %v2701
      %2988 = vmatpush.msra.mxu0 %v2693
      %2989 = vmatmul.f32.gmra.mxu0 %v2831
      %v2990 = vpop.f32.mrf.mxu0
      %v2991 = vadd.f32 %v2516, %v2990
      %2992 = vdwg.mxu0
      %v2993 = vmax.f32 %v2851, 0.0
      %v2994 = vmax.f32 %v2871, 0.0
      %v2995 = vmax.f32 %v2891, 0.0
      %v2996 = vmax.f32 %v2911, 0.0
      %v2997 = vmax.f32 %v2931, 0.0
      %v2998 = vmax.f32 %v2951, 0.0
      %v2999 = vmax.f32 %v2971, 0.0
      %v3000 = vmax.f32 %v2991, 0.0
      %v3001 = vmul.f32 %v2993, %v441
      %v3002 = vmul.f32 %v2994, %v442
      %v3003 = vmul.f32 %v2995, %v443
      %v3004 = vmul.f32 %v2996, %v444
      %v3005 = vmul.f32 %v2997, %v445
      %v3006 = vmul.f32 %v2998, %v446
      %v3007 = vmul.f32 %v2999, %v447
      %v3008 = vmul.f32 %v3000, %v439
      %v3009 = vmul.f32 %v2993, %v491
      %v3010 = vmul.f32 %v2994, %v492
      %v3011 = vmul.f32 %v2995, %v493
      %v3012 = vmul.f32 %v2996, %v494
      %v3013 = vmul.f32 %v2997, %v495
      %v3014 = vmul.f32 %v2998, %v496
      %v3015 = vmul.f32 %v2999, %v497
      %v3016 = vmul.f32 %v3000, %v489
      %v3017 = vmul.f32 %v2993, %v533
      %v3018 = vmul.f32 %v2994, %v534
      %v3019 = vmul.f32 %v2995, %v535
      %v3020 = vmul.f32 %v2996, %v536
      %v3021 = vmul.f32 %v2997, %v537
      %v3022 = vmul.f32 %v2998, %v538
      %v3023 = vmul.f32 %v2999, %v539
      %v3024 = vmul.f32 %v3000, %v531
      %v3025 = vmul.f32 %v2993, %v559
      %v3026 = vmul.f32 %v2994, %v575
      %v3027 = vmul.f32 %v2995, %v576
      %v3028 = vmul.f32 %v2996, %v577
      %v3029 = vmul.f32 %v2997, %v578
      %v3030 = vmul.f32 %v2998, %v579
      %v3031 = vmul.f32 %v2999, %v580
      %v3032 = vmul.f32 %v3000, %v581
      %v3033 = vmul.f32 %v2993, %v601
      %v3034 = vmul.f32 %v2994, %v617
      %v3035 = vmul.f32 %v2995, %v618
      %v3036 = vmul.f32 %v2996, %v619
      %v3037 = vmul.f32 %v2997, %v620
      %v3038 = vmul.f32 %v2998, %v621
      %v3039 = vmul.f32 %v2999, %v622
      %v3040 = vmul.f32 %v3000, %v623
      %v3041 = vmul.f32 %v2993, %v643
      %v3042 = vmul.f32 %v2994, %v659
      %v3043 = vmul.f32 %v2995, %v660
      %v3044 = vmul.f32 %v2996, %v661
      %v3045 = vmul.f32 %v2997, %v662
      %v3046 = vmul.f32 %v2998, %v663
      %v3047 = vmul.f32 %v2999, %v664
      %v3048 = vmul.f32 %v3000, %v665
      %3057 = vrot.lane.b32.xlu0 %v2993, 127
      %v3058 = vpop.permute.xlu0 %3057
      %3059 = vrot.lane.b32.xlu0 %v2994, 127
      %v3060 = vpop.permute.xlu0 %3059
      %3061 = vrot.lane.b32.xlu0 %v2995, 127
      %v3062 = vpop.permute.xlu0 %3061
      %3063 = vrot.lane.b32.xlu0 %v2996, 127
      %v3064 = vpop.permute.xlu0 %3063
      %3065 = vrot.lane.b32.xlu0 %v2997, 127
      %v3066 = vpop.permute.xlu0 %3065
      %3067 = vrot.lane.b32.xlu0 %v2998, 127
      %v3068 = vpop.permute.xlu0 %3067
      %3069 = vrot.lane.b32.xlu0 %v2999, 127
      %v3070 = vpop.permute.xlu0 %3069
      %3071 = vrot.lane.b32.xlu0 %v3000, 127
      %v3072 = vpop.permute.xlu0 %3071
      %v3073 = vsel %vm532, %v694, %v3058
      %v3074 = vsel %vm532, %v3058, %v3060
      %v3075 = vsel %vm532, %v3060, %v3062
      %v3076 = vsel %vm532, %v3062, %v3064
      %v3077 = vsel %vm532, %v3064, %v3066
      %v3078 = vsel %vm532, %v3066, %v3068
      %v3079 = vsel %vm532, %v3068, %v3070
      %v3080 = vsel %vm532, %v3070, %v3072
      %3089 = vrot.lane.b32.xlu0 %v3009, 126
      %v3090 = vpop.permute.xlu0 %3089
      %3091 = vrot.lane.b32.xlu0 %v3010, 126
      %v3092 = vpop.permute.xlu0 %3091
      %3093 = vrot.lane.b32.xlu0 %v3011, 126
      %v3094 = vpop.permute.xlu0 %3093
      %3095 = vrot.lane.b32.xlu0 %v3012, 126
      %v3096 = vpop.permute.xlu0 %3095
      %3097 = vrot.lane.b32.xlu0 %v3013, 126
      %v3098 = vpop.permute.xlu0 %3097
      %3099 = vrot.lane.b32.xlu0 %v3014, 126
      %v3100 = vpop.permute.xlu0 %3099
      %3101 = vrot.lane.b32.xlu0 %v3015, 126
      %v3102 = vpop.permute.xlu0 %3101
      %3103 = vrot.lane.b32.xlu0 %v3016, 126
      %v3104 = vpop.permute.xlu0 %3103
      %v3105 = vsel %vm746, %v729, %v3090
      %v3106 = vsel %vm746, %v3090, %v3092
      %v3107 = vsel %vm746, %v3092, %v3094
      %v3108 = vsel %vm746, %v3094, %v3096
      %v3109 = vsel %vm746, %v3096, %v3098
      %v3110 = vsel %vm746, %v3098, %v3100
      %v3111 = vsel %vm746, %v3100, %v3102
      %v3112 = vsel %vm746, %v3102, %v3104
      %3121 = vrot.lane.b32.xlu0 %v3017, 96
      %v3122 = vpop.permute.xlu0 %3121
      %3123 = vrot.lane.b32.xlu0 %v3018, 96
      %v3124 = vpop.permute.xlu0 %3123
      %3125 = vrot.lane.b32.xlu0 %v3019, 96
      %v3126 = vpop.permute.xlu0 %3125
      %3127 = vrot.lane.b32.xlu0 %v3020, 96
      %v3128 = vpop.permute.xlu0 %3127
      %3129 = vrot.lane.b32.xlu0 %v3021, 96
      %v3130 = vpop.permute.xlu0 %3129
      %3131 = vrot.lane.b32.xlu0 %v3022, 96
      %v3132 = vpop.permute.xlu0 %3131
      %3133 = vrot.lane.b32.xlu0 %v3023, 96
      %v3134 = vpop.permute.xlu0 %3133
      %3135 = vrot.lane.b32.xlu0 %v3024, 96
      %v3136 = vpop.permute.xlu0 %3135
      %v3137 = vsel %vm782, %v765, %v3122
      %v3138 = vsel %vm782, %v3122, %v3124
      %v3139 = vsel %vm782, %v3124, %v3126
      %v3140 = vsel %vm782, %v3126, %v3128
      %v3141 = vsel %vm782, %v3128, %v3130
      %v3142 = vsel %vm782, %v3130, %v3132
      %v3143 = vsel %vm782, %v3132, %v3134
      %v3144 = vsel %vm782, %v3134, %v3136
      %3145 = vrot.lane.b32.xlu0 %v2993, 95
      %v3146 = vpop.permute.xlu0 %3145
      %3147 = vrot.lane.b32.xlu0 %v2994, 95
      %v3148 = vpop.permute.xlu0 %3147
      %3149 = vrot.lane.b32.xlu0 %v2995, 95
      %v3150 = vpop.permute.xlu0 %3149
      %3151 = vrot.lane.b32.xlu0 %v2996, 95
      %v3152 = vpop.permute.xlu0 %3151
      %3153 = vrot.lane.b32.xlu0 %v2997, 95
      %v3154 = vpop.permute.xlu0 %3153
      %3155 = vrot.lane.b32.xlu0 %v2998, 95
      %v3156 = vpop.permute.xlu0 %3155
      %3157 = vrot.lane.b32.xlu0 %v2999, 95
      %v3158 = vpop.permute.xlu0 %3157
      %3159 = vrot.lane.b32.xlu0 %v3000, 95
      %v3160 = vpop.permute.xlu0 %3159
      %v3161 = vsel %vm440, %v3146, %v3148
      %v3162 = vsel %vm440, %v3148, %v3150
      %v3163 = vsel %vm440, %v3150, %v3152
      %v3164 = vsel %vm440, %v3152, %v3154
      %v3165 = vsel %vm440, %v3154, %v3156
      %v3166 = vsel %vm440, %v3156, %v3158
      %v3167 = vsel %vm440, %v3158, %v3160
      %3176 = vrot.lane.b32.xlu0 %v3025, 94
      %v3177 = vpop.permute.xlu0 %3176
      %3178 = vrot.lane.b32.xlu0 %v3026, 94
      %v3179 = vpop.permute.xlu0 %3178
      %3180 = vrot.lane.b32.xlu0 %v3027, 94
      %v3181 = vpop.permute.xlu0 %3180
      %3182 = vrot.lane.b32.xlu0 %v3028, 94
      %v3183 = vpop.permute.xlu0 %3182
      %3184 = vrot.lane.b32.xlu0 %v3029, 94
      %v3185 = vpop.permute.xlu0 %3184
      %3186 = vrot.lane.b32.xlu0 %v3030, 94
      %v3187 = vpop.permute.xlu0 %3186
      %3188 = vrot.lane.b32.xlu0 %v3031, 94
      %v3189 = vpop.permute.xlu0 %3188
      %3190 = vrot.lane.b32.xlu0 %v3032, 94
      %v3191 = vpop.permute.xlu0 %3190
      %v3192 = vsel %vm841, %v3177, %v3179
      %v3193 = vsel %vm841, %v3179, %v3181
      %v3194 = vsel %vm841, %v3181, %v3183
      %v3195 = vsel %vm841, %v3183, %v3185
      %v3196 = vsel %vm841, %v3185, %v3187
      %v3197 = vsel %vm841, %v3187, %v3189
      %v3198 = vsel %vm841, %v3189, %v3191
      %v3199 = vsel %vm841, %v3191, %v840
      %3208 = vrot.lane.b32.xlu0 %v3033, 64
      %v3209 = vpop.permute.xlu0 %3208
      %3210 = vrot.lane.b32.xlu0 %v3034, 64
      %v3211 = vpop.permute.xlu0 %3210
      %3212 = vrot.lane.b32.xlu0 %v3035, 64
      %v3213 = vpop.permute.xlu0 %3212
      %3214 = vrot.lane.b32.xlu0 %v3036, 64
      %v3215 = vpop.permute.xlu0 %3214
      %3216 = vrot.lane.b32.xlu0 %v3037, 64
      %v3217 = vpop.permute.xlu0 %3216
      %3218 = vrot.lane.b32.xlu0 %v3038, 64
      %v3219 = vpop.permute.xlu0 %3218
      %3220 = vrot.lane.b32.xlu0 %v3039, 64
      %v3221 = vpop.permute.xlu0 %3220
      %3222 = vrot.lane.b32.xlu0 %v3040, 64
      %v3223 = vpop.permute.xlu0 %3222
      %v3224 = vsel %vm877, %v3209, %v3211
      %v3225 = vsel %vm877, %v3211, %v3213
      %v3226 = vsel %vm877, %v3213, %v3215
      %v3227 = vsel %vm877, %v3215, %v3217
      %v3228 = vsel %vm877, %v3217, %v3219
      %v3229 = vsel %vm877, %v3219, %v3221
      %v3230 = vsel %vm877, %v3221, %v3223
      %v3231 = vsel %vm877, %v3223, %v876
      %3232 = vrot.lane.b32.xlu0 %v2993, 63
      %v3233 = vpop.permute.xlu0 %3232
      %3234 = vrot.lane.b32.xlu0 %v2994, 63
      %v3235 = vpop.permute.xlu0 %3234
      %3236 = vrot.lane.b32.xlu0 %v2995, 63
      %v3237 = vpop.permute.xlu0 %3236
      %3238 = vrot.lane.b32.xlu0 %v2996, 63
      %v3239 = vpop.permute.xlu0 %3238
      %3240 = vrot.lane.b32.xlu0 %v2997, 63
      %v3241 = vpop.permute.xlu0 %3240
      %3242 = vrot.lane.b32.xlu0 %v2998, 63
      %v3243 = vpop.permute.xlu0 %3242
      %3244 = vrot.lane.b32.xlu0 %v2999, 63
      %v3245 = vpop.permute.xlu0 %3244
      %3246 = vrot.lane.b32.xlu0 %v3000, 63
      %v3247 = vpop.permute.xlu0 %3246
      %v3248 = vsel %vm904, %v3233, %v3235
      %v3249 = vsel %vm904, %v3235, %v3237
      %v3250 = vsel %vm904, %v3237, %v3239
      %v3251 = vsel %vm904, %v3239, %v3241
      %v3252 = vsel %vm904, %v3241, %v3243
      %v3253 = vsel %vm904, %v3243, %v3245
      %v3254 = vsel %vm904, %v3245, %v3247
      %v3255 = vsel %vm904, %v3247, %v903
      %3264 = vrot.lane.b32.xlu0 %v3041, 62
      %v3265 = vpop.permute.xlu0 %3264
      %3266 = vrot.lane.b32.xlu0 %v3042, 62
      %v3267 = vpop.permute.xlu0 %3266
      %3268 = vrot.lane.b32.xlu0 %v3043, 62
      %v3269 = vpop.permute.xlu0 %3268
      %3270 = vrot.lane.b32.xlu0 %v3044, 62
      %v3271 = vpop.permute.xlu0 %3270
      %3272 = vrot.lane.b32.xlu0 %v3045, 62
      %v3273 = vpop.permute.xlu0 %3272
      %3274 = vrot.lane.b32.xlu0 %v3046, 62
      %v3275 = vpop.permute.xlu0 %3274
      %3276 = vrot.lane.b32.xlu0 %v3047, 62
      %v3277 = vpop.permute.xlu0 %3276
      %3278 = vrot.lane.b32.xlu0 %v3048, 62
      %v3279 = vpop.permute.xlu0 %3278
      %v3280 = vsel %vm940, %v3265, %v3267
      %v3281 = vsel %vm940, %v3267, %v3269
      %v3282 = vsel %vm940, %v3269, %v3271
      %v3283 = vsel %vm940, %v3271, %v3273
      %v3284 = vsel %vm940, %v3273, %v3275
      %v3285 = vsel %vm940, %v3275, %v3277
      %v3286 = vsel %vm940, %v3277, %v3279
      %v3287 = vsel %vm940, %v3279, %v939
      %s3288 = scalar_lea.vmem %s1, 24
      %v3289 = vld [vmem:[%s3288] sm:$0xff]
      %s3290 = scalar_lea.vmem %s2, 24
      %v3291 = vld [vmem:[%s3290] sm:$0xff]
      %3293 = vset.pattern.permute.xlu0 0
      %3294 = vperm.xlu0 %3293, %v3291
      %v3295 = vpop.permute.xlu0 %3294
      %3305 = vrot.lane.b32.xlu0 %v3001, 33
      %v3306 = vpop.permute.xlu0 %3305
      %3307 = vrot.lane.b32.xlu0 %v3002, 33
      %v3308 = vpop.permute.xlu0 %3307
      %3309 = vrot.lane.b32.xlu0 %v3003, 33
      %v3310 = vpop.permute.xlu0 %3309
      %3311 = vrot.lane.b32.xlu0 %v3004, 33
      %v3312 = vpop.permute.xlu0 %3311
      %3313 = vrot.lane.b32.xlu0 %v3005, 33
      %v3314 = vpop.permute.xlu0 %3313
      %3315 = vrot.lane.b32.xlu0 %v3006, 33
      %v3316 = vpop.permute.xlu0 %3315
      %3317 = vrot.lane.b32.xlu0 %v3007, 33
      %v3318 = vpop.permute.xlu0 %3317
      %3319 = vrot.lane.b32.xlu0 %v3008, 33
      %v3320 = vpop.permute.xlu0 %3319
      %3321 = vrot.lane.b32.xlu0 %v3073, 33
      %v3322 = vpop.permute.xlu0 %3321
      %3323 = vrot.lane.b32.xlu0 %v3074, 33
      %v3324 = vpop.permute.xlu0 %3323
      %3325 = vrot.lane.b32.xlu0 %v3075, 33
      %v3326 = vpop.permute.xlu0 %3325
      %3327 = vrot.lane.b32.xlu0 %v3076, 33
      %v3328 = vpop.permute.xlu0 %3327
      %3329 = vrot.lane.b32.xlu0 %v3077, 33
      %v3330 = vpop.permute.xlu0 %3329
      %3331 = vrot.lane.b32.xlu0 %v3078, 33
      %v3332 = vpop.permute.xlu0 %3331
      %3333 = vrot.lane.b32.xlu0 %v3079, 33
      %v3334 = vpop.permute.xlu0 %3333
      %3335 = vrot.lane.b32.xlu0 %v3080, 33
      %v3336 = vpop.permute.xlu0 %3335
      %3337 = vrot.lane.b32.xlu0 %v3072, 33
      %v3338 = vpop.permute.xlu0 %3337
      %3339 = vrot.lane.b32.xlu0 %v3105, 33
      %v3340 = vpop.permute.xlu0 %3339
      %3341 = vrot.lane.b32.xlu0 %v3106, 33
      %v3342 = vpop.permute.xlu0 %3341
      %3343 = vrot.lane.b32.xlu0 %v3107, 33
      %v3344 = vpop.permute.xlu0 %3343
      %3345 = vrot.lane.b32.xlu0 %v3108, 33
      %v3346 = vpop.permute.xlu0 %3345
      %3347 = vrot.lane.b32.xlu0 %v3109, 33
      %v3348 = vpop.permute.xlu0 %3347
      %3349 = vrot.lane.b32.xlu0 %v3110, 33
      %v3350 = vpop.permute.xlu0 %3349
      %3351 = vrot.lane.b32.xlu0 %v3111, 33
      %v3352 = vpop.permute.xlu0 %3351
      %3353 = vrot.lane.b32.xlu0 %v3112, 33
      %v3354 = vpop.permute.xlu0 %3353
      %3355 = vrot.lane.b32.xlu0 %v3104, 33
      %v3356 = vpop.permute.xlu0 %3355
      %3357 = vrot.lane.b32.xlu0 %v3137, 33
      %v3358 = vpop.permute.xlu0 %3357
      %3359 = vrot.lane.b32.xlu0 %v3138, 33
      %v3360 = vpop.permute.xlu0 %3359
      %3361 = vrot.lane.b32.xlu0 %v3139, 33
      %v3362 = vpop.permute.xlu0 %3361
      %3363 = vrot.lane.b32.xlu0 %v3140, 33
      %v3364 = vpop.permute.xlu0 %3363
      %3365 = vrot.lane.b32.xlu0 %v3141, 33
      %v3366 = vpop.permute.xlu0 %3365
      %3367 = vrot.lane.b32.xlu0 %v3142, 33
      %v3368 = vpop.permute.xlu0 %3367
      %3369 = vrot.lane.b32.xlu0 %v3143, 33
      %v3370 = vpop.permute.xlu0 %3369
      %3371 = vrot.lane.b32.xlu0 %v3144, 33
      %v3372 = vpop.permute.xlu0 %3371
      %3373 = vrot.lane.b32.xlu0 %v3136, 33
      %v3374 = vpop.permute.xlu0 %3373
      %3375 = vrot.lane.b32.xlu0 %v3146, 33
      %v3376 = vpop.permute.xlu0 %3375
      %3377 = vrot.lane.b32.xlu0 %v3161, 33
      %v3378 = vpop.permute.xlu0 %3377
      %3379 = vrot.lane.b32.xlu0 %v3162, 33
      %v3380 = vpop.permute.xlu0 %3379
      %3381 = vrot.lane.b32.xlu0 %v3163, 33
      %v3382 = vpop.permute.xlu0 %3381
      %3383 = vrot.lane.b32.xlu0 %v3164, 33
      %v3384 = vpop.permute.xlu0 %3383
      %3385 = vrot.lane.b32.xlu0 %v3165, 33
      %v3386 = vpop.permute.xlu0 %3385
      %3387 = vrot.lane.b32.xlu0 %v3166, 33
      %v3388 = vpop.permute.xlu0 %3387
      %3389 = vrot.lane.b32.xlu0 %v3167, 33
      %v3390 = vpop.permute.xlu0 %3389
      %3391 = vrot.lane.b32.xlu0 %v3160, 33
      %v3392 = vpop.permute.xlu0 %3391
      %3393 = vrot.lane.b32.xlu0 %v3177, 33
      %v3394 = vpop.permute.xlu0 %3393
      %3395 = vrot.lane.b32.xlu0 %v3192, 33
      %v3396 = vpop.permute.xlu0 %3395
      %3397 = vrot.lane.b32.xlu0 %v3193, 33
      %v3398 = vpop.permute.xlu0 %3397
      %3399 = vrot.lane.b32.xlu0 %v3194, 33
      %v3400 = vpop.permute.xlu0 %3399
      %3401 = vrot.lane.b32.xlu0 %v3195, 33
      %v3402 = vpop.permute.xlu0 %3401
      %3403 = vrot.lane.b32.xlu0 %v3196, 33
      %v3404 = vpop.permute.xlu0 %3403
      %3405 = vrot.lane.b32.xlu0 %v3197, 33
      %v3406 = vpop.permute.xlu0 %3405
      %3407 = vrot.lane.b32.xlu0 %v3198, 33
      %v3408 = vpop.permute.xlu0 %3407
      %3409 = vrot.lane.b32.xlu0 %v3199, 33
      %v3410 = vpop.permute.xlu0 %3409
      %3411 = vrot.lane.b32.xlu0 %v3209, 33
      %v3412 = vpop.permute.xlu0 %3411
      %3413 = vrot.lane.b32.xlu0 %v3224, 33
      %v3414 = vpop.permute.xlu0 %3413
      %3415 = vrot.lane.b32.xlu0 %v3225, 33
      %v3416 = vpop.permute.xlu0 %3415
      %3417 = vrot.lane.b32.xlu0 %v3226, 33
      %v3418 = vpop.permute.xlu0 %3417
      %3419 = vrot.lane.b32.xlu0 %v3227, 33
      %v3420 = vpop.permute.xlu0 %3419
      %3421 = vrot.lane.b32.xlu0 %v3228, 33
      %v3422 = vpop.permute.xlu0 %3421
      %3423 = vrot.lane.b32.xlu0 %v3229, 33
      %v3424 = vpop.permute.xlu0 %3423
      %3425 = vrot.lane.b32.xlu0 %v3230, 33
      %v3426 = vpop.permute.xlu0 %3425
      %3427 = vrot.lane.b32.xlu0 %v3231, 33
      %v3428 = vpop.permute.xlu0 %3427
      %3429 = vrot.lane.b32.xlu0 %v3233, 33
      %v3430 = vpop.permute.xlu0 %3429
      %3431 = vrot.lane.b32.xlu0 %v3248, 33
      %v3432 = vpop.permute.xlu0 %3431
      %3433 = vrot.lane.b32.xlu0 %v3249, 33
      %v3434 = vpop.permute.xlu0 %3433
      %3435 = vrot.lane.b32.xlu0 %v3250, 33
      %v3436 = vpop.permute.xlu0 %3435
      %3437 = vrot.lane.b32.xlu0 %v3251, 33
      %v3438 = vpop.permute.xlu0 %3437
      %3439 = vrot.lane.b32.xlu0 %v3252, 33
      %v3440 = vpop.permute.xlu0 %3439
      %3441 = vrot.lane.b32.xlu0 %v3253, 33
      %v3442 = vpop.permute.xlu0 %3441
      %3443 = vrot.lane.b32.xlu0 %v3254, 33
      %v3444 = vpop.permute.xlu0 %3443
      %3445 = vrot.lane.b32.xlu0 %v3255, 33
      %v3446 = vpop.permute.xlu0 %3445
      %3447 = vrot.lane.b32.xlu0 %v3265, 33
      %v3448 = vpop.permute.xlu0 %3447
      %3449 = vrot.lane.b32.xlu0 %v3280, 33
      %v3450 = vpop.permute.xlu0 %3449
      %3451 = vrot.lane.b32.xlu0 %v3281, 33
      %v3452 = vpop.permute.xlu0 %3451
      %3453 = vrot.lane.b32.xlu0 %v3282, 33
      %v3454 = vpop.permute.xlu0 %3453
      %3455 = vrot.lane.b32.xlu0 %v3283, 33
      %v3456 = vpop.permute.xlu0 %3455
      %3457 = vrot.lane.b32.xlu0 %v3284, 33
      %v3458 = vpop.permute.xlu0 %3457
      %3459 = vrot.lane.b32.xlu0 %v3285, 33
      %v3460 = vpop.permute.xlu0 %3459
      %3461 = vrot.lane.b32.xlu0 %v3286, 33
      %v3462 = vpop.permute.xlu0 %3461
      %3463 = vrot.lane.b32.xlu0 %v3287, 33
      %v3464 = vpop.permute.xlu0 %3463
      %v3465 = vsel %vm658, %v966, %v3306
      %v3466 = vsel %vm658, %v3306, %v3308
      %v3467 = vsel %vm658, %v3308, %v3310
      %v3468 = vsel %vm658, %v3310, %v3312
      %v3469 = vsel %vm658, %v3312, %v3314
      %v3470 = vsel %vm658, %v3314, %v3316
      %v3471 = vsel %vm658, %v3316, %v3318
      %v3472 = vsel %vm658, %v3318, %v3320
      %v3473 = vsel %vm658, %v3322, %v3324
      %v3474 = vsel %vm658, %v3324, %v3326
      %v3475 = vsel %vm658, %v3326, %v3328
      %v3476 = vsel %vm658, %v3328, %v3330
      %v3477 = vsel %vm658, %v3330, %v3332
      %v3478 = vsel %vm658, %v3332, %v3334
      %v3479 = vsel %vm658, %v3334, %v3336
      %v3480 = vsel %vm658, %v3336, %v3338
      %v3481 = vsel %vm658, %v3340, %v3342
      %v3482 = vsel %vm658, %v3342, %v3344
      %v3483 = vsel %vm658, %v3344, %v3346
      %v3484 = vsel %vm658, %v3346, %v3348
      %v3485 = vsel %vm658, %v3348, %v3350
      %v3486 = vsel %vm658, %v3350, %v3352
      %v3487 = vsel %vm658, %v3352, %v3354
      %v3488 = vsel %vm658, %v3354, %v3356
      %v3489 = vsel %vm658, %v3358, %v3360
      %v3490 = vsel %vm658, %v3360, %v3362
      %v3491 = vsel %vm658, %v3362, %v3364
      %v3492 = vsel %vm658, %v3364, %v3366
      %v3493 = vsel %vm658, %v3366, %v3368
      %v3494 = vsel %vm658, %v3368, %v3370
      %v3495 = vsel %vm658, %v3370, %v3372
      %v3496 = vsel %vm658, %v3372, %v3374
      %v3497 = vsel %vm658, %v3376, %v3378
      %v3498 = vsel %vm658, %v3378, %v3380
      %v3499 = vsel %vm658, %v3380, %v3382
      %v3500 = vsel %vm658, %v3382, %v3384
      %v3501 = vsel %vm658, %v3384, %v3386
      %v3502 = vsel %vm658, %v3386, %v3388
      %v3503 = vsel %vm658, %v3388, %v3390
      %v3504 = vsel %vm658, %v3390, %v3392
      %v3505 = vsel %vm658, %v3394, %v3396
      %v3506 = vsel %vm658, %v3396, %v3398
      %v3507 = vsel %vm658, %v3398, %v3400
      %v3508 = vsel %vm658, %v3400, %v3402
      %v3509 = vsel %vm658, %v3402, %v3404
      %v3510 = vsel %vm658, %v3404, %v3406
      %v3511 = vsel %vm658, %v3406, %v3408
      %v3512 = vsel %vm658, %v3408, %v3410
      %v3513 = vsel %vm658, %v3412, %v3414
      %v3514 = vsel %vm658, %v3414, %v3416
      %v3515 = vsel %vm658, %v3416, %v3418
      %v3516 = vsel %vm658, %v3418, %v3420
      %v3517 = vsel %vm658, %v3420, %v3422
      %v3518 = vsel %vm658, %v3422, %v3424
      %v3519 = vsel %vm658, %v3424, %v3426
      %v3520 = vsel %vm658, %v3426, %v3428
      %v3521 = vsel %vm658, %v3430, %v3432
      %v3522 = vsel %vm658, %v3432, %v3434
      %v3523 = vsel %vm658, %v3434, %v3436
      %v3524 = vsel %vm658, %v3436, %v3438
      %v3525 = vsel %vm658, %v3438, %v3440
      %v3526 = vsel %vm658, %v3440, %v3442
      %v3527 = vsel %vm658, %v3442, %v3444
      %v3528 = vsel %vm658, %v3444, %v3446
      %v3529 = vsel %vm658, %v3448, %v3450
      %v3530 = vsel %vm658, %v3450, %v3452
      %v3531 = vsel %vm658, %v3452, %v3454
      %v3532 = vsel %vm658, %v3454, %v3456
      %v3533 = vsel %vm658, %v3456, %v3458
      %v3534 = vsel %vm658, %v3458, %v3460
      %v3535 = vsel %vm658, %v3460, %v3462
      %v3536 = vsel %vm658, %v3462, %v3464
      %v3610 = vsel %vm1271, %v3289, 0
      %3612 = vmatpush.msra.mxu0 0.0
      %3613 = vmatpush.msra.mxu0 0.0
      %3614 = vmatpush.msra.mxu0 0.0
      %3615 = vmatpush.msra.mxu0 0.0
      %3616 = vmatpush.msra.mxu0 0.0
      %3617 = vmatpush.msra.mxu0 0.0
      %3618 = vmatpush.msra.mxu0 0.0
      %3619 = vmatpush.msra.mxu0 %v3529
      %3620 = vmatpush.msra.mxu0 %v3521
      %3621 = vmatpush.msra.mxu0 %v3513
      %3622 = vmatpush.msra.mxu0 %v3505
      %3623 = vmatpush.msra.mxu0 %v3497
      %3624 = vmatpush.msra.mxu0 %v3489
      %3625 = vmatpush.msra.mxu0 %v3481
      %3626 = vmatpush.msra.mxu0 %v3473
      %3627 = vmatpush.msra.mxu0 %v3465
      %3628 = vmatmul.f32.gmra.mxu0 %v3610
      %v3629 = vpop.f32.mrf.mxu0
      %v3630 = vadd.f32 %v3295, %v3629
      %3631 = vdwg.mxu0
      %3632 = vmatpush.msra.mxu0 0.0
      %3633 = vmatpush.msra.mxu0 0.0
      %3634 = vmatpush.msra.mxu0 0.0
      %3635 = vmatpush.msra.mxu0 0.0
      %3636 = vmatpush.msra.mxu0 0.0
      %3637 = vmatpush.msra.mxu0 0.0
      %3638 = vmatpush.msra.mxu0 0.0
      %3639 = vmatpush.msra.mxu0 %v3530
      %3640 = vmatpush.msra.mxu0 %v3522
      %3641 = vmatpush.msra.mxu0 %v3514
      %3642 = vmatpush.msra.mxu0 %v3506
      %3643 = vmatpush.msra.mxu0 %v3498
      %3644 = vmatpush.msra.mxu0 %v3490
      %3645 = vmatpush.msra.mxu0 %v3482
      %3646 = vmatpush.msra.mxu0 %v3474
      %3647 = vmatpush.msra.mxu0 %v3466
      %3648 = vmatmul.f32.gmra.mxu0 %v3610
      %v3649 = vpop.f32.mrf.mxu0
      %v3650 = vadd.f32 %v3295, %v3649
      %3651 = vdwg.mxu0
      %3652 = vmatpush.msra.mxu0 0.0
      %3653 = vmatpush.msra.mxu0 0.0
      %3654 = vmatpush.msra.mxu0 0.0
      %3655 = vmatpush.msra.mxu0 0.0
      %3656 = vmatpush.msra.mxu0 0.0
      %3657 = vmatpush.msra.mxu0 0.0
      %3658 = vmatpush.msra.mxu0 0.0
      %3659 = vmatpush.msra.mxu0 %v3531
      %3660 = vmatpush.msra.mxu0 %v3523
      %3661 = vmatpush.msra.mxu0 %v3515
      %3662 = vmatpush.msra.mxu0 %v3507
      %3663 = vmatpush.msra.mxu0 %v3499
      %3664 = vmatpush.msra.mxu0 %v3491
      %3665 = vmatpush.msra.mxu0 %v3483
      %3666 = vmatpush.msra.mxu0 %v3475
      %3667 = vmatpush.msra.mxu0 %v3467
      %3668 = vmatmul.f32.gmra.mxu0 %v3610
      %v3669 = vpop.f32.mrf.mxu0
      %v3670 = vadd.f32 %v3295, %v3669
      %3671 = vdwg.mxu0
      %3672 = vmatpush.msra.mxu0 0.0
      %3673 = vmatpush.msra.mxu0 0.0
      %3674 = vmatpush.msra.mxu0 0.0
      %3675 = vmatpush.msra.mxu0 0.0
      %3676 = vmatpush.msra.mxu0 0.0
      %3677 = vmatpush.msra.mxu0 0.0
      %3678 = vmatpush.msra.mxu0 0.0
      %3679 = vmatpush.msra.mxu0 %v3532
      %3680 = vmatpush.msra.mxu0 %v3524
      %3681 = vmatpush.msra.mxu0 %v3516
      %3682 = vmatpush.msra.mxu0 %v3508
      %3683 = vmatpush.msra.mxu0 %v3500
      %3684 = vmatpush.msra.mxu0 %v3492
      %3685 = vmatpush.msra.mxu0 %v3484
      %3686 = vmatpush.msra.mxu0 %v3476
      %3687 = vmatpush.msra.mxu0 %v3468
      %3688 = vmatmul.f32.gmra.mxu0 %v3610
      %v3689 = vpop.f32.mrf.mxu0
      %v3690 = vadd.f32 %v3295, %v3689
      %3691 = vdwg.mxu0
      %3692 = vmatpush.msra.mxu0 0.0
      %3693 = vmatpush.msra.mxu0 0.0
      %3694 = vmatpush.msra.mxu0 0.0
      %3695 = vmatpush.msra.mxu0 0.0
      %3696 = vmatpush.msra.mxu0 0.0
      %3697 = vmatpush.msra.mxu0 0.0
      %3698 = vmatpush.msra.mxu0 0.0
      %3699 = vmatpush.msra.mxu0 %v3533
      %3700 = vmatpush.msra.mxu0 %v3525
      %3701 = vmatpush.msra.mxu0 %v3517
      %3702 = vmatpush.msra.mxu0 %v3509
      %3703 = vmatpush.msra.mxu0 %v3501
      %3704 = vmatpush.msra.mxu0 %v3493
      %3705 = vmatpush.msra.mxu0 %v3485
      %3706 = vmatpush.msra.mxu0 %v3477
      %3707 = vmatpush.msra.mxu0 %v3469
      %3708 = vmatmul.f32.gmra.mxu0 %v3610
      %v3709 = vpop.f32.mrf.mxu0
      %v3710 = vadd.f32 %v3295, %v3709
      %3711 = vdwg.mxu0
      %3712 = vmatpush.msra.mxu0 0.0
      %3713 = vmatpush.msra.mxu0 0.0
      %3714 = vmatpush.msra.mxu0 0.0
      %3715 = vmatpush.msra.mxu0 0.0
      %3716 = vmatpush.msra.mxu0 0.0
      %3717 = vmatpush.msra.mxu0 0.0
      %3718 = vmatpush.msra.mxu0 0.0
      %3719 = vmatpush.msra.mxu0 %v3534
      %3720 = vmatpush.msra.mxu0 %v3526
      %3721 = vmatpush.msra.mxu0 %v3518
      %3722 = vmatpush.msra.mxu0 %v3510
      %3723 = vmatpush.msra.mxu0 %v3502
      %3724 = vmatpush.msra.mxu0 %v3494
      %3725 = vmatpush.msra.mxu0 %v3486
      %3726 = vmatpush.msra.mxu0 %v3478
      %3727 = vmatpush.msra.mxu0 %v3470
      %3728 = vmatmul.f32.gmra.mxu0 %v3610
      %v3729 = vpop.f32.mrf.mxu0
      %v3730 = vadd.f32 %v3295, %v3729
      %3731 = vdwg.mxu0
      %3732 = vmatpush.msra.mxu0 0.0
      %3733 = vmatpush.msra.mxu0 0.0
      %3734 = vmatpush.msra.mxu0 0.0
      %3735 = vmatpush.msra.mxu0 0.0
      %3736 = vmatpush.msra.mxu0 0.0
      %3737 = vmatpush.msra.mxu0 0.0
      %3738 = vmatpush.msra.mxu0 0.0
      %3739 = vmatpush.msra.mxu0 %v3535
      %3740 = vmatpush.msra.mxu0 %v3527
      %3741 = vmatpush.msra.mxu0 %v3519
      %3742 = vmatpush.msra.mxu0 %v3511
      %3743 = vmatpush.msra.mxu0 %v3503
      %3744 = vmatpush.msra.mxu0 %v3495
      %3745 = vmatpush.msra.mxu0 %v3487
      %3746 = vmatpush.msra.mxu0 %v3479
      %3747 = vmatpush.msra.mxu0 %v3471
      %3748 = vmatmul.f32.gmra.mxu0 %v3610
      %v3749 = vpop.f32.mrf.mxu0
      %v3750 = vadd.f32 %v3295, %v3749
      %3751 = vdwg.mxu0
      %3752 = vmatpush.msra.mxu0 0.0
      %3753 = vmatpush.msra.mxu0 0.0
      %3754 = vmatpush.msra.mxu0 0.0
      %3755 = vmatpush.msra.mxu0 0.0
      %3756 = vmatpush.msra.mxu0 0.0
      %3757 = vmatpush.msra.mxu0 0.0
      %3758 = vmatpush.msra.mxu0 0.0
      %3759 = vmatpush.msra.mxu0 %v3536
      %3760 = vmatpush.msra.mxu0 %v3528
      %3761 = vmatpush.msra.mxu0 %v3520
      %3762 = vmatpush.msra.mxu0 %v3512
      %3763 = vmatpush.msra.mxu0 %v3504
      %3764 = vmatpush.msra.mxu0 %v3496
      %3765 = vmatpush.msra.mxu0 %v3488
      %3766 = vmatpush.msra.mxu0 %v3480
      %3767 = vmatpush.msra.mxu0 %v3472
      %3768 = vmatmul.f32.gmra.mxu0 %v3610
      %v3769 = vpop.f32.mrf.mxu0
      %v3770 = vadd.f32 %v3295, %v3769
      %3771 = vdwg.mxu0
      %v3772 = vmax.f32 %v3630, 0.0
      %v3773 = vmax.f32 %v3650, 0.0
      %v3774 = vmax.f32 %v3670, 0.0
      %v3775 = vmax.f32 %v3690, 0.0
      %v3776 = vmax.f32 %v3710, 0.0
      %v3777 = vmax.f32 %v3730, 0.0
      %v3778 = vmax.f32 %v3750, 0.0
      %v3779 = vmax.f32 %v3770, 0.0
      %v3780 = vld [vmem:[%s3] sm:$0xff]
      %v3781 = vld [vmem:[%s3 + $0x8] sm:$0xff]
      %v3782 = vld [vmem:[%s3 + $0x10] sm:$0xff]
      %v3783 = vld [vmem:[%s3 + $0x18] sm:$0xff]
      %v3784 = vld [vmem:[%s3 + $0x20] sm:$0xff]
      %v3785 = vld [vmem:[%s3 + $0x28] sm:$0xff]
      %v3786 = vld [vmem:[%s3 + $0x30] sm:$0xff]
      %v3787 = vld [vmem:[%s3 + $0x38] sm:$0xff]
      %v3788 = vmul.f32 %v3772, %v3780
      %v3789 = vmul.f32 %v3773, %v3781
      %v3790 = vmul.f32 %v3774, %v3782
      %v3791 = vmul.f32 %v3775, %v3783
      %v3792 = vmul.f32 %v3776, %v3784
      %v3793 = vmul.f32 %v3777, %v3785
      %v3794 = vmul.f32 %v3778, %v3786
      %v3795 = vmul.f32 %v3779, %v3787
      %v3796 = vadd.f32 %v3788, %v3789
      %v3797 = vadd.f32 %v3796, %v3790
      %v3798 = vadd.f32 %v3797, %v3791
      %v3799 = vadd.f32 %v3798, %v3792
      %v3800 = vadd.f32 %v3799, %v3793
      %v3801 = vadd.f32 %v3800, %v3794
      %v3802 = vadd.f32 %v3801, %v3795
      %3803 = vadd.xlane.f32.xlu0 %v3802
      %v3804 = vpop.xlane.xlu0 %3803
      %v3805 = vrot.slane %v3804, 4
      %v3806 = vadd.f32 %v3804, %v3805
      %v3807 = vrot.slane %v3806, 2
      %v3808 = vadd.f32 %v3806, %v3807
      %v3809 = vrot.slane %v3808, 1
      %v3810 = vadd.f32 %v3808, %v3809
      %v3811 = vld [vmem:[#allocation2] sm:$0x1]
      %v3812 = vadd.f32 %v3810, %v3811
      %vm3813 = vcmask 0
      %3814 = vst.msk [vmem:[%s222] sm:$0x1] %vm3813, %v3812
      %p3815 = scmp.lt.s32.totalorder %s18, 1
      %s3816 = scalar_select %p3815, %s18, 1
      %s3817 = scalar_lea.vmem %s5, %s3816
      // Predicated region
      $region41: #{energy_based_model.1} parent=39 // pred_check
        %p3818 = pneg %p146
      $region42: #{energy_based_model.1} parent=39 // pred_check_branch
        %3820 = sbr.rel (%p3818) target = $region44
      $region43: #{energy_based_model.1} parent=39 // pred_region
        _
      $region44: #{energy_based_model.1} parent=39 // pred_fallthru
        _
    $region40: #{energy_based_model.1} parent=5 // pred_fallthru
      _
    %p3821 = scmp.le.s32.totalorder 2, %s13
    // Predicated region
    $region45: #{energy_based_model.1} parent=5 // pred_check
      %p3822 = pneg %p3821
    $region46: #{energy_based_model.1} parent=5 // pred_check_branch
      %3824 = sbr.rel (%p3822) target = $region48
    $region47: #{energy_based_model.1} parent=5 // pred_region
      %s3825 = ssub.s32 %s13, 2
      // Predicated region
      $region49: #{energy_based_model.1} parent=47 // pred_check
        %p3826 = pneg %p152
      $region50: #{energy_based_model.1} parent=47 // pred_check_branch
        %3828 = sbr.rel (%p3826) target = $region52
      $region51: #{energy_based_model.1} parent=47 // pred_region
        %p3829 = scmp.lt.s32.totalorder %s19, 1
        %s3830 = scalar_select %p3829, %s19, 1
        %s3831 = scalar_lea.vmem %s5, %s3830
      $region52: #{energy_based_model.1} parent=47 // pred_fallthru
        _
    $region48: #{energy_based_model.1} parent=5 // pred_fallthru
      _
  $region6: #{energy_based_model.1} parent=0 // loop_footer
    %s17 = sadd.s32 1, %s13
  $region7: #{energy_based_model.1} parent=0 // loop_footer_branch
    %12 = sbr.rel target = $region3
  $region8: #{energy_based_model.1} parent=0 // loop_exit
    _

</llo_original>
